<compile_context>
chip_gen: v6e
topology: v6e:2x2x1
jax: 0.10.0
libtpu: 0.0.40
codegen_flags: <defaults>
</compile_context>

<pallas_src>
import functools

import jax
import jax.numpy as jnp
import numpy as np
from jax.experimental import pallas as pl
from jax.experimental.pallas import tpu as pltpu


def _round_up(n, m):
    return ((n + m - 1) // m) * m


# ----------------------------------------------------------------------------
# Pallas kernel: full LSTM stack (static time loop) + lane-dense MLP head.
# ----------------------------------------------------------------------------
def _make_kernel(T, B_TILE, C_pad, H, L):
    G = 4 * H

    def kernel(*refs):
        # refs layout:
        #   [0]                      x_ref           (T, B_TILE, C_pad) bf16
        #   per layer l in [0, L):   w_ih_t (in_l, 4H) bf16, w_hh_t (H, 4H) bf16,
        #                            bias (1, 4H) f32  (= b_ih + b_hh)
        #   tail:                    fc1_w_t (H, MID) bf16, fc1_b (1, MID) f32,
        #                            fc2_w_t (MID, OUT) bf16, fc2_b (1, OUT) f32
        #   outputs:                 out_ref (B_TILE, OUT) f32
        #   scratch:                 gx_ref (T, B_TILE, 4H) f32,
        #                            seq_ref (T, B_TILE, H) f32
        x_ref = refs[0]
        idx = 1
        layer_refs = []
        for _ in range(L):
            layer_refs.append((refs[idx], refs[idx + 1], refs[idx + 2]))
            idx += 3
        fc1_w_ref, fc1_b_ref, fc2_w_ref, fc2_b_ref = refs[idx:idx + 4]
        out_ref = refs[idx + 4]
        gx_ref = refs[idx + 5]
        seq_ref = refs[idx + 6]

        # Hoisted lane mask: lanes [2H, 3H) hold the candidate-cell gate
        # (tanh); all other gate lanes use sigmoid.
        lane = jax.lax.broadcasted_iota(jnp.int32, (B_TILE, G), 1)
        g_mask = jnp.logical_and(lane >= 2 * H, lane < 3 * H)

        last_h = None
        for l, (w_ih_ref, w_hh_ref, b_ref) in enumerate(layer_refs):
            if l == 0:
                inp = x_ref[...]                              # (T, B, Cp) bf16
            else:
                inp = seq_ref[...].astype(jnp.bfloat16)       # (T, B, H)
            in_dim = inp.shape[-1]

            # Non-recurrent input projection for all timesteps: one MXU matmul,
            # staged into VMEM scratch so the unrolled loop reads small slices.
            gx = jnp.dot(inp.reshape(T * B_TILE, in_dim), w_ih_ref[...],
                         preferred_element_type=jnp.float32)
            gx_ref[...] = gx.reshape(T, B_TILE, G) + b_ref[...]

            w_hh_t = w_hh_ref[...]                            # (H, 4H) bf16
            h = jnp.zeros((B_TILE, H), jnp.float32)
            c = jnp.zeros((B_TILE, H), jnp.float32)

            # T is small and static -> unrolled loop; switch to
            # lax.fori_loop(..., unroll=True) if T grows beyond a few dozen.
            for tt in range(T):
                if tt == 0:
                    g = gx_ref[0]            # h == 0: skip the recurrent matmul
                else:
                    # v5e note: w_hh could be held in MXU weight registers
                    # across the T steps via pltpu.matmul_push_rhs/acc_lhs/pop.
                    g = gx_ref[tt] + jnp.dot(
                        h.astype(jnp.bfloat16), w_hh_t,
                        preferred_element_type=jnp.float32)
                sg = jax.nn.sigmoid(g)           # full 4H-lane EUP pass
                th = jnp.tanh(g)                 # full 4H-lane EUP pass
                act = jnp.where(g_mask, th, sg)  # [ i | f | ghat | o ]
                i_g = act[:, 0 * H:1 * H]
                f_g = act[:, 1 * H:2 * H]
                g_g = act[:, 2 * H:3 * H]
                o_g = act[:, 3 * H:4 * H]
                c = f_g * c + i_g * g_g
                h = o_g * jnp.tanh(c)
                if l != L - 1:
                    seq_ref[tt] = h              # one aligned store per step
            last_h = h

        # MLP head on the last timestep's hidden state (lane-dense, padded).
        z = jnp.dot(last_h.astype(jnp.bfloat16), fc1_w_ref[...],
                    preferred_element_type=jnp.float32) + fc1_b_ref[...]
        z = jnp.maximum(z, 0.0)
        out = jnp.dot(z.astype(jnp.bfloat16), fc2_w_ref[...],
                      preferred_element_type=jnp.float32) + fc2_b_ref[...]
        out_ref[...] = out.astype(out_ref.dtype)

    return kernel


# ----------------------------------------------------------------------------
# Wrapper: layout plumbing (transpose / pad / cast) + pallas_call
# ----------------------------------------------------------------------------
def lstm1d_classifier_pallas(x_bct, params, hidden_size, num_layers,
                             num_classes):
    """x_bct: (B, C, T) float32, PyTorch layout."""
    B, C, T = x_bct.shape
    H = hidden_size
    G = 4 * H
    B_TILE = 8                                   # f32 sublane tile
    Bp = max(_round_up(B, B_TILE), B_TILE)
    Cp = max(_round_up(C, 8), 8)

    # Glue (wrapper side, not the hot path): 'b c t -> t b c', pad batch rows
    # to the sublane tile and channels to 8, cast the matmul operand to bf16.
    x_tbc = jnp.transpose(x_bct, (2, 0, 1)).astype(jnp.float32)
    x_pad = jnp.pad(x_tbc, ((0, 0), (0, Bp - B), (0, Cp - C)))
    x_pad = x_pad.astype(jnp.bfloat16)           # (T, Bp, Cp)

    flat_inputs = [x_pad]
    in_specs = [pl.BlockSpec((T, B_TILE, Cp), lambda b: (0, b, 0))]

    def _const_spec(shape):                      # weights: VMEM-resident block
        return pl.BlockSpec(shape, lambda b: (0, 0))

    for l in range(num_layers):
        w_ih, w_hh, b_ih, b_hh = params["lstm"][l]
        w_ih_t = w_ih.T                                          # (in_dim, 4H)
        if l == 0:
            w_ih_t = jnp.pad(w_ih_t, ((0, Cp - C), (0, 0)))      # (Cp, 4H)
        w_hh_t = w_hh.T                                          # (H, 4H)
        bias = (b_ih + b_hh).reshape(1, G).astype(jnp.float32)
        flat_inputs += [w_ih_t.astype(jnp.bfloat16),
                        w_hh_t.astype(jnp.bfloat16), bias]
        in_specs += [_const_spec(w_ih_t.shape), _const_spec(w_hh_t.shape),
                     _const_spec(bias.shape)]

    fc1_w, fc1_b, fc2_w, fc2_b = params["fc"]    # (84,H),(84,),(nc,84),(nc,)
    n_mid = fc1_w.shape[0]
    MID_PAD = _round_up(n_mid, 128)              # lane-dense hidden width
    OUT_PAD = _round_up(num_classes, 128)        # lane-dense output width
    fc1_w_t = jnp.pad(fc1_w.T, ((0, 0), (0, MID_PAD - n_mid)))           # (H, MID)
    fc1_b_p = jnp.pad(fc1_b, (0, MID_PAD - n_mid)).reshape(1, -1)
    fc2_w_t = jnp.pad(fc2_w.T, ((0, MID_PAD - n_mid),
                                (0, OUT_PAD - num_classes)))             # (MID, OUT)
    fc2_b_p = jnp.pad(fc2_b, (0, OUT_PAD - num_classes)).reshape(1, -1)
    flat_inputs += [fc1_w_t.astype(jnp.bfloat16),
                    fc1_b_p.astype(jnp.float32),
                    fc2_w_t.astype(jnp.bfloat16),
                    fc2_b_p.astype(jnp.float32)]
    in_specs += [_const_spec(fc1_w_t.shape), _const_spec(fc1_b_p.shape),
                 _const_spec(fc2_w_t.shape), _const_spec(fc2_b_p.shape)]

    kernel = _make_kernel(T, B_TILE, Cp, H, num_layers)

    out = pl.pallas_call(
        kernel,
        out_shape=jax.ShapeDtypeStruct((Bp, OUT_PAD), jnp.float32),
        grid_spec=pltpu.PrefetchScalarGridSpec(
            num_scalar_prefetch=0,
            grid=(pl.cdiv(Bp, B_TILE),),
            in_specs=in_specs,
            out_specs=pl.BlockSpec((B_TILE, OUT_PAD), lambda b: (b, 0)),
            scratch_shapes=[
                pltpu.VMEM((T, B_TILE, G), jnp.float32),   # staged input gates
                pltpu.VMEM((T, B_TILE, H), jnp.float32),   # inter-layer hidden seq
            ]),
        compiler_params=pltpu.CompilerParams(
            dimension_semantics=("parallel",)),
    )(*flat_inputs)
    return out[:B, :num_classes]


# ----------------------------------------------------------------------------
# Pure-JAX f32 reference (for correctness check)
# ----------------------------------------------------------------------------
def lstm1d_classifier_ref(x_bct, params, hidden_size, num_layers, num_classes):
    B, C, T = x_bct.shape
    H = hidden_size
    seq = jnp.transpose(x_bct, (0, 2, 1)).astype(jnp.float32)  # (B, T, C)
    for l in range(num_layers):
        w_ih, w_hh, b_ih, b_hh = params["lstm"][l]

        def step(carry, x_t):
            h, c = carry
            g = x_t @ w_ih.T + b_ih + h @ w_hh.T + b_hh
            i_g = jax.nn.sigmoid(g[:, 0 * H:1 * H])
            f_g = jax.nn.sigmoid(g[:, 1 * H:2 * H])
            g_g = jnp.tanh(g[:, 2 * H:3 * H])
            o_g = jax.nn.sigmoid(g[:, 3 * H:4 * H])
            c = f_g * c + i_g * g_g
            h = o_g * jnp.tanh(c)
            return (h, c), h

        init = (jnp.zeros((B, H), jnp.float32), jnp.zeros((B, H), jnp.float32))
        (_, _), hs = jax.lax.scan(step, init, jnp.transpose(seq, (1, 0, 2)))
        seq = jnp.transpose(hs, (1, 0, 2))  # (B, T, H)
    last = seq[:, -1, :]
    fc1_w, fc1_b, fc2_w, fc2_b = params["fc"]
    z = jnp.maximum(last @ fc1_w.T + fc1_b, 0.0)
    return z @ fc2_w.T + fc2_b


# ----------------------------------------------------------------------------
# Deterministic parameter init (PyTorch-style uniform(-1/sqrt(H), 1/sqrt(H)))
# ----------------------------------------------------------------------------
def init_params(key, input_size, hidden_size, num_layers, num_classes):
    H = hidden_size
    bound = 1.0 / np.sqrt(H)
    params = {"lstm": [], "fc": None}
    for l in range(num_layers):
        in_dim = input_size if l == 0 else H
        key, k1, k2, k3, k4 = jax.random.split(key, 5)
        w_ih = jax.random.uniform(k1, (4 * H, in_dim), jnp.float32, -bound, bound)
        w_hh = jax.random.uniform(k2, (4 * H, H), jnp.float32, -bound, bound)
        b_ih = jax.random.uniform(k3, (4 * H,), jnp.float32, -bound, bound)
        b_hh = jax.random.uniform(k4, (4 * H,), jnp.float32, -bound, bound)
        params["lstm"].append((w_ih, w_hh, b_ih, b_hh))
    key, k1, k2, k3, k4 = jax.random.split(key, 5)
    b1 = 1.0 / np.sqrt(H)
    b2 = 1.0 / np.sqrt(84.0)
    fc1_w = jax.random.uniform(k1, (84, H), jnp.float32, -b1, b1)
    fc1_b = jax.random.uniform(k2, (84,), jnp.float32, -b1, b1)
    fc2_w = jax.random.uniform(k3, (num_classes, 84), jnp.float32, -b2, b2)
    fc2_b = jax.random.uniform(k4, (num_classes,), jnp.float32, -b2, b2)
    params["fc"] = (fc1_w, fc1_b, fc2_w, fc2_b)
    return params


if __name__ == "__main__":
    # Small shapes consistent with the module: x is (batch, channels, time).
    B, C, T = 2, 4, 16
    HIDDEN, NUM_LAYERS, NUM_CLASSES = 32, 2, 2

    key = jax.random.PRNGKey(0)
    key_x, key_p = jax.random.split(key)
    x = jax.random.normal(key_x, (B, C, T), dtype=jnp.float32)
    params = init_params(key_p, C, HIDDEN, NUM_LAYERS, NUM_CLASSES)

    run = functools.partial(lstm1d_classifier_pallas,
                            hidden_size=HIDDEN, num_layers=NUM_LAYERS,
                            num_classes=NUM_CLASSES)
    out = jax.block_until_ready(run(x, params))

    ref = jax.block_until_ready(
        lstm1d_classifier_ref(x, params, HIDDEN, NUM_LAYERS, NUM_CLASSES))
    # Kernel uses bf16 matmul operands with f32 accumulation; a small drift
    # (~1e-3..1e-2) vs. the pure-f32 reference accumulates over the 2x16-step
    # recurrence, so the tolerance is loosened accordingly.
    np.testing.assert_allclose(np.asarray(out), np.asarray(ref),
                               rtol=5e-2, atol=5e-2)

    assert out.shape == (B, NUM_CLASSES)
    print("KERNEL_OK")
</pallas_src>

<mosaic_0001>
module attributes {stable_mosaic.version = 11 : i64} {
  func.func @kernel(%arg0: i32, %arg1: memref<16x8x8xbf16, #tpu.memory_space<vmem>>, %arg2: memref<8x128xbf16, #tpu.memory_space<vmem>>, %arg3: memref<32x128xbf16, #tpu.memory_space<vmem>>, %arg4: memref<1x128xf32, #tpu.memory_space<vmem>>, %arg5: memref<32x128xbf16, #tpu.memory_space<vmem>>, %arg6: memref<32x128xbf16, #tpu.memory_space<vmem>>, %arg7: memref<1x128xf32, #tpu.memory_space<vmem>>, %arg8: memref<32x128xbf16, #tpu.memory_space<vmem>>, %arg9: memref<1x128xf32, #tpu.memory_space<vmem>>, %arg10: memref<128x128xbf16, #tpu.memory_space<vmem>>, %arg11: memref<1x128xf32, #tpu.memory_space<vmem>>, %arg12: memref<8x128xf32, #tpu.memory_space<vmem>>, %arg13: memref<16x8x128xf32, #tpu.memory_space<vmem>>, %arg14: memref<16x8x32xf32, #tpu.memory_space<vmem>>) attributes {dimension_semantics = [#tpu.dimension_semantics<parallel>], iteration_bounds = array<i64: 1>, scalar_prefetch = 0 : i64, scratch_operands = 2 : i64, tpu.core_type = #tpu.core_type<tc>, window_params = [{transform_indices = @transform_0, window_bounds = array<i64: 16, 8, 8>}, {pipeline_mode = #tpu.pipeline_mode<synchronous>, transform_indices = @transform_1, window_bounds = array<i64: 8, 128>}, {pipeline_mode = #tpu.pipeline_mode<synchronous>, transform_indices = @transform_2, window_bounds = array<i64: 32, 128>}, {pipeline_mode = #tpu.pipeline_mode<synchronous>, transform_indices = @transform_3, window_bounds = array<i64: 1, 128>}, {pipeline_mode = #tpu.pipeline_mode<synchronous>, transform_indices = @transform_4, window_bounds = array<i64: 32, 128>}, {pipeline_mode = #tpu.pipeline_mode<synchronous>, transform_indices = @transform_5, window_bounds = array<i64: 32, 128>}, {pipeline_mode = #tpu.pipeline_mode<synchronous>, transform_indices = @transform_6, window_bounds = array<i64: 1, 128>}, {pipeline_mode = #tpu.pipeline_mode<synchronous>, transform_indices = @transform_7, window_bounds = array<i64: 32, 128>}, {pipeline_mode = #tpu.pipeline_mode<synchronous>, transform_indices = @transform_8, window_bounds = array<i64: 1, 128>}, {pipeline_mode = #tpu.pipeline_mode<synchronous>, transform_indices = @transform_9, window_bounds = array<i64: 128, 128>}, {pipeline_mode = #tpu.pipeline_mode<synchronous>, transform_indices = @transform_10, window_bounds = array<i64: 1, 128>}, {transform_indices = @transform_11, window_bounds = array<i64: 8, 128>}]} {
    %0 = tpu.iota {dimensions = array<i32: 1>} : vector<8x128xi32>
    %c64_i32 = arith.constant 64 : i32
    %1 = vector.broadcast %c64_i32 : i32 to vector<8x128xi32>
    %2 = arith.cmpi sge, %0, %1 : vector<8x128xi32>
    %c96_i32 = arith.constant 96 : i32
    %3 = vector.broadcast %c96_i32 : i32 to vector<8x128xi32>
    %4 = arith.cmpi slt, %0, %3 : vector<8x128xi32>
    %5 = arith.andi %2, %4 : vector<8x128xi1>
    %c0 = arith.constant 0 : index
    %c0_0 = arith.constant 0 : index
    %c0_1 = arith.constant 0 : index
    %6 = vector.load %arg1[%c0, %c0_0, %c0_1] : memref<16x8x8xbf16, #tpu.memory_space<vmem>>, vector<16x8x8xbf16>
    %7 = vector.shape_cast %6 : vector<16x8x8xbf16> to vector<128x8xbf16>
    %c0_2 = arith.constant 0 : index
    %c0_3 = arith.constant 0 : index
    %8 = vector.load %arg2[%c0_2, %c0_3] : memref<8x128xbf16, #tpu.memory_space<vmem>>, vector<8x128xbf16>
    %cst = arith.constant dense<0.000000e+00> : vector<128x128xf32>
    %9 = tpu.matmul %7, %8, %cst {dimension_numbers = #tpu.dot_dimension_numbers<[1], [0], [0], [1], [0, 0, 1, 1], [], []>} : vector<128x8xbf16>, vector<8x128xbf16>, vector<128x128xf32> -> vector<128x128xf32>
    %10 = vector.shape_cast %9 : vector<128x128xf32> to vector<16x8x128xf32>
    %c0_4 = arith.constant 0 : index
    %c0_5 = arith.constant 0 : index
    %11 = vector.load %arg4[%c0_4, %c0_5] : memref<1x128xf32, #tpu.memory_space<vmem>>, vector<1x128xf32>
    %12 = vector.shape_cast %11 : vector<1x128xf32> to vector<1x1x128xf32>
    %13 = vector.broadcast %12 : vector<1x1x128xf32> to vector<16x8x128xf32>
    %14 = arith.addf %10, %13 : vector<16x8x128xf32>
    %c0_6 = arith.constant 0 : index
    %c0_7 = arith.constant 0 : index
    %c0_8 = arith.constant 0 : index
    %15 = vector.load %arg13[%c0_6, %c0_7, %c0_8] : memref<16x8x128xf32, #tpu.memory_space<vmem>>, vector<16x8x128xf32>
    tpu.vector_store %arg13[%c0_6, %c0_7, %c0_8], %14 {strides = array<i32>} : memref<16x8x128xf32, #tpu.memory_space<vmem>>, vector<16x8x128xf32>,
    %c0_9 = arith.constant 0 : index
    %c0_10 = arith.constant 0 : index
    %16 = vector.load %arg3[%c0_9, %c0_10] : memref<32x128xbf16, #tpu.memory_space<vmem>>, vector<32x128xbf16>
    %cst_11 = arith.constant 0.000000e+00 : f32
    %17 = vector.broadcast %cst_11 : f32 to vector<8x32xf32>
    %c0_12 = arith.constant 0 : index
    %c0_13 = arith.constant 0 : index
    %c0_14 = arith.constant 0 : index
    %18 = vector.load %arg13[%c0_12, %c0_13, %c0_14] : memref<16x8x128xf32, #tpu.memory_space<vmem>>, vector<1x8x128xf32>
    %19 = vector.shape_cast %18 : vector<1x8x128xf32> to vector<8x128xf32>
    %20 = arith.negf %19 : vector<8x128xf32>
    %21 = math.exp %20 : vector<8x128xf32>
    %cst_15 = arith.constant 1.000000e+00 : f32
    %22 = vector.broadcast %cst_15 : f32 to vector<8x128xf32>
    %23 = arith.addf %22, %21 : vector<8x128xf32>
    %24 = arith.divf %22, %23 : vector<8x128xf32>
    %25 = math.tanh %19 : vector<8x128xf32>
    %26 = arith.select %5, %25, %24 : vector<8x128xi1>, vector<8x128xf32>
    %27 = vector.extract_strided_slice %26 {offsets = [0, 0], sizes = [8, 32], strides = [1, 1]} : vector<8x128xf32> to vector<8x32xf32>
    %28 = vector.extract_strided_slice %26 {offsets = [0, 32], sizes = [8, 32], strides = [1, 1]} : vector<8x128xf32> to vector<8x32xf32>
    %29 = vector.extract_strided_slice %26 {offsets = [0, 64], sizes = [8, 32], strides = [1, 1]} : vector<8x128xf32> to vector<8x32xf32>
    %30 = vector.extract_strided_slice %26 {offsets = [0, 96], sizes = [8, 32], strides = [1, 1]} : vector<8x128xf32> to vector<8x32xf32>
    %31 = arith.mulf %28, %17 : vector<8x32xf32>
    %32 = arith.mulf %27, %29 : vector<8x32xf32>
    %33 = arith.addf %31, %32 : vector<8x32xf32>
    %34 = math.tanh %33 : vector<8x32xf32>
    %35 = arith.mulf %30, %34 : vector<8x32xf32>
    %c0_16 = arith.constant 0 : index
    %c0_17 = arith.constant 0 : index
    %c0_18 = arith.constant 0 : index
    %36 = vector.load %arg14[%c0_16, %c0_17, %c0_18] : memref<16x8x32xf32, #tpu.memory_space<vmem>>, vector<1x8x32xf32>
    %37 = vector.shape_cast %36 : vector<1x8x32xf32> to vector<8x32xf32>
    %38 = vector.shape_cast %35 : vector<8x32xf32> to vector<1x8x32xf32>
    tpu.vector_store %arg14[%c0_16, %c0_17, %c0_18], %38 {strides = array<i32>} : memref<16x8x32xf32, #tpu.memory_space<vmem>>, vector<1x8x32xf32>,
    %c1 = arith.constant 1 : index
    %c0_19 = arith.constant 0 : index
    %c0_20 = arith.constant 0 : index
    %39 = vector.load %arg13[%c1, %c0_19, %c0_20] : memref<16x8x128xf32, #tpu.memory_space<vmem>>, vector<1x8x128xf32>
    %40 = vector.shape_cast %39 : vector<1x8x128xf32> to vector<8x128xf32>
    %41 = arith.truncf %35 : vector<8x32xf32> to vector<8x32xbf16>
    %cst_21 = arith.constant dense<0.000000e+00> : vector<8x128xf32>
    %42 = tpu.matmul %41, %16, %cst_21 {dimension_numbers = #tpu.dot_dimension_numbers<[1], [0], [0], [1], [0, 0, 1, 1], [], []>} : vector<8x32xbf16>, vector<32x128xbf16>, vector<8x128xf32> -> vector<8x128xf32>
    %43 = arith.addf %40, %42 : vector<8x128xf32>
    %44 = arith.negf %43 : vector<8x128xf32>
    %45 = math.exp %44 : vector<8x128xf32>
    %cst_22 = arith.constant 1.000000e+00 : f32
    %46 = vector.broadcast %cst_22 : f32 to vector<8x128xf32>
    %47 = arith.addf %46, %45 : vector<8x128xf32>
    %48 = arith.divf %46, %47 : vector<8x128xf32>
    %49 = math.tanh %43 : vector<8x128xf32>
    %50 = arith.select %5, %49, %48 : vector<8x128xi1>, vector<8x128xf32>
    %51 = vector.extract_strided_slice %50 {offsets = [0, 0], sizes = [8, 32], strides = [1, 1]} : vector<8x128xf32> to vector<8x32xf32>
    %52 = vector.extract_strided_slice %50 {offsets = [0, 32], sizes = [8, 32], strides = [1, 1]} : vector<8x128xf32> to vector<8x32xf32>
    %53 = vector.extract_strided_slice %50 {offsets = [0, 64], sizes = [8, 32], strides = [1, 1]} : vector<8x128xf32> to vector<8x32xf32>
    %54 = vector.extract_strided_slice %50 {offsets = [0, 96], sizes = [8, 32], strides = [1, 1]} : vector<8x128xf32> to vector<8x32xf32>
    %55 = arith.mulf %52, %33 : vector<8x32xf32>
    %56 = arith.mulf %51, %53 : vector<8x32xf32>
    %57 = arith.addf %55, %56 : vector<8x32xf32>
    %58 = math.tanh %57 : vector<8x32xf32>
    %59 = arith.mulf %54, %58 : vector<8x32xf32>
    %c1_23 = arith.constant 1 : index
    %c0_24 = arith.constant 0 : index
    %c0_25 = arith.constant 0 : index
    %60 = vector.load %arg14[%c1_23, %c0_24, %c0_25] : memref<16x8x32xf32, #tpu.memory_space<vmem>>, vector<1x8x32xf32>
    %61 = vector.shape_cast %60 : vector<1x8x32xf32> to vector<8x32xf32>
    %62 = vector.shape_cast %59 : vector<8x32xf32> to vector<1x8x32xf32>
    tpu.vector_store %arg14[%c1_23, %c0_24, %c0_25], %62 {strides = array<i32>} : memref<16x8x32xf32, #tpu.memory_space<vmem>>, vector<1x8x32xf32>,
    %c2 = arith.constant 2 : index
    %c0_26 = arith.constant 0 : index
    %c0_27 = arith.constant 0 : index
    %63 = vector.load %arg13[%c2, %c0_26, %c0_27] : memref<16x8x128xf32, #tpu.memory_space<vmem>>, vector<1x8x128xf32>
    %64 = vector.shape_cast %63 : vector<1x8x128xf32> to vector<8x128xf32>
    %65 = arith.truncf %59 : vector<8x32xf32> to vector<8x32xbf16>
    %cst_28 = arith.constant dense<0.000000e+00> : vector<8x128xf32>
    %66 = tpu.matmul %65, %16, %cst_28 {dimension_numbers = #tpu.dot_dimension_numbers<[1], [0], [0], [1], [0, 0, 1, 1], [], []>} : vector<8x32xbf16>, vector<32x128xbf16>, vector<8x128xf32> -> vector<8x128xf32>
    %67 = arith.addf %64, %66 : vector<8x128xf32>
    %68 = arith.negf %67 : vector<8x128xf32>
    %69 = math.exp %68 : vector<8x128xf32>
    %cst_29 = arith.constant 1.000000e+00 : f32
    %70 = vector.broadcast %cst_29 : f32 to vector<8x128xf32>
    %71 = arith.addf %70, %69 : vector<8x128xf32>
    %72 = arith.divf %70, %71 : vector<8x128xf32>
    %73 = math.tanh %67 : vector<8x128xf32>
    %74 = arith.select %5, %73, %72 : vector<8x128xi1>, vector<8x128xf32>
    %75 = vector.extract_strided_slice %74 {offsets = [0, 0], sizes = [8, 32], strides = [1, 1]} : vector<8x128xf32> to vector<8x32xf32>
    %76 = vector.extract_strided_slice %74 {offsets = [0, 32], sizes = [8, 32], strides = [1, 1]} : vector<8x128xf32> to vector<8x32xf32>
    %77 = vector.extract_strided_slice %74 {offsets = [0, 64], sizes = [8, 32], strides = [1, 1]} : vector<8x128xf32> to vector<8x32xf32>
    %78 = vector.extract_strided_slice %74 {offsets = [0, 96], sizes = [8, 32], strides = [1, 1]} : vector<8x128xf32> to vector<8x32xf32>
    %79 = arith.mulf %76, %57 : vector<8x32xf32>
    %80 = arith.mulf %75, %77 : vector<8x32xf32>
    %81 = arith.addf %79, %80 : vector<8x32xf32>
    %82 = math.tanh %81 : vector<8x32xf32>
    %83 = arith.mulf %78, %82 : vector<8x32xf32>
    %c2_30 = arith.constant 2 : index
    %c0_31 = arith.constant 0 : index
    %c0_32 = arith.constant 0 : index
    %84 = vector.load %arg14[%c2_30, %c0_31, %c0_32] : memref<16x8x32xf32, #tpu.memory_space<vmem>>, vector<1x8x32xf32>
    %85 = vector.shape_cast %84 : vector<1x8x32xf32> to vector<8x32xf32>
    %86 = vector.shape_cast %83 : vector<8x32xf32> to vector<1x8x32xf32>
    tpu.vector_store %arg14[%c2_30, %c0_31, %c0_32], %86 {strides = array<i32>} : memref<16x8x32xf32, #tpu.memory_space<vmem>>, vector<1x8x32xf32>,
    %c3 = arith.constant 3 : index
    %c0_33 = arith.constant 0 : index
    %c0_34 = arith.constant 0 : index
    %87 = vector.load %arg13[%c3, %c0_33, %c0_34] : memref<16x8x128xf32, #tpu.memory_space<vmem>>, vector<1x8x128xf32>
    %88 = vector.shape_cast %87 : vector<1x8x128xf32> to vector<8x128xf32>
    %89 = arith.truncf %83 : vector<8x32xf32> to vector<8x32xbf16>
    %cst_35 = arith.constant dense<0.000000e+00> : vector<8x128xf32>
    %90 = tpu.matmul %89, %16, %cst_35 {dimension_numbers = #tpu.dot_dimension_numbers<[1], [0], [0], [1], [0, 0, 1, 1], [], []>} : vector<8x32xbf16>, vector<32x128xbf16>, vector<8x128xf32> -> vector<8x128xf32>
    %91 = arith.addf %88, %90 : vector<8x128xf32>
    %92 = arith.negf %91 : vector<8x128xf32>
    %93 = math.exp %92 : vector<8x128xf32>
    %cst_36 = arith.constant 1.000000e+00 : f32
    %94 = vector.broadcast %cst_36 : f32 to vector<8x128xf32>
    %95 = arith.addf %94, %93 : vector<8x128xf32>
    %96 = arith.divf %94, %95 : vector<8x128xf32>
    %97 = math.tanh %91 : vector<8x128xf32>
    %98 = arith.select %5, %97, %96 : vector<8x128xi1>, vector<8x128xf32>
    %99 = vector.extract_strided_slice %98 {offsets = [0, 0], sizes = [8, 32], strides = [1, 1]} : vector<8x128xf32> to vector<8x32xf32>
    %100 = vector.extract_strided_slice %98 {offsets = [0, 32], sizes = [8, 32], strides = [1, 1]} : vector<8x128xf32> to vector<8x32xf32>
    %101 = vector.extract_strided_slice %98 {offsets = [0, 64], sizes = [8, 32], strides = [1, 1]} : vector<8x128xf32> to vector<8x32xf32>
    %102 = vector.extract_strided_slice %98 {offsets = [0, 96], sizes = [8, 32], strides = [1, 1]} : vector<8x128xf32> to vector<8x32xf32>
    %103 = arith.mulf %100, %81 : vector<8x32xf32>
    %104 = arith.mulf %99, %101 : vector<8x32xf32>
    %105 = arith.addf %103, %104 : vector<8x32xf32>
    %106 = math.tanh %105 : vector<8x32xf32>
    %107 = arith.mulf %102, %106 : vector<8x32xf32>
    %c3_37 = arith.constant 3 : index
    %c0_38 = arith.constant 0 : index
    %c0_39 = arith.constant 0 : index
    %108 = vector.load %arg14[%c3_37, %c0_38, %c0_39] : memref<16x8x32xf32, #tpu.memory_space<vmem>>, vector<1x8x32xf32>
    %109 = vector.shape_cast %108 : vector<1x8x32xf32> to vector<8x32xf32>
    %110 = vector.shape_cast %107 : vector<8x32xf32> to vector<1x8x32xf32>
    tpu.vector_store %arg14[%c3_37, %c0_38, %c0_39], %110 {strides = array<i32>} : memref<16x8x32xf32, #tpu.memory_space<vmem>>, vector<1x8x32xf32>,
    %c4 = arith.constant 4 : index
    %c0_40 = arith.constant 0 : index
    %c0_41 = arith.constant 0 : index
    %111 = vector.load %arg13[%c4, %c0_40, %c0_41] : memref<16x8x128xf32, #tpu.memory_space<vmem>>, vector<1x8x128xf32>
    %112 = vector.shape_cast %111 : vector<1x8x128xf32> to vector<8x128xf32>
    %113 = arith.truncf %107 : vector<8x32xf32> to vector<8x32xbf16>
    %cst_42 = arith.constant dense<0.000000e+00> : vector<8x128xf32>
    %114 = tpu.matmul %113, %16, %cst_42 {dimension_numbers = #tpu.dot_dimension_numbers<[1], [0], [0], [1], [0, 0, 1, 1], [], []>} : vector<8x32xbf16>, vector<32x128xbf16>, vector<8x128xf32> -> vector<8x128xf32>
    %115 = arith.addf %112, %114 : vector<8x128xf32>
    %116 = arith.negf %115 : vector<8x128xf32>
    %117 = math.exp %116 : vector<8x128xf32>
    %cst_43 = arith.constant 1.000000e+00 : f32
    %118 = vector.broadcast %cst_43 : f32 to vector<8x128xf32>
    %119 = arith.addf %118, %117 : vector<8x128xf32>
    %120 = arith.divf %118, %119 : vector<8x128xf32>
    %121 = math.tanh %115 : vector<8x128xf32>
    %122 = arith.select %5, %121, %120 : vector<8x128xi1>, vector<8x128xf32>
    %123 = vector.extract_strided_slice %122 {offsets = [0, 0], sizes = [8, 32], strides = [1, 1]} : vector<8x128xf32> to vector<8x32xf32>
    %124 = vector.extract_strided_slice %122 {offsets = [0, 32], sizes = [8, 32], strides = [1, 1]} : vector<8x128xf32> to vector<8x32xf32>
    %125 = vector.extract_strided_slice %122 {offsets = [0, 64], sizes = [8, 32], strides = [1, 1]} : vector<8x128xf32> to vector<8x32xf32>
    %126 = vector.extract_strided_slice %122 {offsets = [0, 96], sizes = [8, 32], strides = [1, 1]} : vector<8x128xf32> to vector<8x32xf32>
    %127 = arith.mulf %124, %105 : vector<8x32xf32>
    %128 = arith.mulf %123, %125 : vector<8x32xf32>
    %129 = arith.addf %127, %128 : vector<8x32xf32>
    %130 = math.tanh %129 : vector<8x32xf32>
    %131 = arith.mulf %126, %130 : vector<8x32xf32>
    %c4_44 = arith.constant 4 : index
    %c0_45 = arith.constant 0 : index
    %c0_46 = arith.constant 0 : index
    %132 = vector.load %arg14[%c4_44, %c0_45, %c0_46] : memref<16x8x32xf32, #tpu.memory_space<vmem>>, vector<1x8x32xf32>
    %133 = vector.shape_cast %132 : vector<1x8x32xf32> to vector<8x32xf32>
    %134 = vector.shape_cast %131 : vector<8x32xf32> to vector<1x8x32xf32>
    tpu.vector_store %arg14[%c4_44, %c0_45, %c0_46], %134 {strides = array<i32>} : memref<16x8x32xf32, #tpu.memory_space<vmem>>, vector<1x8x32xf32>,
    %c5 = arith.constant 5 : index
    %c0_47 = arith.constant 0 : index
    %c0_48 = arith.constant 0 : index
    %135 = vector.load %arg13[%c5, %c0_47, %c0_48] : memref<16x8x128xf32, #tpu.memory_space<vmem>>, vector<1x8x128xf32>
    %136 = vector.shape_cast %135 : vector<1x8x128xf32> to vector<8x128xf32>
    %137 = arith.truncf %131 : vector<8x32xf32> to vector<8x32xbf16>
    %cst_49 = arith.constant dense<0.000000e+00> : vector<8x128xf32>
    %138 = tpu.matmul %137, %16, %cst_49 {dimension_numbers = #tpu.dot_dimension_numbers<[1], [0], [0], [1], [0, 0, 1, 1], [], []>} : vector<8x32xbf16>, vector<32x128xbf16>, vector<8x128xf32> -> vector<8x128xf32>
    %139 = arith.addf %136, %138 : vector<8x128xf32>
    %140 = arith.negf %139 : vector<8x128xf32>
    %141 = math.exp %140 : vector<8x128xf32>
    %cst_50 = arith.constant 1.000000e+00 : f32
    %142 = vector.broadcast %cst_50 : f32 to vector<8x128xf32>
    %143 = arith.addf %142, %141 : vector<8x128xf32>
    %144 = arith.divf %142, %143 : vector<8x128xf32>
    %145 = math.tanh %139 : vector<8x128xf32>
    %146 = arith.select %5, %145, %144 : vector<8x128xi1>, vector<8x128xf32>
    %147 = vector.extract_strided_slice %146 {offsets = [0, 0], sizes = [8, 32], strides = [1, 1]} : vector<8x128xf32> to vector<8x32xf32>
    %148 = vector.extract_strided_slice %146 {offsets = [0, 32], sizes = [8, 32], strides = [1, 1]} : vector<8x128xf32> to vector<8x32xf32>
    %149 = vector.extract_strided_slice %146 {offsets = [0, 64], sizes = [8, 32], strides = [1, 1]} : vector<8x128xf32> to vector<8x32xf32>
    %150 = vector.extract_strided_slice %146 {offsets = [0, 96], sizes = [8, 32], strides = [1, 1]} : vector<8x128xf32> to vector<8x32xf32>
    %151 = arith.mulf %148, %129 : vector<8x32xf32>
    %152 = arith.mulf %147, %149 : vector<8x32xf32>
    %153 = arith.addf %151, %152 : vector<8x32xf32>
    %154 = math.tanh %153 : vector<8x32xf32>
    %155 = arith.mulf %150, %154 : vector<8x32xf32>
    %c5_51 = arith.constant 5 : index
    %c0_52 = arith.constant 0 : index
    %c0_53 = arith.constant 0 : index
    %156 = vector.load %arg14[%c5_51, %c0_52, %c0_53] : memref<16x8x32xf32, #tpu.memory_space<vmem>>, vector<1x8x32xf32>
    %157 = vector.shape_cast %156 : vector<1x8x32xf32> to vector<8x32xf32>
    %158 = vector.shape_cast %155 : vector<8x32xf32> to vector<1x8x32xf32>
    tpu.vector_store %arg14[%c5_51, %c0_52, %c0_53], %158 {strides = array<i32>} : memref<16x8x32xf32, #tpu.memory_space<vmem>>, vector<1x8x32xf32>,
    %c6 = arith.constant 6 : index
    %c0_54 = arith.constant 0 : index
    %c0_55 = arith.constant 0 : index
    %159 = vector.load %arg13[%c6, %c0_54, %c0_55] : memref<16x8x128xf32, #tpu.memory_space<vmem>>, vector<1x8x128xf32>
    %160 = vector.shape_cast %159 : vector<1x8x128xf32> to vector<8x128xf32>
    %161 = arith.truncf %155 : vector<8x32xf32> to vector<8x32xbf16>
    %cst_56 = arith.constant dense<0.000000e+00> : vector<8x128xf32>
    %162 = tpu.matmul %161, %16, %cst_56 {dimension_numbers = #tpu.dot_dimension_numbers<[1], [0], [0], [1], [0, 0, 1, 1], [], []>} : vector<8x32xbf16>, vector<32x128xbf16>, vector<8x128xf32> -> vector<8x128xf32>
    %163 = arith.addf %160, %162 : vector<8x128xf32>
    %164 = arith.negf %163 : vector<8x128xf32>
    %165 = math.exp %164 : vector<8x128xf32>
    %cst_57 = arith.constant 1.000000e+00 : f32
    %166 = vector.broadcast %cst_57 : f32 to vector<8x128xf32>
    %167 = arith.addf %166, %165 : vector<8x128xf32>
    %168 = arith.divf %166, %167 : vector<8x128xf32>
    %169 = math.tanh %163 : vector<8x128xf32>
    %170 = arith.select %5, %169, %168 : vector<8x128xi1>, vector<8x128xf32>
    %171 = vector.extract_strided_slice %170 {offsets = [0, 0], sizes = [8, 32], strides = [1, 1]} : vector<8x128xf32> to vector<8x32xf32>
    %172 = vector.extract_strided_slice %170 {offsets = [0, 32], sizes = [8, 32], strides = [1, 1]} : vector<8x128xf32> to vector<8x32xf32>
    %173 = vector.extract_strided_slice %170 {offsets = [0, 64], sizes = [8, 32], strides = [1, 1]} : vector<8x128xf32> to vector<8x32xf32>
    %174 = vector.extract_strided_slice %170 {offsets = [0, 96], sizes = [8, 32], strides = [1, 1]} : vector<8x128xf32> to vector<8x32xf32>
    %175 = arith.mulf %172, %153 : vector<8x32xf32>
    %176 = arith.mulf %171, %173 : vector<8x32xf32>
    %177 = arith.addf %175, %176 : vector<8x32xf32>
    %178 = math.tanh %177 : vector<8x32xf32>
    %179 = arith.mulf %174, %178 : vector<8x32xf32>
    %c6_58 = arith.constant 6 : index
    %c0_59 = arith.constant 0 : index
    %c0_60 = arith.constant 0 : index
    %180 = vector.load %arg14[%c6_58, %c0_59, %c0_60] : memref<16x8x32xf32, #tpu.memory_space<vmem>>, vector<1x8x32xf32>
    %181 = vector.shape_cast %180 : vector<1x8x32xf32> to vector<8x32xf32>
    %182 = vector.shape_cast %179 : vector<8x32xf32> to vector<1x8x32xf32>
    tpu.vector_store %arg14[%c6_58, %c0_59, %c0_60], %182 {strides = array<i32>} : memref<16x8x32xf32, #tpu.memory_space<vmem>>, vector<1x8x32xf32>,
    %c7 = arith.constant 7 : index
    %c0_61 = arith.constant 0 : index
    %c0_62 = arith.constant 0 : index
    %183 = vector.load %arg13[%c7, %c0_61, %c0_62] : memref<16x8x128xf32, #tpu.memory_space<vmem>>, vector<1x8x128xf32>
    %184 = vector.shape_cast %183 : vector<1x8x128xf32> to vector<8x128xf32>
    %185 = arith.truncf %179 : vector<8x32xf32> to vector<8x32xbf16>
    %cst_63 = arith.constant dense<0.000000e+00> : vector<8x128xf32>
    %186 = tpu.matmul %185, %16, %cst_63 {dimension_numbers = #tpu.dot_dimension_numbers<[1], [0], [0], [1], [0, 0, 1, 1], [], []>} : vector<8x32xbf16>, vector<32x128xbf16>, vector<8x128xf32> -> vector<8x128xf32>
    %187 = arith.addf %184, %186 : vector<8x128xf32>
    %188 = arith.negf %187 : vector<8x128xf32>
    %189 = math.exp %188 : vector<8x128xf32>
    %cst_64 = arith.constant 1.000000e+00 : f32
    %190 = vector.broadcast %cst_64 : f32 to vector<8x128xf32>
    %191 = arith.addf %190, %189 : vector<8x128xf32>
    %192 = arith.divf %190, %191 : vector<8x128xf32>
    %193 = math.tanh %187 : vector<8x128xf32>
    %194 = arith.select %5, %193, %192 : vector<8x128xi1>, vector<8x128xf32>
    %195 = vector.extract_strided_slice %194 {offsets = [0, 0], sizes = [8, 32], strides = [1, 1]} : vector<8x128xf32> to vector<8x32xf32>
    %196 = vector.extract_strided_slice %194 {offsets = [0, 32], sizes = [8, 32], strides = [1, 1]} : vector<8x128xf32> to vector<8x32xf32>
    %197 = vector.extract_strided_slice %194 {offsets = [0, 64], sizes = [8, 32], strides = [1, 1]} : vector<8x128xf32> to vector<8x32xf32>
    %198 = vector.extract_strided_slice %194 {offsets = [0, 96], sizes = [8, 32], strides = [1, 1]} : vector<8x128xf32> to vector<8x32xf32>
    %199 = arith.mulf %196, %177 : vector<8x32xf32>
    %200 = arith.mulf %195, %197 : vector<8x32xf32>
    %201 = arith.addf %199, %200 : vector<8x32xf32>
    %202 = math.tanh %201 : vector<8x32xf32>
    %203 = arith.mulf %198, %202 : vector<8x32xf32>
    %c7_65 = arith.constant 7 : index
    %c0_66 = arith.constant 0 : index
    %c0_67 = arith.constant 0 : index
    %204 = vector.load %arg14[%c7_65, %c0_66, %c0_67] : memref<16x8x32xf32, #tpu.memory_space<vmem>>, vector<1x8x32xf32>
    %205 = vector.shape_cast %204 : vector<1x8x32xf32> to vector<8x32xf32>
    %206 = vector.shape_cast %203 : vector<8x32xf32> to vector<1x8x32xf32>
    tpu.vector_store %arg14[%c7_65, %c0_66, %c0_67], %206 {strides = array<i32>} : memref<16x8x32xf32, #tpu.memory_space<vmem>>, vector<1x8x32xf32>,
    %c8 = arith.constant 8 : index
    %c0_68 = arith.constant 0 : index
    %c0_69 = arith.constant 0 : index
    %207 = vector.load %arg13[%c8, %c0_68, %c0_69] : memref<16x8x128xf32, #tpu.memory_space<vmem>>, vector<1x8x128xf32>
    %208 = vector.shape_cast %207 : vector<1x8x128xf32> to vector<8x128xf32>
    %209 = arith.truncf %203 : vector<8x32xf32> to vector<8x32xbf16>
    %cst_70 = arith.constant dense<0.000000e+00> : vector<8x128xf32>
    %210 = tpu.matmul %209, %16, %cst_70 {dimension_numbers = #tpu.dot_dimension_numbers<[1], [0], [0], [1], [0, 0, 1, 1], [], []>} : vector<8x32xbf16>, vector<32x128xbf16>, vector<8x128xf32> -> vector<8x128xf32>
    %211 = arith.addf %208, %210 : vector<8x128xf32>
    %212 = arith.negf %211 : vector<8x128xf32>
    %213 = math.exp %212 : vector<8x128xf32>
    %cst_71 = arith.constant 1.000000e+00 : f32
    %214 = vector.broadcast %cst_71 : f32 to vector<8x128xf32>
    %215 = arith.addf %214, %213 : vector<8x128xf32>
    %216 = arith.divf %214, %215 : vector<8x128xf32>
    %217 = math.tanh %211 : vector<8x128xf32>
    %218 = arith.select %5, %217, %216 : vector<8x128xi1>, vector<8x128xf32>
    %219 = vector.extract_strided_slice %218 {offsets = [0, 0], sizes = [8, 32], strides = [1, 1]} : vector<8x128xf32> to vector<8x32xf32>
    %220 = vector.extract_strided_slice %218 {offsets = [0, 32], sizes = [8, 32], strides = [1, 1]} : vector<8x128xf32> to vector<8x32xf32>
    %221 = vector.extract_strided_slice %218 {offsets = [0, 64], sizes = [8, 32], strides = [1, 1]} : vector<8x128xf32> to vector<8x32xf32>
    %222 = vector.extract_strided_slice %218 {offsets = [0, 96], sizes = [8, 32], strides = [1, 1]} : vector<8x128xf32> to vector<8x32xf32>
    %223 = arith.mulf %220, %201 : vector<8x32xf32>
    %224 = arith.mulf %219, %221 : vector<8x32xf32>
    %225 = arith.addf %223, %224 : vector<8x32xf32>
    %226 = math.tanh %225 : vector<8x32xf32>
    %227 = arith.mulf %222, %226 : vector<8x32xf32>
    %c8_72 = arith.constant 8 : index
    %c0_73 = arith.constant 0 : index
    %c0_74 = arith.constant 0 : index
    %228 = vector.load %arg14[%c8_72, %c0_73, %c0_74] : memref<16x8x32xf32, #tpu.memory_space<vmem>>, vector<1x8x32xf32>
    %229 = vector.shape_cast %228 : vector<1x8x32xf32> to vector<8x32xf32>
    %230 = vector.shape_cast %227 : vector<8x32xf32> to vector<1x8x32xf32>
    tpu.vector_store %arg14[%c8_72, %c0_73, %c0_74], %230 {strides = array<i32>} : memref<16x8x32xf32, #tpu.memory_space<vmem>>, vector<1x8x32xf32>,
    %c9 = arith.constant 9 : index
    %c0_75 = arith.constant 0 : index
    %c0_76 = arith.constant 0 : index
    %231 = vector.load %arg13[%c9, %c0_75, %c0_76] : memref<16x8x128xf32, #tpu.memory_space<vmem>>, vector<1x8x128xf32>
    %232 = vector.shape_cast %231 : vector<1x8x128xf32> to vector<8x128xf32>
    %233 = arith.truncf %227 : vector<8x32xf32> to vector<8x32xbf16>
    %cst_77 = arith.constant dense<0.000000e+00> : vector<8x128xf32>
    %234 = tpu.matmul %233, %16, %cst_77 {dimension_numbers = #tpu.dot_dimension_numbers<[1], [0], [0], [1], [0, 0, 1, 1], [], []>} : vector<8x32xbf16>, vector<32x128xbf16>, vector<8x128xf32> -> vector<8x128xf32>
    %235 = arith.addf %232, %234 : vector<8x128xf32>
    %236 = arith.negf %235 : vector<8x128xf32>
    %237 = math.exp %236 : vector<8x128xf32>
    %cst_78 = arith.constant 1.000000e+00 : f32
    %238 = vector.broadcast %cst_78 : f32 to vector<8x128xf32>
    %239 = arith.addf %238, %237 : vector<8x128xf32>
    %240 = arith.divf %238, %239 : vector<8x128xf32>
    %241 = math.tanh %235 : vector<8x128xf32>
    %242 = arith.select %5, %241, %240 : vector<8x128xi1>, vector<8x128xf32>
    %243 = vector.extract_strided_slice %242 {offsets = [0, 0], sizes = [8, 32], strides = [1, 1]} : vector<8x128xf32> to vector<8x32xf32>
    %244 = vector.extract_strided_slice %242 {offsets = [0, 32], sizes = [8, 32], strides = [1, 1]} : vector<8x128xf32> to vector<8x32xf32>
    %245 = vector.extract_strided_slice %242 {offsets = [0, 64], sizes = [8, 32], strides = [1, 1]} : vector<8x128xf32> to vector<8x32xf32>
    %246 = vector.extract_strided_slice %242 {offsets = [0, 96], sizes = [8, 32], strides = [1, 1]} : vector<8x128xf32> to vector<8x32xf32>
    %247 = arith.mulf %244, %225 : vector<8x32xf32>
    %248 = arith.mulf %243, %245 : vector<8x32xf32>
    %249 = arith.addf %247, %248 : vector<8x32xf32>
    %250 = math.tanh %249 : vector<8x32xf32>
    %251 = arith.mulf %246, %250 : vector<8x32xf32>
    %c9_79 = arith.constant 9 : index
    %c0_80 = arith.constant 0 : index
    %c0_81 = arith.constant 0 : index
    %252 = vector.load %arg14[%c9_79, %c0_80, %c0_81] : memref<16x8x32xf32, #tpu.memory_space<vmem>>, vector<1x8x32xf32>
    %253 = vector.shape_cast %252 : vector<1x8x32xf32> to vector<8x32xf32>
    %254 = vector.shape_cast %251 : vector<8x32xf32> to vector<1x8x32xf32>
    tpu.vector_store %arg14[%c9_79, %c0_80, %c0_81], %254 {strides = array<i32>} : memref<16x8x32xf32, #tpu.memory_space<vmem>>, vector<1x8x32xf32>,
    %c10 = arith.constant 10 : index
    %c0_82 = arith.constant 0 : index
    %c0_83 = arith.constant 0 : index
    %255 = vector.load %arg13[%c10, %c0_82, %c0_83] : memref<16x8x128xf32, #tpu.memory_space<vmem>>, vector<1x8x128xf32>
    %256 = vector.shape_cast %255 : vector<1x8x128xf32> to vector<8x128xf32>
    %257 = arith.truncf %251 : vector<8x32xf32> to vector<8x32xbf16>
    %cst_84 = arith.constant dense<0.000000e+00> : vector<8x128xf32>
    %258 = tpu.matmul %257, %16, %cst_84 {dimension_numbers = #tpu.dot_dimension_numbers<[1], [0], [0], [1], [0, 0, 1, 1], [], []>} : vector<8x32xbf16>, vector<32x128xbf16>, vector<8x128xf32> -> vector<8x128xf32>
    %259 = arith.addf %256, %258 : vector<8x128xf32>
    %260 = arith.negf %259 : vector<8x128xf32>
    %261 = math.exp %260 : vector<8x128xf32>
    %cst_85 = arith.constant 1.000000e+00 : f32
    %262 = vector.broadcast %cst_85 : f32 to vector<8x128xf32>
    %263 = arith.addf %262, %261 : vector<8x128xf32>
    %264 = arith.divf %262, %263 : vector<8x128xf32>
    %265 = math.tanh %259 : vector<8x128xf32>
    %266 = arith.select %5, %265, %264 : vector<8x128xi1>, vector<8x128xf32>
    %267 = vector.extract_strided_slice %266 {offsets = [0, 0], sizes = [8, 32], strides = [1, 1]} : vector<8x128xf32> to vector<8x32xf32>
    %268 = vector.extract_strided_slice %266 {offsets = [0, 32], sizes = [8, 32], strides = [1, 1]} : vector<8x128xf32> to vector<8x32xf32>
    %269 = vector.extract_strided_slice %266 {offsets = [0, 64], sizes = [8, 32], strides = [1, 1]} : vector<8x128xf32> to vector<8x32xf32>
    %270 = vector.extract_strided_slice %266 {offsets = [0, 96], sizes = [8, 32], strides = [1, 1]} : vector<8x128xf32> to vector<8x32xf32>
    %271 = arith.mulf %268, %249 : vector<8x32xf32>
    %272 = arith.mulf %267, %269 : vector<8x32xf32>
    %273 = arith.addf %271, %272 : vector<8x32xf32>
    %274 = math.tanh %273 : vector<8x32xf32>
    %275 = arith.mulf %270, %274 : vector<8x32xf32>
    %c10_86 = arith.constant 10 : index
    %c0_87 = arith.constant 0 : index
    %c0_88 = arith.constant 0 : index
    %276 = vector.load %arg14[%c10_86, %c0_87, %c0_88] : memref<16x8x32xf32, #tpu.memory_space<vmem>>, vector<1x8x32xf32>
    %277 = vector.shape_cast %276 : vector<1x8x32xf32> to vector<8x32xf32>
    %278 = vector.shape_cast %275 : vector<8x32xf32> to vector<1x8x32xf32>
    tpu.vector_store %arg14[%c10_86, %c0_87, %c0_88], %278 {strides = array<i32>} : memref<16x8x32xf32, #tpu.memory_space<vmem>>, vector<1x8x32xf32>,
    %c11 = arith.constant 11 : index
    %c0_89 = arith.constant 0 : index
    %c0_90 = arith.constant 0 : index
    %279 = vector.load %arg13[%c11, %c0_89, %c0_90] : memref<16x8x128xf32, #tpu.memory_space<vmem>>, vector<1x8x128xf32>
    %280 = vector.shape_cast %279 : vector<1x8x128xf32> to vector<8x128xf32>
    %281 = arith.truncf %275 : vector<8x32xf32> to vector<8x32xbf16>
    %cst_91 = arith.constant dense<0.000000e+00> : vector<8x128xf32>
    %282 = tpu.matmul %281, %16, %cst_91 {dimension_numbers = #tpu.dot_dimension_numbers<[1], [0], [0], [1], [0, 0, 1, 1], [], []>} : vector<8x32xbf16>, vector<32x128xbf16>, vector<8x128xf32> -> vector<8x128xf32>
    %283 = arith.addf %280, %282 : vector<8x128xf32>
    %284 = arith.negf %283 : vector<8x128xf32>
    %285 = math.exp %284 : vector<8x128xf32>
    %cst_92 = arith.constant 1.000000e+00 : f32
    %286 = vector.broadcast %cst_92 : f32 to vector<8x128xf32>
    %287 = arith.addf %286, %285 : vector<8x128xf32>
    %288 = arith.divf %286, %287 : vector<8x128xf32>
    %289 = math.tanh %283 : vector<8x128xf32>
    %290 = arith.select %5, %289, %288 : vector<8x128xi1>, vector<8x128xf32>
    %291 = vector.extract_strided_slice %290 {offsets = [0, 0], sizes = [8, 32], strides = [1, 1]} : vector<8x128xf32> to vector<8x32xf32>
    %292 = vector.extract_strided_slice %290 {offsets = [0, 32], sizes = [8, 32], strides = [1, 1]} : vector<8x128xf32> to vector<8x32xf32>
    %293 = vector.extract_strided_slice %290 {offsets = [0, 64], sizes = [8, 32], strides = [1, 1]} : vector<8x128xf32> to vector<8x32xf32>
    %294 = vector.extract_strided_slice %290 {offsets = [0, 96], sizes = [8, 32], strides = [1, 1]} : vector<8x128xf32> to vector<8x32xf32>
    %295 = arith.mulf %292, %273 : vector<8x32xf32>
    %296 = arith.mulf %291, %293 : vector<8x32xf32>
    %297 = arith.addf %295, %296 : vector<8x32xf32>
    %298 = math.tanh %297 : vector<8x32xf32>
    %299 = arith.mulf %294, %298 : vector<8x32xf32>
    %c11_93 = arith.constant 11 : index
    %c0_94 = arith.constant 0 : index
    %c0_95 = arith.constant 0 : index
    %300 = vector.load %arg14[%c11_93, %c0_94, %c0_95] : memref<16x8x32xf32, #tpu.memory_space<vmem>>, vector<1x8x32xf32>
    %301 = vector.shape_cast %300 : vector<1x8x32xf32> to vector<8x32xf32>
    %302 = vector.shape_cast %299 : vector<8x32xf32> to vector<1x8x32xf32>
    tpu.vector_store %arg14[%c11_93, %c0_94, %c0_95], %302 {strides = array<i32>} : memref<16x8x32xf32, #tpu.memory_space<vmem>>, vector<1x8x32xf32>,
    %c12 = arith.constant 12 : index
    %c0_96 = arith.constant 0 : index
    %c0_97 = arith.constant 0 : index
    %303 = vector.load %arg13[%c12, %c0_96, %c0_97] : memref<16x8x128xf32, #tpu.memory_space<vmem>>, vector<1x8x128xf32>
    %304 = vector.shape_cast %303 : vector<1x8x128xf32> to vector<8x128xf32>
    %305 = arith.truncf %299 : vector<8x32xf32> to vector<8x32xbf16>
    %cst_98 = arith.constant dense<0.000000e+00> : vector<8x128xf32>
    %306 = tpu.matmul %305, %16, %cst_98 {dimension_numbers = #tpu.dot_dimension_numbers<[1], [0], [0], [1], [0, 0, 1, 1], [], []>} : vector<8x32xbf16>, vector<32x128xbf16>, vector<8x128xf32> -> vector<8x128xf32>
    %307 = arith.addf %304, %306 : vector<8x128xf32>
    %308 = arith.negf %307 : vector<8x128xf32>
    %309 = math.exp %308 : vector<8x128xf32>
    %cst_99 = arith.constant 1.000000e+00 : f32
    %310 = vector.broadcast %cst_99 : f32 to vector<8x128xf32>
    %311 = arith.addf %310, %309 : vector<8x128xf32>
    %312 = arith.divf %310, %311 : vector<8x128xf32>
    %313 = math.tanh %307 : vector<8x128xf32>
    %314 = arith.select %5, %313, %312 : vector<8x128xi1>, vector<8x128xf32>
    %315 = vector.extract_strided_slice %314 {offsets = [0, 0], sizes = [8, 32], strides = [1, 1]} : vector<8x128xf32> to vector<8x32xf32>
    %316 = vector.extract_strided_slice %314 {offsets = [0, 32], sizes = [8, 32], strides = [1, 1]} : vector<8x128xf32> to vector<8x32xf32>
    %317 = vector.extract_strided_slice %314 {offsets = [0, 64], sizes = [8, 32], strides = [1, 1]} : vector<8x128xf32> to vector<8x32xf32>
    %318 = vector.extract_strided_slice %314 {offsets = [0, 96], sizes = [8, 32], strides = [1, 1]} : vector<8x128xf32> to vector<8x32xf32>
    %319 = arith.mulf %316, %297 : vector<8x32xf32>
    %320 = arith.mulf %315, %317 : vector<8x32xf32>
    %321 = arith.addf %319, %320 : vector<8x32xf32>
    %322 = math.tanh %321 : vector<8x32xf32>
    %323 = arith.mulf %318, %322 : vector<8x32xf32>
    %c12_100 = arith.constant 12 : index
    %c0_101 = arith.constant 0 : index
    %c0_102 = arith.constant 0 : index
    %324 = vector.load %arg14[%c12_100, %c0_101, %c0_102] : memref<16x8x32xf32, #tpu.memory_space<vmem>>, vector<1x8x32xf32>
    %325 = vector.shape_cast %324 : vector<1x8x32xf32> to vector<8x32xf32>
    %326 = vector.shape_cast %323 : vector<8x32xf32> to vector<1x8x32xf32>
    tpu.vector_store %arg14[%c12_100, %c0_101, %c0_102], %326 {strides = array<i32>} : memref<16x8x32xf32, #tpu.memory_space<vmem>>, vector<1x8x32xf32>,
    %c13 = arith.constant 13 : index
    %c0_103 = arith.constant 0 : index
    %c0_104 = arith.constant 0 : index
    %327 = vector.load %arg13[%c13, %c0_103, %c0_104] : memref<16x8x128xf32, #tpu.memory_space<vmem>>, vector<1x8x128xf32>
    %328 = vector.shape_cast %327 : vector<1x8x128xf32> to vector<8x128xf32>
    %329 = arith.truncf %323 : vector<8x32xf32> to vector<8x32xbf16>
    %cst_105 = arith.constant dense<0.000000e+00> : vector<8x128xf32>
    %330 = tpu.matmul %329, %16, %cst_105 {dimension_numbers = #tpu.dot_dimension_numbers<[1], [0], [0], [1], [0, 0, 1, 1], [], []>} : vector<8x32xbf16>, vector<32x128xbf16>, vector<8x128xf32> -> vector<8x128xf32>
    %331 = arith.addf %328, %330 : vector<8x128xf32>
    %332 = arith.negf %331 : vector<8x128xf32>
    %333 = math.exp %332 : vector<8x128xf32>
    %cst_106 = arith.constant 1.000000e+00 : f32
    %334 = vector.broadcast %cst_106 : f32 to vector<8x128xf32>
    %335 = arith.addf %334, %333 : vector<8x128xf32>
    %336 = arith.divf %334, %335 : vector<8x128xf32>
    %337 = math.tanh %331 : vector<8x128xf32>
    %338 = arith.select %5, %337, %336 : vector<8x128xi1>, vector<8x128xf32>
    %339 = vector.extract_strided_slice %338 {offsets = [0, 0], sizes = [8, 32], strides = [1, 1]} : vector<8x128xf32> to vector<8x32xf32>
    %340 = vector.extract_strided_slice %338 {offsets = [0, 32], sizes = [8, 32], strides = [1, 1]} : vector<8x128xf32> to vector<8x32xf32>
    %341 = vector.extract_strided_slice %338 {offsets = [0, 64], sizes = [8, 32], strides = [1, 1]} : vector<8x128xf32> to vector<8x32xf32>
    %342 = vector.extract_strided_slice %338 {offsets = [0, 96], sizes = [8, 32], strides = [1, 1]} : vector<8x128xf32> to vector<8x32xf32>
    %343 = arith.mulf %340, %321 : vector<8x32xf32>
    %344 = arith.mulf %339, %341 : vector<8x32xf32>
    %345 = arith.addf %343, %344 : vector<8x32xf32>
    %346 = math.tanh %345 : vector<8x32xf32>
    %347 = arith.mulf %342, %346 : vector<8x32xf32>
    %c13_107 = arith.constant 13 : index
    %c0_108 = arith.constant 0 : index
    %c0_109 = arith.constant 0 : index
    %348 = vector.load %arg14[%c13_107, %c0_108, %c0_109] : memref<16x8x32xf32, #tpu.memory_space<vmem>>, vector<1x8x32xf32>
    %349 = vector.shape_cast %348 : vector<1x8x32xf32> to vector<8x32xf32>
    %350 = vector.shape_cast %347 : vector<8x32xf32> to vector<1x8x32xf32>
    tpu.vector_store %arg14[%c13_107, %c0_108, %c0_109], %350 {strides = array<i32>} : memref<16x8x32xf32, #tpu.memory_space<vmem>>, vector<1x8x32xf32>,
    %c14 = arith.constant 14 : index
    %c0_110 = arith.constant 0 : index
    %c0_111 = arith.constant 0 : index
    %351 = vector.load %arg13[%c14, %c0_110, %c0_111] : memref<16x8x128xf32, #tpu.memory_space<vmem>>, vector<1x8x128xf32>
    %352 = vector.shape_cast %351 : vector<1x8x128xf32> to vector<8x128xf32>
    %353 = arith.truncf %347 : vector<8x32xf32> to vector<8x32xbf16>
    %cst_112 = arith.constant dense<0.000000e+00> : vector<8x128xf32>
    %354 = tpu.matmul %353, %16, %cst_112 {dimension_numbers = #tpu.dot_dimension_numbers<[1], [0], [0], [1], [0, 0, 1, 1], [], []>} : vector<8x32xbf16>, vector<32x128xbf16>, vector<8x128xf32> -> vector<8x128xf32>
    %355 = arith.addf %352, %354 : vector<8x128xf32>
    %356 = arith.negf %355 : vector<8x128xf32>
    %357 = math.exp %356 : vector<8x128xf32>
    %cst_113 = arith.constant 1.000000e+00 : f32
    %358 = vector.broadcast %cst_113 : f32 to vector<8x128xf32>
    %359 = arith.addf %358, %357 : vector<8x128xf32>
    %360 = arith.divf %358, %359 : vector<8x128xf32>
    %361 = math.tanh %355 : vector<8x128xf32>
    %362 = arith.select %5, %361, %360 : vector<8x128xi1>, vector<8x128xf32>
    %363 = vector.extract_strided_slice %362 {offsets = [0, 0], sizes = [8, 32], strides = [1, 1]} : vector<8x128xf32> to vector<8x32xf32>
    %364 = vector.extract_strided_slice %362 {offsets = [0, 32], sizes = [8, 32], strides = [1, 1]} : vector<8x128xf32> to vector<8x32xf32>
    %365 = vector.extract_strided_slice %362 {offsets = [0, 64], sizes = [8, 32], strides = [1, 1]} : vector<8x128xf32> to vector<8x32xf32>
    %366 = vector.extract_strided_slice %362 {offsets = [0, 96], sizes = [8, 32], strides = [1, 1]} : vector<8x128xf32> to vector<8x32xf32>
    %367 = arith.mulf %364, %345 : vector<8x32xf32>
    %368 = arith.mulf %363, %365 : vector<8x32xf32>
    %369 = arith.addf %367, %368 : vector<8x32xf32>
    %370 = math.tanh %369 : vector<8x32xf32>
    %371 = arith.mulf %366, %370 : vector<8x32xf32>
    %c14_114 = arith.constant 14 : index
    %c0_115 = arith.constant 0 : index
    %c0_116 = arith.constant 0 : index
    %372 = vector.load %arg14[%c14_114, %c0_115, %c0_116] : memref<16x8x32xf32, #tpu.memory_space<vmem>>, vector<1x8x32xf32>
    %373 = vector.shape_cast %372 : vector<1x8x32xf32> to vector<8x32xf32>
    %374 = vector.shape_cast %371 : vector<8x32xf32> to vector<1x8x32xf32>
    tpu.vector_store %arg14[%c14_114, %c0_115, %c0_116], %374 {strides = array<i32>} : memref<16x8x32xf32, #tpu.memory_space<vmem>>, vector<1x8x32xf32>,
    %c15 = arith.constant 15 : index
    %c0_117 = arith.constant 0 : index
    %c0_118 = arith.constant 0 : index
    %375 = vector.load %arg13[%c15, %c0_117, %c0_118] : memref<16x8x128xf32, #tpu.memory_space<vmem>>, vector<1x8x128xf32>
    %376 = vector.shape_cast %375 : vector<1x8x128xf32> to vector<8x128xf32>
    %377 = arith.truncf %371 : vector<8x32xf32> to vector<8x32xbf16>
    %cst_119 = arith.constant dense<0.000000e+00> : vector<8x128xf32>
    %378 = tpu.matmul %377, %16, %cst_119 {dimension_numbers = #tpu.dot_dimension_numbers<[1], [0], [0], [1], [0, 0, 1, 1], [], []>} : vector<8x32xbf16>, vector<32x128xbf16>, vector<8x128xf32> -> vector<8x128xf32>
    %379 = arith.addf %376, %378 : vector<8x128xf32>
    %380 = arith.negf %379 : vector<8x128xf32>
    %381 = math.exp %380 : vector<8x128xf32>
    %cst_120 = arith.constant 1.000000e+00 : f32
    %382 = vector.broadcast %cst_120 : f32 to vector<8x128xf32>
    %383 = arith.addf %382, %381 : vector<8x128xf32>
    %384 = arith.divf %382, %383 : vector<8x128xf32>
    %385 = math.tanh %379 : vector<8x128xf32>
    %386 = arith.select %5, %385, %384 : vector<8x128xi1>, vector<8x128xf32>
    %387 = vector.extract_strided_slice %386 {offsets = [0, 0], sizes = [8, 32], strides = [1, 1]} : vector<8x128xf32> to vector<8x32xf32>
    %388 = vector.extract_strided_slice %386 {offsets = [0, 32], sizes = [8, 32], strides = [1, 1]} : vector<8x128xf32> to vector<8x32xf32>
    %389 = vector.extract_strided_slice %386 {offsets = [0, 64], sizes = [8, 32], strides = [1, 1]} : vector<8x128xf32> to vector<8x32xf32>
    %390 = vector.extract_strided_slice %386 {offsets = [0, 96], sizes = [8, 32], strides = [1, 1]} : vector<8x128xf32> to vector<8x32xf32>
    %391 = arith.mulf %388, %369 : vector<8x32xf32>
    %392 = arith.mulf %387, %389 : vector<8x32xf32>
    %393 = arith.addf %391, %392 : vector<8x32xf32>
    %394 = math.tanh %393 : vector<8x32xf32>
    %395 = arith.mulf %390, %394 : vector<8x32xf32>
    %c15_121 = arith.constant 15 : index
    %c0_122 = arith.constant 0 : index
    %c0_123 = arith.constant 0 : index
    %396 = vector.load %arg14[%c15_121, %c0_122, %c0_123] : memref<16x8x32xf32, #tpu.memory_space<vmem>>, vector<1x8x32xf32>
    %397 = vector.shape_cast %396 : vector<1x8x32xf32> to vector<8x32xf32>
    %398 = vector.shape_cast %395 : vector<8x32xf32> to vector<1x8x32xf32>
    tpu.vector_store %arg14[%c15_121, %c0_122, %c0_123], %398 {strides = array<i32>} : memref<16x8x32xf32, #tpu.memory_space<vmem>>, vector<1x8x32xf32>,
    %c0_124 = arith.constant 0 : index
    %c0_125 = arith.constant 0 : index
    %c0_126 = arith.constant 0 : index
    %399 = vector.load %arg14[%c0_124, %c0_125, %c0_126] : memref<16x8x32xf32, #tpu.memory_space<vmem>>, vector<16x8x32xf32>
    %400 = arith.truncf %399 : vector<16x8x32xf32> to vector<16x8x32xbf16>
    %401 = vector.shape_cast %400 : vector<16x8x32xbf16> to vector<128x32xbf16>
    %c0_127 = arith.constant 0 : index
    %c0_128 = arith.constant 0 : index
    %402 = vector.load %arg5[%c0_127, %c0_128] : memref<32x128xbf16, #tpu.memory_space<vmem>>, vector<32x128xbf16>
    %cst_129 = arith.constant dense<0.000000e+00> : vector<128x128xf32>
    %403 = tpu.matmul %401, %402, %cst_129 {dimension_numbers = #tpu.dot_dimension_numbers<[1], [0], [0], [1], [0, 0, 1, 1], [], []>} : vector<128x32xbf16>, vector<32x128xbf16>, vector<128x128xf32> -> vector<128x128xf32>
    %404 = vector.shape_cast %403 : vector<128x128xf32> to vector<16x8x128xf32>
    %c0_130 = arith.constant 0 : index
    %c0_131 = arith.constant 0 : index
    %405 = vector.load %arg7[%c0_130, %c0_131] : memref<1x128xf32, #tpu.memory_space<vmem>>, vector<1x128xf32>
    %406 = vector.shape_cast %405 : vector<1x128xf32> to vector<1x1x128xf32>
    %407 = vector.broadcast %406 : vector<1x1x128xf32> to vector<16x8x128xf32>
    %408 = arith.addf %404, %407 : vector<16x8x128xf32>
    %c0_132 = arith.constant 0 : index
    %c0_133 = arith.constant 0 : index
    %c0_134 = arith.constant 0 : index
    %409 = vector.load %arg13[%c0_132, %c0_133, %c0_134] : memref<16x8x128xf32, #tpu.memory_space<vmem>>, vector<16x8x128xf32>
    tpu.vector_store %arg13[%c0_132, %c0_133, %c0_134], %408 {strides = array<i32>} : memref<16x8x128xf32, #tpu.memory_space<vmem>>, vector<16x8x128xf32>,
    %c0_135 = arith.constant 0 : index
    %c0_136 = arith.constant 0 : index
    %410 = vector.load %arg6[%c0_135, %c0_136] : memref<32x128xbf16, #tpu.memory_space<vmem>>, vector<32x128xbf16>
    %cst_137 = arith.constant 0.000000e+00 : f32
    %411 = vector.broadcast %cst_137 : f32 to vector<8x32xf32>
    %c0_138 = arith.constant 0 : index
    %c0_139 = arith.constant 0 : index
    %c0_140 = arith.constant 0 : index
    %412 = vector.load %arg13[%c0_138, %c0_139, %c0_140] : memref<16x8x128xf32, #tpu.memory_space<vmem>>, vector<1x8x128xf32>
    %413 = vector.shape_cast %412 : vector<1x8x128xf32> to vector<8x128xf32>
    %414 = arith.negf %413 : vector<8x128xf32>
    %415 = math.exp %414 : vector<8x128xf32>
    %cst_141 = arith.constant 1.000000e+00 : f32
    %416 = vector.broadcast %cst_141 : f32 to vector<8x128xf32>
    %417 = arith.addf %416, %415 : vector<8x128xf32>
    %418 = arith.divf %416, %417 : vector<8x128xf32>
    %419 = math.tanh %413 : vector<8x128xf32>
    %420 = arith.select %5, %419, %418 : vector<8x128xi1>, vector<8x128xf32>
    %421 = vector.extract_strided_slice %420 {offsets = [0, 0], sizes = [8, 32], strides = [1, 1]} : vector<8x128xf32> to vector<8x32xf32>
    %422 = vector.extract_strided_slice %420 {offsets = [0, 32], sizes = [8, 32], strides = [1, 1]} : vector<8x128xf32> to vector<8x32xf32>
    %423 = vector.extract_strided_slice %420 {offsets = [0, 64], sizes = [8, 32], strides = [1, 1]} : vector<8x128xf32> to vector<8x32xf32>
    %424 = vector.extract_strided_slice %420 {offsets = [0, 96], sizes = [8, 32], strides = [1, 1]} : vector<8x128xf32> to vector<8x32xf32>
    %425 = arith.mulf %422, %411 : vector<8x32xf32>
    %426 = arith.mulf %421, %423 : vector<8x32xf32>
    %427 = arith.addf %425, %426 : vector<8x32xf32>
    %428 = math.tanh %427 : vector<8x32xf32>
    %429 = arith.mulf %424, %428 : vector<8x32xf32>
    %c1_142 = arith.constant 1 : index
    %c0_143 = arith.constant 0 : index
    %c0_144 = arith.constant 0 : index
    %430 = vector.load %arg13[%c1_142, %c0_143, %c0_144] : memref<16x8x128xf32, #tpu.memory_space<vmem>>, vector<1x8x128xf32>
    %431 = vector.shape_cast %430 : vector<1x8x128xf32> to vector<8x128xf32>
    %432 = arith.truncf %429 : vector<8x32xf32> to vector<8x32xbf16>
    %cst_145 = arith.constant dense<0.000000e+00> : vector<8x128xf32>
    %433 = tpu.matmul %432, %410, %cst_145 {dimension_numbers = #tpu.dot_dimension_numbers<[1], [0], [0], [1], [0, 0, 1, 1], [], []>} : vector<8x32xbf16>, vector<32x128xbf16>, vector<8x128xf32> -> vector<8x128xf32>
    %434 = arith.addf %431, %433 : vector<8x128xf32>
    %435 = arith.negf %434 : vector<8x128xf32>
    %436 = math.exp %435 : vector<8x128xf32>
    %cst_146 = arith.constant 1.000000e+00 : f32
    %437 = vector.broadcast %cst_146 : f32 to vector<8x128xf32>
    %438 = arith.addf %437, %436 : vector<8x128xf32>
    %439 = arith.divf %437, %438 : vector<8x128xf32>
    %440 = math.tanh %434 : vector<8x128xf32>
    %441 = arith.select %5, %440, %439 : vector<8x128xi1>, vector<8x128xf32>
    %442 = vector.extract_strided_slice %441 {offsets = [0, 0], sizes = [8, 32], strides = [1, 1]} : vector<8x128xf32> to vector<8x32xf32>
    %443 = vector.extract_strided_slice %441 {offsets = [0, 32], sizes = [8, 32], strides = [1, 1]} : vector<8x128xf32> to vector<8x32xf32>
    %444 = vector.extract_strided_slice %441 {offsets = [0, 64], sizes = [8, 32], strides = [1, 1]} : vector<8x128xf32> to vector<8x32xf32>
    %445 = vector.extract_strided_slice %441 {offsets = [0, 96], sizes = [8, 32], strides = [1, 1]} : vector<8x128xf32> to vector<8x32xf32>
    %446 = arith.mulf %443, %427 : vector<8x32xf32>
    %447 = arith.mulf %442, %444 : vector<8x32xf32>
    %448 = arith.addf %446, %447 : vector<8x32xf32>
    %449 = math.tanh %448 : vector<8x32xf32>
    %450 = arith.mulf %445, %449 : vector<8x32xf32>
    %c2_147 = arith.constant 2 : index
    %c0_148 = arith.constant 0 : index
    %c0_149 = arith.constant 0 : index
    %451 = vector.load %arg13[%c2_147, %c0_148, %c0_149] : memref<16x8x128xf32, #tpu.memory_space<vmem>>, vector<1x8x128xf32>
    %452 = vector.shape_cast %451 : vector<1x8x128xf32> to vector<8x128xf32>
    %453 = arith.truncf %450 : vector<8x32xf32> to vector<8x32xbf16>
    %cst_150 = arith.constant dense<0.000000e+00> : vector<8x128xf32>
    %454 = tpu.matmul %453, %410, %cst_150 {dimension_numbers = #tpu.dot_dimension_numbers<[1], [0], [0], [1], [0, 0, 1, 1], [], []>} : vector<8x32xbf16>, vector<32x128xbf16>, vector<8x128xf32> -> vector<8x128xf32>
    %455 = arith.addf %452, %454 : vector<8x128xf32>
    %456 = arith.negf %455 : vector<8x128xf32>
    %457 = math.exp %456 : vector<8x128xf32>
    %cst_151 = arith.constant 1.000000e+00 : f32
    %458 = vector.broadcast %cst_151 : f32 to vector<8x128xf32>
    %459 = arith.addf %458, %457 : vector<8x128xf32>
    %460 = arith.divf %458, %459 : vector<8x128xf32>
    %461 = math.tanh %455 : vector<8x128xf32>
    %462 = arith.select %5, %461, %460 : vector<8x128xi1>, vector<8x128xf32>
    %463 = vector.extract_strided_slice %462 {offsets = [0, 0], sizes = [8, 32], strides = [1, 1]} : vector<8x128xf32> to vector<8x32xf32>
    %464 = vector.extract_strided_slice %462 {offsets = [0, 32], sizes = [8, 32], strides = [1, 1]} : vector<8x128xf32> to vector<8x32xf32>
    %465 = vector.extract_strided_slice %462 {offsets = [0, 64], sizes = [8, 32], strides = [1, 1]} : vector<8x128xf32> to vector<8x32xf32>
    %466 = vector.extract_strided_slice %462 {offsets = [0, 96], sizes = [8, 32], strides = [1, 1]} : vector<8x128xf32> to vector<8x32xf32>
    %467 = arith.mulf %464, %448 : vector<8x32xf32>
    %468 = arith.mulf %463, %465 : vector<8x32xf32>
    %469 = arith.addf %467, %468 : vector<8x32xf32>
    %470 = math.tanh %469 : vector<8x32xf32>
    %471 = arith.mulf %466, %470 : vector<8x32xf32>
    %c3_152 = arith.constant 3 : index
    %c0_153 = arith.constant 0 : index
    %c0_154 = arith.constant 0 : index
    %472 = vector.load %arg13[%c3_152, %c0_153, %c0_154] : memref<16x8x128xf32, #tpu.memory_space<vmem>>, vector<1x8x128xf32>
    %473 = vector.shape_cast %472 : vector<1x8x128xf32> to vector<8x128xf32>
    %474 = arith.truncf %471 : vector<8x32xf32> to vector<8x32xbf16>
    %cst_155 = arith.constant dense<0.000000e+00> : vector<8x128xf32>
    %475 = tpu.matmul %474, %410, %cst_155 {dimension_numbers = #tpu.dot_dimension_numbers<[1], [0], [0], [1], [0, 0, 1, 1], [], []>} : vector<8x32xbf16>, vector<32x128xbf16>, vector<8x128xf32> -> vector<8x128xf32>
    %476 = arith.addf %473, %475 : vector<8x128xf32>
    %477 = arith.negf %476 : vector<8x128xf32>
    %478 = math.exp %477 : vector<8x128xf32>
    %cst_156 = arith.constant 1.000000e+00 : f32
    %479 = vector.broadcast %cst_156 : f32 to vector<8x128xf32>
    %480 = arith.addf %479, %478 : vector<8x128xf32>
    %481 = arith.divf %479, %480 : vector<8x128xf32>
    %482 = math.tanh %476 : vector<8x128xf32>
    %483 = arith.select %5, %482, %481 : vector<8x128xi1>, vector<8x128xf32>
    %484 = vector.extract_strided_slice %483 {offsets = [0, 0], sizes = [8, 32], strides = [1, 1]} : vector<8x128xf32> to vector<8x32xf32>
    %485 = vector.extract_strided_slice %483 {offsets = [0, 32], sizes = [8, 32], strides = [1, 1]} : vector<8x128xf32> to vector<8x32xf32>
    %486 = vector.extract_strided_slice %483 {offsets = [0, 64], sizes = [8, 32], strides = [1, 1]} : vector<8x128xf32> to vector<8x32xf32>
    %487 = vector.extract_strided_slice %483 {offsets = [0, 96], sizes = [8, 32], strides = [1, 1]} : vector<8x128xf32> to vector<8x32xf32>
    %488 = arith.mulf %485, %469 : vector<8x32xf32>
    %489 = arith.mulf %484, %486 : vector<8x32xf32>
    %490 = arith.addf %488, %489 : vector<8x32xf32>
    %491 = math.tanh %490 : vector<8x32xf32>
    %492 = arith.mulf %487, %491 : vector<8x32xf32>
    %c4_157 = arith.constant 4 : index
    %c0_158 = arith.constant 0 : index
    %c0_159 = arith.constant 0 : index
    %493 = vector.load %arg13[%c4_157, %c0_158, %c0_159] : memref<16x8x128xf32, #tpu.memory_space<vmem>>, vector<1x8x128xf32>
    %494 = vector.shape_cast %493 : vector<1x8x128xf32> to vector<8x128xf32>
    %495 = arith.truncf %492 : vector<8x32xf32> to vector<8x32xbf16>
    %cst_160 = arith.constant dense<0.000000e+00> : vector<8x128xf32>
    %496 = tpu.matmul %495, %410, %cst_160 {dimension_numbers = #tpu.dot_dimension_numbers<[1], [0], [0], [1], [0, 0, 1, 1], [], []>} : vector<8x32xbf16>, vector<32x128xbf16>, vector<8x128xf32> -> vector<8x128xf32>
    %497 = arith.addf %494, %496 : vector<8x128xf32>
    %498 = arith.negf %497 : vector<8x128xf32>
    %499 = math.exp %498 : vector<8x128xf32>
    %cst_161 = arith.constant 1.000000e+00 : f32
    %500 = vector.broadcast %cst_161 : f32 to vector<8x128xf32>
    %501 = arith.addf %500, %499 : vector<8x128xf32>
    %502 = arith.divf %500, %501 : vector<8x128xf32>
    %503 = math.tanh %497 : vector<8x128xf32>
    %504 = arith.select %5, %503, %502 : vector<8x128xi1>, vector<8x128xf32>
    %505 = vector.extract_strided_slice %504 {offsets = [0, 0], sizes = [8, 32], strides = [1, 1]} : vector<8x128xf32> to vector<8x32xf32>
    %506 = vector.extract_strided_slice %504 {offsets = [0, 32], sizes = [8, 32], strides = [1, 1]} : vector<8x128xf32> to vector<8x32xf32>
    %507 = vector.extract_strided_slice %504 {offsets = [0, 64], sizes = [8, 32], strides = [1, 1]} : vector<8x128xf32> to vector<8x32xf32>
    %508 = vector.extract_strided_slice %504 {offsets = [0, 96], sizes = [8, 32], strides = [1, 1]} : vector<8x128xf32> to vector<8x32xf32>
    %509 = arith.mulf %506, %490 : vector<8x32xf32>
    %510 = arith.mulf %505, %507 : vector<8x32xf32>
    %511 = arith.addf %509, %510 : vector<8x32xf32>
    %512 = math.tanh %511 : vector<8x32xf32>
    %513 = arith.mulf %508, %512 : vector<8x32xf32>
    %c5_162 = arith.constant 5 : index
    %c0_163 = arith.constant 0 : index
    %c0_164 = arith.constant 0 : index
    %514 = vector.load %arg13[%c5_162, %c0_163, %c0_164] : memref<16x8x128xf32, #tpu.memory_space<vmem>>, vector<1x8x128xf32>
    %515 = vector.shape_cast %514 : vector<1x8x128xf32> to vector<8x128xf32>
    %516 = arith.truncf %513 : vector<8x32xf32> to vector<8x32xbf16>
    %cst_165 = arith.constant dense<0.000000e+00> : vector<8x128xf32>
    %517 = tpu.matmul %516, %410, %cst_165 {dimension_numbers = #tpu.dot_dimension_numbers<[1], [0], [0], [1], [0, 0, 1, 1], [], []>} : vector<8x32xbf16>, vector<32x128xbf16>, vector<8x128xf32> -> vector<8x128xf32>
    %518 = arith.addf %515, %517 : vector<8x128xf32>
    %519 = arith.negf %518 : vector<8x128xf32>
    %520 = math.exp %519 : vector<8x128xf32>
    %cst_166 = arith.constant 1.000000e+00 : f32
    %521 = vector.broadcast %cst_166 : f32 to vector<8x128xf32>
    %522 = arith.addf %521, %520 : vector<8x128xf32>
    %523 = arith.divf %521, %522 : vector<8x128xf32>
    %524 = math.tanh %518 : vector<8x128xf32>
    %525 = arith.select %5, %524, %523 : vector<8x128xi1>, vector<8x128xf32>
    %526 = vector.extract_strided_slice %525 {offsets = [0, 0], sizes = [8, 32], strides = [1, 1]} : vector<8x128xf32> to vector<8x32xf32>
    %527 = vector.extract_strided_slice %525 {offsets = [0, 32], sizes = [8, 32], strides = [1, 1]} : vector<8x128xf32> to vector<8x32xf32>
    %528 = vector.extract_strided_slice %525 {offsets = [0, 64], sizes = [8, 32], strides = [1, 1]} : vector<8x128xf32> to vector<8x32xf32>
    %529 = vector.extract_strided_slice %525 {offsets = [0, 96], sizes = [8, 32], strides = [1, 1]} : vector<8x128xf32> to vector<8x32xf32>
    %530 = arith.mulf %527, %511 : vector<8x32xf32>
    %531 = arith.mulf %526, %528 : vector<8x32xf32>
    %532 = arith.addf %530, %531 : vector<8x32xf32>
    %533 = math.tanh %532 : vector<8x32xf32>
    %534 = arith.mulf %529, %533 : vector<8x32xf32>
    %c6_167 = arith.constant 6 : index
    %c0_168 = arith.constant 0 : index
    %c0_169 = arith.constant 0 : index
    %535 = vector.load %arg13[%c6_167, %c0_168, %c0_169] : memref<16x8x128xf32, #tpu.memory_space<vmem>>, vector<1x8x128xf32>
    %536 = vector.shape_cast %535 : vector<1x8x128xf32> to vector<8x128xf32>
    %537 = arith.truncf %534 : vector<8x32xf32> to vector<8x32xbf16>
    %cst_170 = arith.constant dense<0.000000e+00> : vector<8x128xf32>
    %538 = tpu.matmul %537, %410, %cst_170 {dimension_numbers = #tpu.dot_dimension_numbers<[1], [0], [0], [1], [0, 0, 1, 1], [], []>} : vector<8x32xbf16>, vector<32x128xbf16>, vector<8x128xf32> -> vector<8x128xf32>
    %539 = arith.addf %536, %538 : vector<8x128xf32>
    %540 = arith.negf %539 : vector<8x128xf32>
    %541 = math.exp %540 : vector<8x128xf32>
    %cst_171 = arith.constant 1.000000e+00 : f32
    %542 = vector.broadcast %cst_171 : f32 to vector<8x128xf32>
    %543 = arith.addf %542, %541 : vector<8x128xf32>
    %544 = arith.divf %542, %543 : vector<8x128xf32>
    %545 = math.tanh %539 : vector<8x128xf32>
    %546 = arith.select %5, %545, %544 : vector<8x128xi1>, vector<8x128xf32>
    %547 = vector.extract_strided_slice %546 {offsets = [0, 0], sizes = [8, 32], strides = [1, 1]} : vector<8x128xf32> to vector<8x32xf32>
    %548 = vector.extract_strided_slice %546 {offsets = [0, 32], sizes = [8, 32], strides = [1, 1]} : vector<8x128xf32> to vector<8x32xf32>
    %549 = vector.extract_strided_slice %546 {offsets = [0, 64], sizes = [8, 32], strides = [1, 1]} : vector<8x128xf32> to vector<8x32xf32>
    %550 = vector.extract_strided_slice %546 {offsets = [0, 96], sizes = [8, 32], strides = [1, 1]} : vector<8x128xf32> to vector<8x32xf32>
    %551 = arith.mulf %548, %532 : vector<8x32xf32>
    %552 = arith.mulf %547, %549 : vector<8x32xf32>
    %553 = arith.addf %551, %552 : vector<8x32xf32>
    %554 = math.tanh %553 : vector<8x32xf32>
    %555 = arith.mulf %550, %554 : vector<8x32xf32>
    %c7_172 = arith.constant 7 : index
    %c0_173 = arith.constant 0 : index
    %c0_174 = arith.constant 0 : index
    %556 = vector.load %arg13[%c7_172, %c0_173, %c0_174] : memref<16x8x128xf32, #tpu.memory_space<vmem>>, vector<1x8x128xf32>
    %557 = vector.shape_cast %556 : vector<1x8x128xf32> to vector<8x128xf32>
    %558 = arith.truncf %555 : vector<8x32xf32> to vector<8x32xbf16>
    %cst_175 = arith.constant dense<0.000000e+00> : vector<8x128xf32>
    %559 = tpu.matmul %558, %410, %cst_175 {dimension_numbers = #tpu.dot_dimension_numbers<[1], [0], [0], [1], [0, 0, 1, 1], [], []>} : vector<8x32xbf16>, vector<32x128xbf16>, vector<8x128xf32> -> vector<8x128xf32>
    %560 = arith.addf %557, %559 : vector<8x128xf32>
    %561 = arith.negf %560 : vector<8x128xf32>
    %562 = math.exp %561 : vector<8x128xf32>
    %cst_176 = arith.constant 1.000000e+00 : f32
    %563 = vector.broadcast %cst_176 : f32 to vector<8x128xf32>
    %564 = arith.addf %563, %562 : vector<8x128xf32>
    %565 = arith.divf %563, %564 : vector<8x128xf32>
    %566 = math.tanh %560 : vector<8x128xf32>
    %567 = arith.select %5, %566, %565 : vector<8x128xi1>, vector<8x128xf32>
    %568 = vector.extract_strided_slice %567 {offsets = [0, 0], sizes = [8, 32], strides = [1, 1]} : vector<8x128xf32> to vector<8x32xf32>
    %569 = vector.extract_strided_slice %567 {offsets = [0, 32], sizes = [8, 32], strides = [1, 1]} : vector<8x128xf32> to vector<8x32xf32>
    %570 = vector.extract_strided_slice %567 {offsets = [0, 64], sizes = [8, 32], strides = [1, 1]} : vector<8x128xf32> to vector<8x32xf32>
    %571 = vector.extract_strided_slice %567 {offsets = [0, 96], sizes = [8, 32], strides = [1, 1]} : vector<8x128xf32> to vector<8x32xf32>
    %572 = arith.mulf %569, %553 : vector<8x32xf32>
    %573 = arith.mulf %568, %570 : vector<8x32xf32>
    %574 = arith.addf %572, %573 : vector<8x32xf32>
    %575 = math.tanh %574 : vector<8x32xf32>
    %576 = arith.mulf %571, %575 : vector<8x32xf32>
    %c8_177 = arith.constant 8 : index
    %c0_178 = arith.constant 0 : index
    %c0_179 = arith.constant 0 : index
    %577 = vector.load %arg13[%c8_177, %c0_178, %c0_179] : memref<16x8x128xf32, #tpu.memory_space<vmem>>, vector<1x8x128xf32>
    %578 = vector.shape_cast %577 : vector<1x8x128xf32> to vector<8x128xf32>
    %579 = arith.truncf %576 : vector<8x32xf32> to vector<8x32xbf16>
    %cst_180 = arith.constant dense<0.000000e+00> : vector<8x128xf32>
    %580 = tpu.matmul %579, %410, %cst_180 {dimension_numbers = #tpu.dot_dimension_numbers<[1], [0], [0], [1], [0, 0, 1, 1], [], []>} : vector<8x32xbf16>, vector<32x128xbf16>, vector<8x128xf32> -> vector<8x128xf32>
    %581 = arith.addf %578, %580 : vector<8x128xf32>
    %582 = arith.negf %581 : vector<8x128xf32>
    %583 = math.exp %582 : vector<8x128xf32>
    %cst_181 = arith.constant 1.000000e+00 : f32
    %584 = vector.broadcast %cst_181 : f32 to vector<8x128xf32>
    %585 = arith.addf %584, %583 : vector<8x128xf32>
    %586 = arith.divf %584, %585 : vector<8x128xf32>
    %587 = math.tanh %581 : vector<8x128xf32>
    %588 = arith.select %5, %587, %586 : vector<8x128xi1>, vector<8x128xf32>
    %589 = vector.extract_strided_slice %588 {offsets = [0, 0], sizes = [8, 32], strides = [1, 1]} : vector<8x128xf32> to vector<8x32xf32>
    %590 = vector.extract_strided_slice %588 {offsets = [0, 32], sizes = [8, 32], strides = [1, 1]} : vector<8x128xf32> to vector<8x32xf32>
    %591 = vector.extract_strided_slice %588 {offsets = [0, 64], sizes = [8, 32], strides = [1, 1]} : vector<8x128xf32> to vector<8x32xf32>
    %592 = vector.extract_strided_slice %588 {offsets = [0, 96], sizes = [8, 32], strides = [1, 1]} : vector<8x128xf32> to vector<8x32xf32>
    %593 = arith.mulf %590, %574 : vector<8x32xf32>
    %594 = arith.mulf %589, %591 : vector<8x32xf32>
    %595 = arith.addf %593, %594 : vector<8x32xf32>
    %596 = math.tanh %595 : vector<8x32xf32>
    %597 = arith.mulf %592, %596 : vector<8x32xf32>
    %c9_182 = arith.constant 9 : index
    %c0_183 = arith.constant 0 : index
    %c0_184 = arith.constant 0 : index
    %598 = vector.load %arg13[%c9_182, %c0_183, %c0_184] : memref<16x8x128xf32, #tpu.memory_space<vmem>>, vector<1x8x128xf32>
    %599 = vector.shape_cast %598 : vector<1x8x128xf32> to vector<8x128xf32>
    %600 = arith.truncf %597 : vector<8x32xf32> to vector<8x32xbf16>
    %cst_185 = arith.constant dense<0.000000e+00> : vector<8x128xf32>
    %601 = tpu.matmul %600, %410, %cst_185 {dimension_numbers = #tpu.dot_dimension_numbers<[1], [0], [0], [1], [0, 0, 1, 1], [], []>} : vector<8x32xbf16>, vector<32x128xbf16>, vector<8x128xf32> -> vector<8x128xf32>
    %602 = arith.addf %599, %601 : vector<8x128xf32>
    %603 = arith.negf %602 : vector<8x128xf32>
    %604 = math.exp %603 : vector<8x128xf32>
    %cst_186 = arith.constant 1.000000e+00 : f32
    %605 = vector.broadcast %cst_186 : f32 to vector<8x128xf32>
    %606 = arith.addf %605, %604 : vector<8x128xf32>
    %607 = arith.divf %605, %606 : vector<8x128xf32>
    %608 = math.tanh %602 : vector<8x128xf32>
    %609 = arith.select %5, %608, %607 : vector<8x128xi1>, vector<8x128xf32>
    %610 = vector.extract_strided_slice %609 {offsets = [0, 0], sizes = [8, 32], strides = [1, 1]} : vector<8x128xf32> to vector<8x32xf32>
    %611 = vector.extract_strided_slice %609 {offsets = [0, 32], sizes = [8, 32], strides = [1, 1]} : vector<8x128xf32> to vector<8x32xf32>
    %612 = vector.extract_strided_slice %609 {offsets = [0, 64], sizes = [8, 32], strides = [1, 1]} : vector<8x128xf32> to vector<8x32xf32>
    %613 = vector.extract_strided_slice %609 {offsets = [0, 96], sizes = [8, 32], strides = [1, 1]} : vector<8x128xf32> to vector<8x32xf32>
    %614 = arith.mulf %611, %595 : vector<8x32xf32>
    %615 = arith.mulf %610, %612 : vector<8x32xf32>
    %616 = arith.addf %614, %615 : vector<8x32xf32>
    %617 = math.tanh %616 : vector<8x32xf32>
    %618 = arith.mulf %613, %617 : vector<8x32xf32>
    %c10_187 = arith.constant 10 : index
    %c0_188 = arith.constant 0 : index
    %c0_189 = arith.constant 0 : index
    %619 = vector.load %arg13[%c10_187, %c0_188, %c0_189] : memref<16x8x128xf32, #tpu.memory_space<vmem>>, vector<1x8x128xf32>
    %620 = vector.shape_cast %619 : vector<1x8x128xf32> to vector<8x128xf32>
    %621 = arith.truncf %618 : vector<8x32xf32> to vector<8x32xbf16>
    %cst_190 = arith.constant dense<0.000000e+00> : vector<8x128xf32>
    %622 = tpu.matmul %621, %410, %cst_190 {dimension_numbers = #tpu.dot_dimension_numbers<[1], [0], [0], [1], [0, 0, 1, 1], [], []>} : vector<8x32xbf16>, vector<32x128xbf16>, vector<8x128xf32> -> vector<8x128xf32>
    %623 = arith.addf %620, %622 : vector<8x128xf32>
    %624 = arith.negf %623 : vector<8x128xf32>
    %625 = math.exp %624 : vector<8x128xf32>
    %cst_191 = arith.constant 1.000000e+00 : f32
    %626 = vector.broadcast %cst_191 : f32 to vector<8x128xf32>
    %627 = arith.addf %626, %625 : vector<8x128xf32>
    %628 = arith.divf %626, %627 : vector<8x128xf32>
    %629 = math.tanh %623 : vector<8x128xf32>
    %630 = arith.select %5, %629, %628 : vector<8x128xi1>, vector<8x128xf32>
    %631 = vector.extract_strided_slice %630 {offsets = [0, 0], sizes = [8, 32], strides = [1, 1]} : vector<8x128xf32> to vector<8x32xf32>
    %632 = vector.extract_strided_slice %630 {offsets = [0, 32], sizes = [8, 32], strides = [1, 1]} : vector<8x128xf32> to vector<8x32xf32>
    %633 = vector.extract_strided_slice %630 {offsets = [0, 64], sizes = [8, 32], strides = [1, 1]} : vector<8x128xf32> to vector<8x32xf32>
    %634 = vector.extract_strided_slice %630 {offsets = [0, 96], sizes = [8, 32], strides = [1, 1]} : vector<8x128xf32> to vector<8x32xf32>
    %635 = arith.mulf %632, %616 : vector<8x32xf32>
    %636 = arith.mulf %631, %633 : vector<8x32xf32>
    %637 = arith.addf %635, %636 : vector<8x32xf32>
    %638 = math.tanh %637 : vector<8x32xf32>
    %639 = arith.mulf %634, %638 : vector<8x32xf32>
    %c11_192 = arith.constant 11 : index
    %c0_193 = arith.constant 0 : index
    %c0_194 = arith.constant 0 : index
    %640 = vector.load %arg13[%c11_192, %c0_193, %c0_194] : memref<16x8x128xf32, #tpu.memory_space<vmem>>, vector<1x8x128xf32>
    %641 = vector.shape_cast %640 : vector<1x8x128xf32> to vector<8x128xf32>
    %642 = arith.truncf %639 : vector<8x32xf32> to vector<8x32xbf16>
    %cst_195 = arith.constant dense<0.000000e+00> : vector<8x128xf32>
    %643 = tpu.matmul %642, %410, %cst_195 {dimension_numbers = #tpu.dot_dimension_numbers<[1], [0], [0], [1], [0, 0, 1, 1], [], []>} : vector<8x32xbf16>, vector<32x128xbf16>, vector<8x128xf32> -> vector<8x128xf32>
    %644 = arith.addf %641, %643 : vector<8x128xf32>
    %645 = arith.negf %644 : vector<8x128xf32>
    %646 = math.exp %645 : vector<8x128xf32>
    %cst_196 = arith.constant 1.000000e+00 : f32
    %647 = vector.broadcast %cst_196 : f32 to vector<8x128xf32>
    %648 = arith.addf %647, %646 : vector<8x128xf32>
    %649 = arith.divf %647, %648 : vector<8x128xf32>
    %650 = math.tanh %644 : vector<8x128xf32>
    %651 = arith.select %5, %650, %649 : vector<8x128xi1>, vector<8x128xf32>
    %652 = vector.extract_strided_slice %651 {offsets = [0, 0], sizes = [8, 32], strides = [1, 1]} : vector<8x128xf32> to vector<8x32xf32>
    %653 = vector.extract_strided_slice %651 {offsets = [0, 32], sizes = [8, 32], strides = [1, 1]} : vector<8x128xf32> to vector<8x32xf32>
    %654 = vector.extract_strided_slice %651 {offsets = [0, 64], sizes = [8, 32], strides = [1, 1]} : vector<8x128xf32> to vector<8x32xf32>
    %655 = vector.extract_strided_slice %651 {offsets = [0, 96], sizes = [8, 32], strides = [1, 1]} : vector<8x128xf32> to vector<8x32xf32>
    %656 = arith.mulf %653, %637 : vector<8x32xf32>
    %657 = arith.mulf %652, %654 : vector<8x32xf32>
    %658 = arith.addf %656, %657 : vector<8x32xf32>
    %659 = math.tanh %658 : vector<8x32xf32>
    %660 = arith.mulf %655, %659 : vector<8x32xf32>
    %c12_197 = arith.constant 12 : index
    %c0_198 = arith.constant 0 : index
    %c0_199 = arith.constant 0 : index
    %661 = vector.load %arg13[%c12_197, %c0_198, %c0_199] : memref<16x8x128xf32, #tpu.memory_space<vmem>>, vector<1x8x128xf32>
    %662 = vector.shape_cast %661 : vector<1x8x128xf32> to vector<8x128xf32>
    %663 = arith.truncf %660 : vector<8x32xf32> to vector<8x32xbf16>
    %cst_200 = arith.constant dense<0.000000e+00> : vector<8x128xf32>
    %664 = tpu.matmul %663, %410, %cst_200 {dimension_numbers = #tpu.dot_dimension_numbers<[1], [0], [0], [1], [0, 0, 1, 1], [], []>} : vector<8x32xbf16>, vector<32x128xbf16>, vector<8x128xf32> -> vector<8x128xf32>
    %665 = arith.addf %662, %664 : vector<8x128xf32>
    %666 = arith.negf %665 : vector<8x128xf32>
    %667 = math.exp %666 : vector<8x128xf32>
    %cst_201 = arith.constant 1.000000e+00 : f32
    %668 = vector.broadcast %cst_201 : f32 to vector<8x128xf32>
    %669 = arith.addf %668, %667 : vector<8x128xf32>
    %670 = arith.divf %668, %669 : vector<8x128xf32>
    %671 = math.tanh %665 : vector<8x128xf32>
    %672 = arith.select %5, %671, %670 : vector<8x128xi1>, vector<8x128xf32>
    %673 = vector.extract_strided_slice %672 {offsets = [0, 0], sizes = [8, 32], strides = [1, 1]} : vector<8x128xf32> to vector<8x32xf32>
    %674 = vector.extract_strided_slice %672 {offsets = [0, 32], sizes = [8, 32], strides = [1, 1]} : vector<8x128xf32> to vector<8x32xf32>
    %675 = vector.extract_strided_slice %672 {offsets = [0, 64], sizes = [8, 32], strides = [1, 1]} : vector<8x128xf32> to vector<8x32xf32>
    %676 = vector.extract_strided_slice %672 {offsets = [0, 96], sizes = [8, 32], strides = [1, 1]} : vector<8x128xf32> to vector<8x32xf32>
    %677 = arith.mulf %674, %658 : vector<8x32xf32>
    %678 = arith.mulf %673, %675 : vector<8x32xf32>
    %679 = arith.addf %677, %678 : vector<8x32xf32>
    %680 = math.tanh %679 : vector<8x32xf32>
    %681 = arith.mulf %676, %680 : vector<8x32xf32>
    %c13_202 = arith.constant 13 : index
    %c0_203 = arith.constant 0 : index
    %c0_204 = arith.constant 0 : index
    %682 = vector.load %arg13[%c13_202, %c0_203, %c0_204] : memref<16x8x128xf32, #tpu.memory_space<vmem>>, vector<1x8x128xf32>
    %683 = vector.shape_cast %682 : vector<1x8x128xf32> to vector<8x128xf32>
    %684 = arith.truncf %681 : vector<8x32xf32> to vector<8x32xbf16>
    %cst_205 = arith.constant dense<0.000000e+00> : vector<8x128xf32>
    %685 = tpu.matmul %684, %410, %cst_205 {dimension_numbers = #tpu.dot_dimension_numbers<[1], [0], [0], [1], [0, 0, 1, 1], [], []>} : vector<8x32xbf16>, vector<32x128xbf16>, vector<8x128xf32> -> vector<8x128xf32>
    %686 = arith.addf %683, %685 : vector<8x128xf32>
    %687 = arith.negf %686 : vector<8x128xf32>
    %688 = math.exp %687 : vector<8x128xf32>
    %cst_206 = arith.constant 1.000000e+00 : f32
    %689 = vector.broadcast %cst_206 : f32 to vector<8x128xf32>
    %690 = arith.addf %689, %688 : vector<8x128xf32>
    %691 = arith.divf %689, %690 : vector<8x128xf32>
    %692 = math.tanh %686 : vector<8x128xf32>
    %693 = arith.select %5, %692, %691 : vector<8x128xi1>, vector<8x128xf32>
    %694 = vector.extract_strided_slice %693 {offsets = [0, 0], sizes = [8, 32], strides = [1, 1]} : vector<8x128xf32> to vector<8x32xf32>
    %695 = vector.extract_strided_slice %693 {offsets = [0, 32], sizes = [8, 32], strides = [1, 1]} : vector<8x128xf32> to vector<8x32xf32>
    %696 = vector.extract_strided_slice %693 {offsets = [0, 64], sizes = [8, 32], strides = [1, 1]} : vector<8x128xf32> to vector<8x32xf32>
    %697 = vector.extract_strided_slice %693 {offsets = [0, 96], sizes = [8, 32], strides = [1, 1]} : vector<8x128xf32> to vector<8x32xf32>
    %698 = arith.mulf %695, %679 : vector<8x32xf32>
    %699 = arith.mulf %694, %696 : vector<8x32xf32>
    %700 = arith.addf %698, %699 : vector<8x32xf32>
    %701 = math.tanh %700 : vector<8x32xf32>
    %702 = arith.mulf %697, %701 : vector<8x32xf32>
    %c14_207 = arith.constant 14 : index
    %c0_208 = arith.constant 0 : index
    %c0_209 = arith.constant 0 : index
    %703 = vector.load %arg13[%c14_207, %c0_208, %c0_209] : memref<16x8x128xf32, #tpu.memory_space<vmem>>, vector<1x8x128xf32>
    %704 = vector.shape_cast %703 : vector<1x8x128xf32> to vector<8x128xf32>
    %705 = arith.truncf %702 : vector<8x32xf32> to vector<8x32xbf16>
    %cst_210 = arith.constant dense<0.000000e+00> : vector<8x128xf32>
    %706 = tpu.matmul %705, %410, %cst_210 {dimension_numbers = #tpu.dot_dimension_numbers<[1], [0], [0], [1], [0, 0, 1, 1], [], []>} : vector<8x32xbf16>, vector<32x128xbf16>, vector<8x128xf32> -> vector<8x128xf32>
    %707 = arith.addf %704, %706 : vector<8x128xf32>
    %708 = arith.negf %707 : vector<8x128xf32>
    %709 = math.exp %708 : vector<8x128xf32>
    %cst_211 = arith.constant 1.000000e+00 : f32
    %710 = vector.broadcast %cst_211 : f32 to vector<8x128xf32>
    %711 = arith.addf %710, %709 : vector<8x128xf32>
    %712 = arith.divf %710, %711 : vector<8x128xf32>
    %713 = math.tanh %707 : vector<8x128xf32>
    %714 = arith.select %5, %713, %712 : vector<8x128xi1>, vector<8x128xf32>
    %715 = vector.extract_strided_slice %714 {offsets = [0, 0], sizes = [8, 32], strides = [1, 1]} : vector<8x128xf32> to vector<8x32xf32>
    %716 = vector.extract_strided_slice %714 {offsets = [0, 32], sizes = [8, 32], strides = [1, 1]} : vector<8x128xf32> to vector<8x32xf32>
    %717 = vector.extract_strided_slice %714 {offsets = [0, 64], sizes = [8, 32], strides = [1, 1]} : vector<8x128xf32> to vector<8x32xf32>
    %718 = vector.extract_strided_slice %714 {offsets = [0, 96], sizes = [8, 32], strides = [1, 1]} : vector<8x128xf32> to vector<8x32xf32>
    %719 = arith.mulf %716, %700 : vector<8x32xf32>
    %720 = arith.mulf %715, %717 : vector<8x32xf32>
    %721 = arith.addf %719, %720 : vector<8x32xf32>
    %722 = math.tanh %721 : vector<8x32xf32>
    %723 = arith.mulf %718, %722 : vector<8x32xf32>
    %c15_212 = arith.constant 15 : index
    %c0_213 = arith.constant 0 : index
    %c0_214 = arith.constant 0 : index
    %724 = vector.load %arg13[%c15_212, %c0_213, %c0_214] : memref<16x8x128xf32, #tpu.memory_space<vmem>>, vector<1x8x128xf32>
    %725 = vector.shape_cast %724 : vector<1x8x128xf32> to vector<8x128xf32>
    %726 = arith.truncf %723 : vector<8x32xf32> to vector<8x32xbf16>
    %cst_215 = arith.constant dense<0.000000e+00> : vector<8x128xf32>
    %727 = tpu.matmul %726, %410, %cst_215 {dimension_numbers = #tpu.dot_dimension_numbers<[1], [0], [0], [1], [0, 0, 1, 1], [], []>} : vector<8x32xbf16>, vector<32x128xbf16>, vector<8x128xf32> -> vector<8x128xf32>
    %728 = arith.addf %725, %727 : vector<8x128xf32>
    %729 = arith.negf %728 : vector<8x128xf32>
    %730 = math.exp %729 : vector<8x128xf32>
    %cst_216 = arith.constant 1.000000e+00 : f32
    %731 = vector.broadcast %cst_216 : f32 to vector<8x128xf32>
    %732 = arith.addf %731, %730 : vector<8x128xf32>
    %733 = arith.divf %731, %732 : vector<8x128xf32>
    %734 = math.tanh %728 : vector<8x128xf32>
    %735 = arith.select %5, %734, %733 : vector<8x128xi1>, vector<8x128xf32>
    %736 = vector.extract_strided_slice %735 {offsets = [0, 0], sizes = [8, 32], strides = [1, 1]} : vector<8x128xf32> to vector<8x32xf32>
    %737 = vector.extract_strided_slice %735 {offsets = [0, 32], sizes = [8, 32], strides = [1, 1]} : vector<8x128xf32> to vector<8x32xf32>
    %738 = vector.extract_strided_slice %735 {offsets = [0, 64], sizes = [8, 32], strides = [1, 1]} : vector<8x128xf32> to vector<8x32xf32>
    %739 = vector.extract_strided_slice %735 {offsets = [0, 96], sizes = [8, 32], strides = [1, 1]} : vector<8x128xf32> to vector<8x32xf32>
    %740 = arith.mulf %737, %721 : vector<8x32xf32>
    %741 = arith.mulf %736, %738 : vector<8x32xf32>
    %742 = arith.addf %740, %741 : vector<8x32xf32>
    %743 = math.tanh %742 : vector<8x32xf32>
    %744 = arith.mulf %739, %743 : vector<8x32xf32>
    %745 = arith.truncf %744 : vector<8x32xf32> to vector<8x32xbf16>
    %c0_217 = arith.constant 0 : index
    %c0_218 = arith.constant 0 : index
    %746 = vector.load %arg8[%c0_217, %c0_218] : memref<32x128xbf16, #tpu.memory_space<vmem>>, vector<32x128xbf16>
    %cst_219 = arith.constant dense<0.000000e+00> : vector<8x128xf32>
    %747 = tpu.matmul %745, %746, %cst_219 {dimension_numbers = #tpu.dot_dimension_numbers<[1], [0], [0], [1], [0, 0, 1, 1], [], []>} : vector<8x32xbf16>, vector<32x128xbf16>, vector<8x128xf32> -> vector<8x128xf32>
    %c0_220 = arith.constant 0 : index
    %c0_221 = arith.constant 0 : index
    %748 = vector.load %arg9[%c0_220, %c0_221] : memref<1x128xf32, #tpu.memory_space<vmem>>, vector<1x128xf32>
    %749 = vector.broadcast %748 : vector<1x128xf32> to vector<8x128xf32>
    %750 = arith.addf %747, %749 : vector<8x128xf32>
    %cst_222 = arith.constant 0.000000e+00 : f32
    %751 = vector.broadcast %cst_222 : f32 to vector<8x128xf32>
    %752 = arith.maximumf %750, %751 : vector<8x128xf32>
    %753 = arith.truncf %752 : vector<8x128xf32> to vector<8x128xbf16>
    %c0_223 = arith.constant 0 : index
    %c0_224 = arith.constant 0 : index
    %754 = vector.load %arg10[%c0_223, %c0_224] : memref<128x128xbf16, #tpu.memory_space<vmem>>, vector<128x128xbf16>
    %cst_225 = arith.constant dense<0.000000e+00> : vector<8x128xf32>
    %755 = tpu.matmul %753, %754, %cst_225 {dimension_numbers = #tpu.dot_dimension_numbers<[1], [0], [0], [1], [0, 0, 1, 1], [], []>} : vector<8x128xbf16>, vector<128x128xbf16>, vector<8x128xf32> -> vector<8x128xf32>
    %c0_226 = arith.constant 0 : index
    %c0_227 = arith.constant 0 : index
    %756 = vector.load %arg11[%c0_226, %c0_227] : memref<1x128xf32, #tpu.memory_space<vmem>>, vector<1x128xf32>
    %757 = vector.broadcast %756 : vector<1x128xf32> to vector<8x128xf32>
    %758 = arith.addf %755, %757 : vector<8x128xf32>
    %c0_228 = arith.constant 0 : index
    %c0_229 = arith.constant 0 : index
    %759 = vector.load %arg12[%c0_228, %c0_229] : memref<8x128xf32, #tpu.memory_space<vmem>>, vector<8x128xf32>
    tpu.vector_store %arg12[%c0_228, %c0_229], %758 {strides = array<i32>} : memref<8x128xf32, #tpu.memory_space<vmem>>, vector<8x128xf32>,
    return
  }
  func.func @transform_0(%arg0: i32) -> (i32, i32, i32) {
    %c0_i32 = arith.constant 0 : i32
    %c0_i32_0 = arith.constant 0 : i32
    %c0_i32_1 = arith.constant 0 : i32
    return %c0_i32, %arg0, %c0_i32_0 : i32, i32, i32
  }
  func.func @transform_1(%arg0: i32) -> (i32, i32) {
    %c0_i32 = arith.constant 0 : i32
    %c0_i32_0 = arith.constant 0 : i32
    %c0_i32_1 = arith.constant 0 : i32
    return %c0_i32, %c0_i32_0 : i32, i32
  }
  func.func @transform_2(%arg0: i32) -> (i32, i32) {
    %c0_i32 = arith.constant 0 : i32
    %c0_i32_0 = arith.constant 0 : i32
    %c0_i32_1 = arith.constant 0 : i32
    return %c0_i32, %c0_i32_0 : i32, i32
  }
  func.func @transform_3(%arg0: i32) -> (i32, i32) {
    %c0_i32 = arith.constant 0 : i32
    %c0_i32_0 = arith.constant 0 : i32
    %c0_i32_1 = arith.constant 0 : i32
    return %c0_i32, %c0_i32_0 : i32, i32
  }
  func.func @transform_4(%arg0: i32) -> (i32, i32) {
    %c0_i32 = arith.constant 0 : i32
    %c0_i32_0 = arith.constant 0 : i32
    %c0_i32_1 = arith.constant 0 : i32
    return %c0_i32, %c0_i32_0 : i32, i32
  }
  func.func @transform_5(%arg0: i32) -> (i32, i32) {
    %c0_i32 = arith.constant 0 : i32
    %c0_i32_0 = arith.constant 0 : i32
    %c0_i32_1 = arith.constant 0 : i32
    return %c0_i32, %c0_i32_0 : i32, i32
  }
  func.func @transform_6(%arg0: i32) -> (i32, i32) {
    %c0_i32 = arith.constant 0 : i32
    %c0_i32_0 = arith.constant 0 : i32
    %c0_i32_1 = arith.constant 0 : i32
    return %c0_i32, %c0_i32_0 : i32, i32
  }
  func.func @transform_7(%arg0: i32) -> (i32, i32) {
    %c0_i32 = arith.constant 0 : i32
    %c0_i32_0 = arith.constant 0 : i32
    %c0_i32_1 = arith.constant 0 : i32
    return %c0_i32, %c0_i32_0 : i32, i32
  }
  func.func @transform_8(%arg0: i32) -> (i32, i32) {
    %c0_i32 = arith.constant 0 : i32
    %c0_i32_0 = arith.constant 0 : i32
    %c0_i32_1 = arith.constant 0 : i32
    return %c0_i32, %c0_i32_0 : i32, i32
  }
  func.func @transform_9(%arg0: i32) -> (i32, i32) {
    %c0_i32 = arith.constant 0 : i32
    %c0_i32_0 = arith.constant 0 : i32
    %c0_i32_1 = arith.constant 0 : i32
    return %c0_i32, %c0_i32_0 : i32, i32
  }
  func.func @transform_10(%arg0: i32) -> (i32, i32) {
    %c0_i32 = arith.constant 0 : i32
    %c0_i32_0 = arith.constant 0 : i32
    %c0_i32_1 = arith.constant 0 : i32
    return %c0_i32, %c0_i32_0 : i32, i32
  }
  func.func @transform_11(%arg0: i32) -> (i32, i32) {
    %c0_i32 = arith.constant 0 : i32
    %c0_i32_0 = arith.constant 0 : i32
    return %arg0, %c0_i32 : i32, i32
  }
}

</mosaic_0001>

<llo_original>
// kernel: tpu_custom_call.1
$region0: #{tpu_custom_call.1}
  #allocation0 [shape = 'u32[]', space=smem, size = 0x4, offset = 0x4, fixed_abs, tag = 'smem constant byte address 0x4 - core index']
  #allocation1 [shape = 'u32[144,128]{1,0:T(1,128)}', space=vmem, size = 0x12000, scoped, tag = 'internal scratch']
  #allocation2 [shape = 'f32[16,8,128]{2,1,0:T(8,128)}', space=vmem, size = 0x10000, scoped, tag = 'scratch operand']
  #allocation3 [shape = 'f32[16,8,32]{2,1,0:T(8,128)}', space=vmem, size = 0x10000, scoped, tag = 'scratch operand']
  %s0 = inlined_call_operand.vmem [shape: bf16[16,8,8], index: 0, kind: input, shape index: {}]
  %s1 = inlined_call_operand.hbm [shape: bf16[8,128], index: 1, kind: input, shape index: {}]
  %s2 = inlined_call_operand.vmem [shape: bf16[32,128], index: 2, kind: input, shape index: {}]
  %s3 = inlined_call_operand.hbm [shape: f32[1,128], index: 3, kind: input, shape index: {}]
  %s4 = inlined_call_operand.vmem [shape: bf16[32,128], index: 4, kind: input, shape index: {}]
  %s5 = inlined_call_operand.vmem [shape: bf16[32,128], index: 5, kind: input, shape index: {}]
  %s6 = inlined_call_operand.hbm [shape: f32[1,128], index: 6, kind: input, shape index: {}]
  %s7 = inlined_call_operand.hbm [shape: bf16[32,128], index: 7, kind: input, shape index: {}]
  %s8 = inlined_call_operand.hbm [shape: f32[1,128], index: 8, kind: input, shape index: {}]
  %s9 = inlined_call_operand.vmem [shape: bf16[128,128], index: 9, kind: input, shape index: {}]
  %s10 = inlined_call_operand.vmem [shape: f32[1,128], index: 10, kind: input, shape index: {}]
  %s11 = inlined_call_operand.hbm [shape: f32[8,128], index: 11, kind: output, shape index: {}]
  %s12 = sld [smem:[#allocation0]]
  $region74: #{tpu_custom_call.1} parent=0
    _
  %s14 = ssub.s32 1, %s12
  %s15 = scalar_select 0, %s14, %s12
  $region1: #{tpu_custom_call.1} parent=0
    #allocation4 [shape = 'u8[2048]{0}', space=vmem, size = 0x800, scoped, tag = 'input window, operand 1, single buffered']
    #allocation5 [shape = 's32[1]{0}', space=sflag, size = 0x4, scoped, tag = 'scoped memory for tpu_custom_call.1']
    #allocation6 [shape = 's32[1]{0}', space=sflag, size = 0x4, scoped, tag = 'scoped memory for tpu_custom_call.1']
    #allocation7 [shape = 'u8[512]{0}', space=vmem, size = 0x400, scoped, tag = 'input window, operand 3, single buffered']
    #allocation8 [shape = 's32[1]{0}', space=sflag, size = 0x4, scoped, tag = 'scoped memory for tpu_custom_call.1']
    #allocation9 [shape = 'u8[512]{0}', space=vmem, size = 0x400, scoped, tag = 'input window, operand 6, single buffered']
    #allocation10 [shape = 'u8[8192]{0}', space=vmem, size = 0x2000, scoped, tag = 'input window, operand 7, single buffered']
    #allocation11 [shape = 's32[1]{0}', space=sflag, size = 0x4, scoped, tag = 'scoped memory for tpu_custom_call.1']
    #allocation12 [shape = 'u8[512]{0}', space=vmem, size = 0x400, scoped, tag = 'input window, operand 8, single buffered']
    #allocation13 [shape = 'u8[4096]{0}', space=vmem, size = 0x1000, scoped, tag = 'output window, operand 0, single buffered']
    %16 = vsyncpa [#allocation5], 0
    %17 = vsyncpa [#allocation8], 0
    %18 = vsyncpa [#allocation11], 0
    %19 = vsyncpa [#allocation6], 0
    // Predicated region
    $region2: #{tpu_custom_call.1} parent=1 // pred_check
      _
    $region3: #{tpu_custom_call.1} parent=1 // pred_check_branch
      %21 = sbr.rel (0) target = $region5
    $region4: #{tpu_custom_call.1} parent=1 // pred_region
      _
    $region5: #{tpu_custom_call.1} parent=1 // pred_fallthru
      _
    // Predicated region
    $region6: #{tpu_custom_call.1} parent=1 // pred_check
      _
    $region7: #{tpu_custom_call.1} parent=1 // pred_check_branch
      %23 = sbr.rel (0) target = $region9
    $region8: #{tpu_custom_call.1} parent=1 // pred_region
      %s25 = ssub.s32 64, 64
      %26 = vsyncadd [#allocation5], %s25
      %s28 = sshll.u32 [#allocation4], 4
      %s29 = int_to_ptr.vmem [resolvable:$true] %s28
      %31 = dma.hbm_to_vmem [thread:$0]  %s1, 64, %s29, [#allocation5]
    $region9: #{tpu_custom_call.1} parent=1 // pred_fallthru
      _
    // Predicated region
    $region10: #{tpu_custom_call.1} parent=1 // pred_check
      _
    $region11: #{tpu_custom_call.1} parent=1 // pred_check_branch
      %33 = sbr.rel (0) target = $region13
    $region12: #{tpu_custom_call.1} parent=1 // pred_region
      _
    $region13: #{tpu_custom_call.1} parent=1 // pred_fallthru
      _
    // Predicated region
    $region14: #{tpu_custom_call.1} parent=1 // pred_check
      _
    $region15: #{tpu_custom_call.1} parent=1 // pred_check_branch
      %35 = sbr.rel (0) target = $region17
    $region16: #{tpu_custom_call.1} parent=1 // pred_region
      %s37 = ssub.s32 16, 16
      %38 = vsyncadd [#allocation8], %s37
      %s40 = sshll.u32 [#allocation7], 4
      %s41 = int_to_ptr.vmem [resolvable:$true] %s40
      %43 = dma.hbm_to_vmem [thread:$0]  %s3, 16, %s41, [#allocation8]
    $region17: #{tpu_custom_call.1} parent=1 // pred_fallthru
      _
    // Predicated region
    $region18: #{tpu_custom_call.1} parent=1 // pred_check
      _
    $region19: #{tpu_custom_call.1} parent=1 // pred_check_branch
      %45 = sbr.rel (0) target = $region21
    $region20: #{tpu_custom_call.1} parent=1 // pred_region
      _
    $region21: #{tpu_custom_call.1} parent=1 // pred_fallthru
      _
    // Predicated region
    $region22: #{tpu_custom_call.1} parent=1 // pred_check
      _
    $region23: #{tpu_custom_call.1} parent=1 // pred_check_branch
      %47 = sbr.rel (0) target = $region25
    $region24: #{tpu_custom_call.1} parent=1 // pred_region
      _
    $region25: #{tpu_custom_call.1} parent=1 // pred_fallthru
      _
    // Predicated region
    $region26: #{tpu_custom_call.1} parent=1 // pred_check
      _
    $region27: #{tpu_custom_call.1} parent=1 // pred_check_branch
      %49 = sbr.rel (0) target = $region29
    $region28: #{tpu_custom_call.1} parent=1 // pred_region
      %s51 = ssub.s32 16, 16
      %52 = vsyncadd [#allocation8], %s51
      %s54 = sshll.u32 [#allocation9], 4
      %s55 = int_to_ptr.vmem [resolvable:$true] %s54
      %57 = dma.hbm_to_vmem [thread:$0]  %s6, 16, %s55, [#allocation8]
    $region29: #{tpu_custom_call.1} parent=1 // pred_fallthru
      _
    // Predicated region
    $region30: #{tpu_custom_call.1} parent=1 // pred_check
      _
    $region31: #{tpu_custom_call.1} parent=1 // pred_check_branch
      %59 = sbr.rel (0) target = $region33
    $region32: #{tpu_custom_call.1} parent=1 // pred_region
      %s61 = ssub.s32 256, 256
      %62 = vsyncadd [#allocation11], %s61
      %s63 = sshll.u32 [#allocation10], 4
      %s64 = int_to_ptr.vmem [resolvable:$true] %s63
      %69 = dma.hbm_to_vmem [thread:$0]  %s7, 256, %s64, [#allocation11], 64, 64, 4
    $region33: #{tpu_custom_call.1} parent=1 // pred_fallthru
      _
    // Predicated region
    $region34: #{tpu_custom_call.1} parent=1 // pred_check
      _
    $region35: #{tpu_custom_call.1} parent=1 // pred_check_branch
      %71 = sbr.rel (0) target = $region37
    $region36: #{tpu_custom_call.1} parent=1 // pred_region
      %s73 = ssub.s32 16, 16
      %74 = vsyncadd [#allocation11], %s73
      %s76 = sshll.u32 [#allocation12], 4
      %s77 = int_to_ptr.vmem [resolvable:$true] %s76
      %79 = dma.hbm_to_vmem [thread:$0]  %s8, 16, %s77, [#allocation11]
    $region37: #{tpu_custom_call.1} parent=1 // pred_fallthru
      _
    // Predicated region
    $region38: #{tpu_custom_call.1} parent=1 // pred_check
      _
    $region39: #{tpu_custom_call.1} parent=1 // pred_check_branch
      %81 = sbr.rel (0) target = $region41
    $region40: #{tpu_custom_call.1} parent=1 // pred_region
      _
    $region41: #{tpu_custom_call.1} parent=1 // pred_fallthru
      _
    // Predicated region
    $region42: #{tpu_custom_call.1} parent=1 // pred_check
      _
    $region43: #{tpu_custom_call.1} parent=1 // pred_check_branch
      %83 = sbr.rel (0) target = $region45
    $region44: #{tpu_custom_call.1} parent=1 // pred_region
      _
    $region45: #{tpu_custom_call.1} parent=1 // pred_fallthru
      _
    // Predicated region
    $region46: #{tpu_custom_call.1} parent=1 // pred_check
      _
    $region47: #{tpu_custom_call.1} parent=1 // pred_check_branch
      %85 = sbr.rel (0) target = $region49
    $region48: #{tpu_custom_call.1} parent=1 // pred_region
      %86 = dma.done [#allocation5], 64
    $region49: #{tpu_custom_call.1} parent=1 // pred_fallthru
      _
    // Predicated region
    $region50: #{tpu_custom_call.1} parent=1 // pred_check
      _
    $region51: #{tpu_custom_call.1} parent=1 // pred_check_branch
      %88 = sbr.rel (0) target = $region53
    $region52: #{tpu_custom_call.1} parent=1 // pred_region
      %89 = dma.done [#allocation8], 16
    $region53: #{tpu_custom_call.1} parent=1 // pred_fallthru
      _
    // Predicated region
    $region54: #{tpu_custom_call.1} parent=1 // pred_check
      _
    $region55: #{tpu_custom_call.1} parent=1 // pred_check_branch
      %91 = sbr.rel (0) target = $region57
    $region56: #{tpu_custom_call.1} parent=1 // pred_region
      %92 = dma.done [#allocation8], 16
    $region57: #{tpu_custom_call.1} parent=1 // pred_fallthru
      _
    // Predicated region
    $region58: #{tpu_custom_call.1} parent=1 // pred_check
      _
    $region59: #{tpu_custom_call.1} parent=1 // pred_check_branch
      %94 = sbr.rel (0) target = $region61
    $region60: #{tpu_custom_call.1} parent=1 // pred_region
      %95 = dma.done [#allocation11], 256
    $region61: #{tpu_custom_call.1} parent=1 // pred_fallthru
      _
    // Predicated region
    $region62: #{tpu_custom_call.1} parent=1 // pred_check
      _
    $region63: #{tpu_custom_call.1} parent=1 // pred_check_branch
      %97 = sbr.rel (0) target = $region65
    $region64: #{tpu_custom_call.1} parent=1 // pred_region
      %98 = dma.done [#allocation11], 16
    $region65: #{tpu_custom_call.1} parent=1 // pred_fallthru
      _
    %v100 = vlaneseq
    %v101 = vand.u32 %v100, 127
    %vm102 = vcmp.ge.s32.totalorder %v101, 64
    %vm103 = vcmp.lt.s32.totalorder %v101, 96
    %vm104 = vmand %vm102, %vm103
    %v105 = vld [vmem:[%s0] sm:$0xf]
    %v106 = vld [vmem:[%s0 + $0x4] sm:$0xf]
    %v107 = vld [vmem:[%s0 + $0x8] sm:$0xf]
    %v108 = vld [vmem:[%s0 + $0xc] sm:$0xf]
    %v109 = vld [vmem:[%s0 + $0x10] sm:$0xf]
    %v110 = vld [vmem:[%s0 + $0x14] sm:$0xf]
    %v111 = vld [vmem:[%s0 + $0x18] sm:$0xf]
    %v112 = vld [vmem:[%s0 + $0x1c] sm:$0xf]
    %v113 = vld [vmem:[%s0 + $0x20] sm:$0xf]
    %v114 = vld [vmem:[%s0 + $0x24] sm:$0xf]
    %v115 = vld [vmem:[%s0 + $0x28] sm:$0xf]
    %v116 = vld [vmem:[%s0 + $0x2c] sm:$0xf]
    %v117 = vld [vmem:[%s0 + $0x30] sm:$0xf]
    %v118 = vld [vmem:[%s0 + $0x34] sm:$0xf]
    %v119 = vld [vmem:[%s0 + $0x38] sm:$0xf]
    %v120 = vld [vmem:[%s0 + $0x3c] sm:$0xf]
    %v121 = vld [vmem:[#allocation4] sm:$0xf]
    %v138 = vunpack.c.l.b16 %v105
    %v139 = vunpack.c.l.b16 %v106
    %v140 = vunpack.c.l.b16 %v107
    %v141 = vunpack.c.l.b16 %v108
    %v142 = vunpack.c.l.b16 %v109
    %v143 = vunpack.c.l.b16 %v110
    %v144 = vunpack.c.l.b16 %v111
    %v145 = vunpack.c.l.b16 %v112
    %v146 = vunpack.c.l.b16 %v113
    %v147 = vunpack.c.l.b16 %v114
    %v148 = vunpack.c.l.b16 %v115
    %v149 = vunpack.c.l.b16 %v116
    %v150 = vunpack.c.l.b16 %v117
    %v151 = vunpack.c.l.b16 %v118
    %v152 = vunpack.c.l.b16 %v119
    %v153 = vunpack.c.l.b16 %v120
    %v154 = vpack.c.b16 %v139, %v138
    %v155 = vpack.c.b16 %v141, %v140
    %v156 = vpack.c.b16 %v143, %v142
    %v157 = vpack.c.b16 %v145, %v144
    %v158 = vpack.c.b16 %v147, %v146
    %v159 = vpack.c.b16 %v149, %v148
    %v160 = vpack.c.b16 %v151, %v150
    %v161 = vpack.c.b16 %v153, %v152
    %vm162 = vcmask 64512
    %v164 = vsel %vm162, %v154, 0
    %v167 = vsel %vm162, %v155, 0
    %v170 = vsel %vm162, %v156, 0
    %v173 = vsel %vm162, %v157, 0
    %v176 = vsel %vm162, %v158, 0
    %v179 = vsel %vm162, %v159, 0
    %v182 = vsel %vm162, %v160, 0
    %v185 = vsel %vm162, %v161, 0
    %vm187 = vcmask 1043456
    %v189 = vsel %vm187, %v121, 0
    %191 = vmatprep.subr.bf16.mxu0 0
    %192 = vmatpush1.bf16.msra.mxu0 0
    %193 = vmatprep.subr.bf16.mxu0 0
    %194 = vmatpush1.bf16.msra.mxu0 0
    %195 = vmatprep.subr.bf16.mxu0 0
    %196 = vmatpush1.bf16.msra.mxu0 0
    %197 = vmatprep.subr.bf16.mxu0 0
    %198 = vmatpush1.bf16.msra.mxu0 0
    %199 = vmatprep.subr.bf16.mxu0 0
    %200 = vmatpush1.bf16.msra.mxu0 0
    %201 = vmatprep.subr.bf16.mxu0 0
    %202 = vmatpush1.bf16.msra.mxu0 0
    %203 = vmatprep.subr.bf16.mxu0 0
    %204 = vmatpush1.bf16.msra.mxu0 0
    %205 = vmatprep.subr.bf16.mxu0 0
    %206 = vmatpush1.bf16.msra.mxu0 %v189
    %207 = vmatprep.subr.bf16.mxu0 0
    %208 = vmatpush2.bf16.msra.mxu0 0
    %209 = vmatprep.subr.bf16.mxu0 0
    %210 = vmatpush2.bf16.msra.mxu0 0
    %211 = vmatprep.subr.bf16.mxu0 0
    %212 = vmatpush2.bf16.msra.mxu0 0
    %213 = vmatprep.subr.bf16.mxu0 0
    %214 = vmatpush2.bf16.msra.mxu0 0
    %215 = vmatprep.subr.bf16.mxu0 0
    %216 = vmatpush2.bf16.msra.mxu0 0
    %217 = vmatprep.subr.bf16.mxu0 0
    %218 = vmatpush2.bf16.msra.mxu0 0
    %219 = vmatprep.subr.bf16.mxu0 0
    %220 = vmatpush2.bf16.msra.mxu0 0
    %221 = vmatprep.subr.bf16.mxu0 0
    %222 = vmatpush2.bf16.msra.mxu0 0
    %223 = vmatprep.mubr.bf16.mxu0 0
    %224 = vmatmul.mubr.bf16.gmra.mxu0 %v164
    %v225 = vpop.f32.mrf.mxu0
    %v226 = vadd.f32 0.0, %v225
    %v227 = vpop.f32.mrf.mxu0
    %v228 = vpop.f32.mrf.mxu0
    %v229 = vadd.f32 0.0, %v228
    %v230 = vpop.f32.mrf.mxu0
    %231 = vmatprep.mubr.bf16.mxu0 0
    %232 = vmatmul.mubr.bf16.gmra.mxu0 %v167
    %v233 = vpop.f32.mrf.mxu0
    %v234 = vadd.f32 0.0, %v233
    %v235 = vpop.f32.mrf.mxu0
    %v236 = vpop.f32.mrf.mxu0
    %v237 = vadd.f32 0.0, %v236
    %v238 = vpop.f32.mrf.mxu0
    %239 = vmatprep.mubr.bf16.mxu0 0
    %240 = vmatmul.mubr.bf16.gmra.mxu0 %v170
    %v241 = vpop.f32.mrf.mxu0
    %v242 = vadd.f32 0.0, %v241
    %v243 = vpop.f32.mrf.mxu0
    %v244 = vpop.f32.mrf.mxu0
    %v245 = vadd.f32 0.0, %v244
    %v246 = vpop.f32.mrf.mxu0
    %247 = vmatprep.mubr.bf16.mxu0 0
    %248 = vmatmul.mubr.bf16.gmra.mxu0 %v173
    %v249 = vpop.f32.mrf.mxu0
    %v250 = vadd.f32 0.0, %v249
    %v251 = vpop.f32.mrf.mxu0
    %v252 = vpop.f32.mrf.mxu0
    %v253 = vadd.f32 0.0, %v252
    %v254 = vpop.f32.mrf.mxu0
    %255 = vmatprep.mubr.bf16.mxu0 0
    %256 = vmatmul.mubr.bf16.gmra.mxu0 %v176
    %v257 = vpop.f32.mrf.mxu0
    %v258 = vadd.f32 0.0, %v257
    %v259 = vpop.f32.mrf.mxu0
    %v260 = vpop.f32.mrf.mxu0
    %v261 = vadd.f32 0.0, %v260
    %v262 = vpop.f32.mrf.mxu0
    %263 = vmatprep.mubr.bf16.mxu0 0
    %264 = vmatmul.mubr.bf16.gmra.mxu0 %v179
    %v265 = vpop.f32.mrf.mxu0
    %v266 = vadd.f32 0.0, %v265
    %v267 = vpop.f32.mrf.mxu0
    %v268 = vpop.f32.mrf.mxu0
    %v269 = vadd.f32 0.0, %v268
    %v270 = vpop.f32.mrf.mxu0
    %271 = vmatprep.mubr.bf16.mxu0 0
    %272 = vmatmul.mubr.bf16.gmra.mxu0 %v182
    %v273 = vpop.f32.mrf.mxu0
    %v274 = vadd.f32 0.0, %v273
    %v275 = vpop.f32.mrf.mxu0
    %v276 = vpop.f32.mrf.mxu0
    %v277 = vadd.f32 0.0, %v276
    %v278 = vpop.f32.mrf.mxu0
    %279 = vmatprep.mubr.bf16.mxu0 0
    %280 = vmatmul.mubr.bf16.gmra.mxu0 %v185
    %v281 = vpop.f32.mrf.mxu0
    %v282 = vadd.f32 0.0, %v281
    %v283 = vpop.f32.mrf.mxu0
    %v284 = vpop.f32.mrf.mxu0
    %v285 = vadd.f32 0.0, %v284
    %v286 = vpop.f32.mrf.mxu0
    %287 = vdwg.mxu0
    %v288 = vld [vmem:[#allocation7] sm:$0x1]
    %v290 = vlaneseq
    %v291 = vshrl.u32 %v290, 7
    %v292 = vsub.s32 0, %v291
    %v293 = vrot.slane %v288, %v292
    %v295 = vadd.f32 %v226, %v293
    %v296 = vadd.f32 %v229, %v293
    %v297 = vadd.f32 %v234, %v293
    %v298 = vadd.f32 %v237, %v293
    %v299 = vadd.f32 %v242, %v293
    %v300 = vadd.f32 %v245, %v293
    %v301 = vadd.f32 %v250, %v293
    %v302 = vadd.f32 %v253, %v293
    %v303 = vadd.f32 %v258, %v293
    %v304 = vadd.f32 %v261, %v293
    %v305 = vadd.f32 %v266, %v293
    %v306 = vadd.f32 %v269, %v293
    %v307 = vadd.f32 %v274, %v293
    %v308 = vadd.f32 %v277, %v293
    %v309 = vadd.f32 %v282, %v293
    %v310 = vadd.f32 %v285, %v293
    %311 = vst [vmem:[#allocation2] sm:$0xff] %v295
    %312 = vst [vmem:[#allocation2 + $0x8] sm:$0xff] %v296
    %313 = vst [vmem:[#allocation2 + $0x10] sm:$0xff] %v297
    %314 = vst [vmem:[#allocation2 + $0x18] sm:$0xff] %v298
    %315 = vst [vmem:[#allocation2 + $0x20] sm:$0xff] %v299
    %316 = vst [vmem:[#allocation2 + $0x28] sm:$0xff] %v300
    %317 = vst [vmem:[#allocation2 + $0x30] sm:$0xff] %v301
    %318 = vst [vmem:[#allocation2 + $0x38] sm:$0xff] %v302
    %319 = vst [vmem:[#allocation2 + $0x40] sm:$0xff] %v303
    %320 = vst [vmem:[#allocation2 + $0x48] sm:$0xff] %v304
    %321 = vst [vmem:[#allocation2 + $0x50] sm:$0xff] %v305
    %322 = vst [vmem:[#allocation2 + $0x58] sm:$0xff] %v306
    %323 = vst [vmem:[#allocation2 + $0x60] sm:$0xff] %v307
    %324 = vst [vmem:[#allocation2 + $0x68] sm:$0xff] %v308
    %325 = vst [vmem:[#allocation2 + $0x70] sm:$0xff] %v309
    %326 = vst [vmem:[#allocation2 + $0x78] sm:$0xff] %v310
    %v327 = vld [vmem:[%s2] sm:$0xf]
    %v328 = vld [vmem:[%s2 + $0x4] sm:$0xf]
    %v329 = vld [vmem:[%s2 + $0x8] sm:$0xf]
    %v330 = vld [vmem:[%s2 + $0xc] sm:$0xf]
    %v331 = vld [vmem:[#allocation2] sm:$0xff]
    %v332 = vxor.u32 %v331, 2147483648
    %v333 = vmul.f32 %v332, 1.442695
    %v334 = vpow.pop %v333
    %v335 = vadd.f32 %v334, 1.0
    %v336 = vrcp.pop %v335
    %v337 = vmul.f32 1.0, %v336
    %v338 = vtanh.pop %v331
    %v339 = vsel %vm104, %v338, %v337
    %v340 = vmul.f32 %v339, 0.0
    %342 = vrot.lane.b32.xlu0 %v339, 64
    %v343 = vpop.permute.xlu0 %342
    %v345 = vmul.f32 %v339, %v343
    %347 = vrot.lane.b32.xlu0 %v345, 32
    %v348 = vpop.permute.xlu0 %347
    %v350 = vadd.f32 %v340, %v348
    %v351 = vtanh.pop %v350
    %353 = vrot.lane.b32.xlu0 %v351, 64
    %v354 = vpop.permute.xlu0 %353
    %v356 = vmul.f32 %v339, %v354
    %358 = vrot.lane.b32.xlu0 %v356, 32
    %v359 = vpop.permute.xlu0 %358
    %vm361 = vcmask 261120
    %362 = vst.msk [vmem:[#allocation3] sm:$0xff] %vm361, %v359
    %s363 = scalar_lea.vmem [#allocation2], 8
    %v364 = vld [vmem:[%s363] sm:$0xff]
    %v365 = vpack.c.bf16 %v356, %v356
    %367 = vrot.lane.b32.xlu0 %v365, 32
    %v368 = vpop.permute.xlu0 %367
    %v373 = vunpack.c.l.b16 %v327
    %v374 = vunpack.c.l.b16 %v328
    %v375 = vunpack.c.l.b16 %v329
    %v376 = vunpack.c.l.b16 %v330
    %v377 = vpack.c.b16 %v374, %v373
    %v378 = vpack.c.b16 %v376, %v375
    %v382 = vsel %vm361, %v368, 0
    %384 = vmatprep.subr.bf16.mxu0 0
    %385 = vmatpush1.bf16.msra.mxu0 0
    %386 = vmatprep.subr.bf16.mxu0 0
    %387 = vmatpush1.bf16.msra.mxu0 0
    %388 = vmatprep.subr.bf16.mxu0 0
    %389 = vmatpush1.bf16.msra.mxu0 0
    %390 = vmatprep.subr.bf16.mxu0 0
    %391 = vmatpush1.bf16.msra.mxu0 0
    %392 = vmatprep.subr.bf16.mxu0 0
    %393 = vmatpush1.bf16.msra.mxu0 0
    %394 = vmatprep.subr.bf16.mxu0 0
    %395 = vmatpush1.bf16.msra.mxu0 0
    %396 = vmatprep.subr.bf16.mxu0 0
    %397 = vmatpush1.bf16.msra.mxu0 %v378
    %398 = vmatprep.subr.bf16.mxu0 0
    %399 = vmatpush1.bf16.msra.mxu0 %v377
    %400 = vmatprep.subr.bf16.mxu0 0
    %401 = vmatpush2.bf16.msra.mxu0 0
    %402 = vmatprep.subr.bf16.mxu0 0
    %403 = vmatpush2.bf16.msra.mxu0 0
    %404 = vmatprep.subr.bf16.mxu0 0
    %405 = vmatpush2.bf16.msra.mxu0 0
    %406 = vmatprep.subr.bf16.mxu0 0
    %407 = vmatpush2.bf16.msra.mxu0 0
    %408 = vmatprep.subr.bf16.mxu0 0
    %409 = vmatpush2.bf16.msra.mxu0 0
    %410 = vmatprep.subr.bf16.mxu0 0
    %411 = vmatpush2.bf16.msra.mxu0 0
    %412 = vmatprep.subr.bf16.mxu0 0
    %413 = vmatpush2.bf16.msra.mxu0 0
    %414 = vmatprep.subr.bf16.mxu0 0
    %415 = vmatpush2.bf16.msra.mxu0 0
    %416 = vmatprep.mubr.bf16.mxu0 0
    %417 = vmatmul.mubr.bf16.gmra.mxu0 %v382
    %v418 = vpop.f32.mrf.mxu0
    %v419 = vadd.f32 0.0, %v418
    %v420 = vpop.f32.mrf.mxu0
    %v421 = vpop.f32.mrf.mxu0
    %v422 = vpop.f32.mrf.mxu0
    %423 = vdwg.mxu0
    %v424 = vadd.f32 %v364, %v419
    %v425 = vxor.u32 %v424, 2147483648
    %v426 = vmul.f32 %v425, 1.442695
    %v427 = vpow.pop %v426
    %v428 = vadd.f32 %v427, 1.0
    %v429 = vrcp.pop %v428
    %v430 = vmul.f32 1.0, %v429
    %v431 = vtanh.pop %v424
    %v432 = vsel %vm104, %v431, %v430
    %v433 = vmul.f32 %v432, %v350
    %435 = vrot.lane.b32.xlu0 %v432, 64
    %v436 = vpop.permute.xlu0 %435
    %v438 = vmul.f32 %v432, %v436
    %440 = vrot.lane.b32.xlu0 %v438, 32
    %v441 = vpop.permute.xlu0 %440
    %v443 = vadd.f32 %v433, %v441
    %v444 = vtanh.pop %v443
    %446 = vrot.lane.b32.xlu0 %v444, 64
    %v447 = vpop.permute.xlu0 %446
    %v449 = vmul.f32 %v432, %v447
    %451 = vrot.lane.b32.xlu0 %v449, 32
    %v452 = vpop.permute.xlu0 %451
    %s454 = scalar_lea.vmem [#allocation3], 8
    %455 = vst.msk [vmem:[%s454] sm:$0xff] %vm361, %v452
    %s456 = scalar_lea.vmem [#allocation2], 16
    %v457 = vld [vmem:[%s456] sm:$0xff]
    %v458 = vpack.c.bf16 %v449, %v449
    %460 = vrot.lane.b32.xlu0 %v458, 32
    %v461 = vpop.permute.xlu0 %460
    %v463 = vsel %vm361, %v461, 0
    %465 = vmatprep.subr.bf16.mxu0 0
    %466 = vmatpush1.bf16.msra.mxu0 0
    %467 = vmatprep.subr.bf16.mxu0 0
    %468 = vmatpush1.bf16.msra.mxu0 0
    %469 = vmatprep.subr.bf16.mxu0 0
    %470 = vmatpush1.bf16.msra.mxu0 0
    %471 = vmatprep.subr.bf16.mxu0 0
    %472 = vmatpush1.bf16.msra.mxu0 0
    %473 = vmatprep.subr.bf16.mxu0 0
    %474 = vmatpush1.bf16.msra.mxu0 0
    %475 = vmatprep.subr.bf16.mxu0 0
    %476 = vmatpush1.bf16.msra.mxu0 0
    %477 = vmatprep.subr.bf16.mxu0 0
    %478 = vmatpush1.bf16.msra.mxu0 %v378
    %479 = vmatprep.subr.bf16.mxu0 0
    %480 = vmatpush1.bf16.msra.mxu0 %v377
    %481 = vmatprep.subr.bf16.mxu0 0
    %482 = vmatpush2.bf16.msra.mxu0 0
    %483 = vmatprep.subr.bf16.mxu0 0
    %484 = vmatpush2.bf16.msra.mxu0 0
    %485 = vmatprep.subr.bf16.mxu0 0
    %486 = vmatpush2.bf16.msra.mxu0 0
    %487 = vmatprep.subr.bf16.mxu0 0
    %488 = vmatpush2.bf16.msra.mxu0 0
    %489 = vmatprep.subr.bf16.mxu0 0
    %490 = vmatpush2.bf16.msra.mxu0 0
    %491 = vmatprep.subr.bf16.mxu0 0
    %492 = vmatpush2.bf16.msra.mxu0 0
    %493 = vmatprep.subr.bf16.mxu0 0
    %494 = vmatpush2.bf16.msra.mxu0 0
    %495 = vmatprep.subr.bf16.mxu0 0
    %496 = vmatpush2.bf16.msra.mxu0 0
    %497 = vmatprep.mubr.bf16.mxu0 0
    %498 = vmatmul.mubr.bf16.gmra.mxu0 %v463
    %v499 = vpop.f32.mrf.mxu0
    %v500 = vadd.f32 0.0, %v499
    %v501 = vpop.f32.mrf.mxu0
    %v502 = vpop.f32.mrf.mxu0
    %v503 = vpop.f32.mrf.mxu0
    %504 = vdwg.mxu0
    %v505 = vadd.f32 %v457, %v500
    %v506 = vxor.u32 %v505, 2147483648
    %v507 = vmul.f32 %v506, 1.442695
    %v508 = vpow.pop %v507
    %v509 = vadd.f32 %v508, 1.0
    %v510 = vrcp.pop %v509
    %v511 = vmul.f32 1.0, %v510
    %v512 = vtanh.pop %v505
    %v513 = vsel %vm104, %v512, %v511
    %v514 = vmul.f32 %v513, %v443
    %516 = vrot.lane.b32.xlu0 %v513, 64
    %v517 = vpop.permute.xlu0 %516
    %v519 = vmul.f32 %v513, %v517
    %521 = vrot.lane.b32.xlu0 %v519, 32
    %v522 = vpop.permute.xlu0 %521
    %v524 = vadd.f32 %v514, %v522
    %v525 = vtanh.pop %v524
    %527 = vrot.lane.b32.xlu0 %v525, 64
    %v528 = vpop.permute.xlu0 %527
    %v530 = vmul.f32 %v513, %v528
    %532 = vrot.lane.b32.xlu0 %v530, 32
    %v533 = vpop.permute.xlu0 %532
    %s535 = scalar_lea.vmem [#allocation3], 16
    %536 = vst.msk [vmem:[%s535] sm:$0xff] %vm361, %v533
    %s537 = scalar_lea.vmem [#allocation2], 24
    %v538 = vld [vmem:[%s537] sm:$0xff]
    %v539 = vpack.c.bf16 %v530, %v530
    %541 = vrot.lane.b32.xlu0 %v539, 32
    %v542 = vpop.permute.xlu0 %541
    %v544 = vsel %vm361, %v542, 0
    %546 = vmatprep.subr.bf16.mxu0 0
    %547 = vmatpush1.bf16.msra.mxu0 0
    %548 = vmatprep.subr.bf16.mxu0 0
    %549 = vmatpush1.bf16.msra.mxu0 0
    %550 = vmatprep.subr.bf16.mxu0 0
    %551 = vmatpush1.bf16.msra.mxu0 0
    %552 = vmatprep.subr.bf16.mxu0 0
    %553 = vmatpush1.bf16.msra.mxu0 0
    %554 = vmatprep.subr.bf16.mxu0 0
    %555 = vmatpush1.bf16.msra.mxu0 0
    %556 = vmatprep.subr.bf16.mxu0 0
    %557 = vmatpush1.bf16.msra.mxu0 0
    %558 = vmatprep.subr.bf16.mxu0 0
    %559 = vmatpush1.bf16.msra.mxu0 %v378
    %560 = vmatprep.subr.bf16.mxu0 0
    %561 = vmatpush1.bf16.msra.mxu0 %v377
    %562 = vmatprep.subr.bf16.mxu0 0
    %563 = vmatpush2.bf16.msra.mxu0 0
    %564 = vmatprep.subr.bf16.mxu0 0
    %565 = vmatpush2.bf16.msra.mxu0 0
    %566 = vmatprep.subr.bf16.mxu0 0
    %567 = vmatpush2.bf16.msra.mxu0 0
    %568 = vmatprep.subr.bf16.mxu0 0
    %569 = vmatpush2.bf16.msra.mxu0 0
    %570 = vmatprep.subr.bf16.mxu0 0
    %571 = vmatpush2.bf16.msra.mxu0 0
    %572 = vmatprep.subr.bf16.mxu0 0
    %573 = vmatpush2.bf16.msra.mxu0 0
    %574 = vmatprep.subr.bf16.mxu0 0
    %575 = vmatpush2.bf16.msra.mxu0 0
    %576 = vmatprep.subr.bf16.mxu0 0
    %577 = vmatpush2.bf16.msra.mxu0 0
    %578 = vmatprep.mubr.bf16.mxu0 0
    %579 = vmatmul.mubr.bf16.gmra.mxu0 %v544
    %v580 = vpop.f32.mrf.mxu0
    %v581 = vadd.f32 0.0, %v580
    %v582 = vpop.f32.mrf.mxu0
    %v583 = vpop.f32.mrf.mxu0
    %v584 = vpop.f32.mrf.mxu0
    %585 = vdwg.mxu0
    %v586 = vadd.f32 %v538, %v581
    %v587 = vxor.u32 %v586, 2147483648
    %v588 = vmul.f32 %v587, 1.442695
    %v589 = vpow.pop %v588
    %v590 = vadd.f32 %v589, 1.0
    %v591 = vrcp.pop %v590
    %v592 = vmul.f32 1.0, %v591
    %v593 = vtanh.pop %v586
    %v594 = vsel %vm104, %v593, %v592
    %v595 = vmul.f32 %v594, %v524
    %597 = vrot.lane.b32.xlu0 %v594, 64
    %v598 = vpop.permute.xlu0 %597
    %v600 = vmul.f32 %v594, %v598
    %602 = vrot.lane.b32.xlu0 %v600, 32
    %v603 = vpop.permute.xlu0 %602
    %v605 = vadd.f32 %v595, %v603
    %v606 = vtanh.pop %v605
    %608 = vrot.lane.b32.xlu0 %v606, 64
    %v609 = vpop.permute.xlu0 %608
    %v611 = vmul.f32 %v594, %v609
    %613 = vrot.lane.b32.xlu0 %v611, 32
    %v614 = vpop.permute.xlu0 %613
    %s616 = scalar_lea.vmem [#allocation3], 24
    %617 = vst.msk [vmem:[%s616] sm:$0xff] %vm361, %v614
    %s618 = scalar_lea.vmem [#allocation2], 32
    %v619 = vld [vmem:[%s618] sm:$0xff]
    %v620 = vpack.c.bf16 %v611, %v611
    %622 = vrot.lane.b32.xlu0 %v620, 32
    %v623 = vpop.permute.xlu0 %622
    %v625 = vsel %vm361, %v623, 0
    %627 = vmatprep.subr.bf16.mxu0 0
    %628 = vmatpush1.bf16.msra.mxu0 0
    %629 = vmatprep.subr.bf16.mxu0 0
    %630 = vmatpush1.bf16.msra.mxu0 0
    %631 = vmatprep.subr.bf16.mxu0 0
    %632 = vmatpush1.bf16.msra.mxu0 0
    %633 = vmatprep.subr.bf16.mxu0 0
    %634 = vmatpush1.bf16.msra.mxu0 0
    %635 = vmatprep.subr.bf16.mxu0 0
    %636 = vmatpush1.bf16.msra.mxu0 0
    %637 = vmatprep.subr.bf16.mxu0 0
    %638 = vmatpush1.bf16.msra.mxu0 0
    %639 = vmatprep.subr.bf16.mxu0 0
    %640 = vmatpush1.bf16.msra.mxu0 %v378
    %641 = vmatprep.subr.bf16.mxu0 0
    %642 = vmatpush1.bf16.msra.mxu0 %v377
    %643 = vmatprep.subr.bf16.mxu0 0
    %644 = vmatpush2.bf16.msra.mxu0 0
    %645 = vmatprep.subr.bf16.mxu0 0
    %646 = vmatpush2.bf16.msra.mxu0 0
    %647 = vmatprep.subr.bf16.mxu0 0
    %648 = vmatpush2.bf16.msra.mxu0 0
    %649 = vmatprep.subr.bf16.mxu0 0
    %650 = vmatpush2.bf16.msra.mxu0 0
    %651 = vmatprep.subr.bf16.mxu0 0
    %652 = vmatpush2.bf16.msra.mxu0 0
    %653 = vmatprep.subr.bf16.mxu0 0
    %654 = vmatpush2.bf16.msra.mxu0 0
    %655 = vmatprep.subr.bf16.mxu0 0
    %656 = vmatpush2.bf16.msra.mxu0 0
    %657 = vmatprep.subr.bf16.mxu0 0
    %658 = vmatpush2.bf16.msra.mxu0 0
    %659 = vmatprep.mubr.bf16.mxu0 0
    %660 = vmatmul.mubr.bf16.gmra.mxu0 %v625
    %v661 = vpop.f32.mrf.mxu0
    %v662 = vadd.f32 0.0, %v661
    %v663 = vpop.f32.mrf.mxu0
    %v664 = vpop.f32.mrf.mxu0
    %v665 = vpop.f32.mrf.mxu0
    %666 = vdwg.mxu0
    %v667 = vadd.f32 %v619, %v662
    %v668 = vxor.u32 %v667, 2147483648
    %v669 = vmul.f32 %v668, 1.442695
    %v670 = vpow.pop %v669
    %v671 = vadd.f32 %v670, 1.0
    %v672 = vrcp.pop %v671
    %v673 = vmul.f32 1.0, %v672
    %v674 = vtanh.pop %v667
    %v675 = vsel %vm104, %v674, %v673
    %v676 = vmul.f32 %v675, %v605
    %678 = vrot.lane.b32.xlu0 %v675, 64
    %v679 = vpop.permute.xlu0 %678
    %v681 = vmul.f32 %v675, %v679
    %683 = vrot.lane.b32.xlu0 %v681, 32
    %v684 = vpop.permute.xlu0 %683
    %v686 = vadd.f32 %v676, %v684
    %v687 = vtanh.pop %v686
    %689 = vrot.lane.b32.xlu0 %v687, 64
    %v690 = vpop.permute.xlu0 %689
    %v692 = vmul.f32 %v675, %v690
    %694 = vrot.lane.b32.xlu0 %v692, 32
    %v695 = vpop.permute.xlu0 %694
    %s697 = scalar_lea.vmem [#allocation3], 32
    %698 = vst.msk [vmem:[%s697] sm:$0xff] %vm361, %v695
    %s699 = scalar_lea.vmem [#allocation2], 40
    %v700 = vld [vmem:[%s699] sm:$0xff]
    %v701 = vpack.c.bf16 %v692, %v692
    %703 = vrot.lane.b32.xlu0 %v701, 32
    %v704 = vpop.permute.xlu0 %703
    %v706 = vsel %vm361, %v704, 0
    %708 = vmatprep.subr.bf16.mxu0 0
    %709 = vmatpush1.bf16.msra.mxu0 0
    %710 = vmatprep.subr.bf16.mxu0 0
    %711 = vmatpush1.bf16.msra.mxu0 0
    %712 = vmatprep.subr.bf16.mxu0 0
    %713 = vmatpush1.bf16.msra.mxu0 0
    %714 = vmatprep.subr.bf16.mxu0 0
    %715 = vmatpush1.bf16.msra.mxu0 0
    %716 = vmatprep.subr.bf16.mxu0 0
    %717 = vmatpush1.bf16.msra.mxu0 0
    %718 = vmatprep.subr.bf16.mxu0 0
    %719 = vmatpush1.bf16.msra.mxu0 0
    %720 = vmatprep.subr.bf16.mxu0 0
    %721 = vmatpush1.bf16.msra.mxu0 %v378
    %722 = vmatprep.subr.bf16.mxu0 0
    %723 = vmatpush1.bf16.msra.mxu0 %v377
    %724 = vmatprep.subr.bf16.mxu0 0
    %725 = vmatpush2.bf16.msra.mxu0 0
    %726 = vmatprep.subr.bf16.mxu0 0
    %727 = vmatpush2.bf16.msra.mxu0 0
    %728 = vmatprep.subr.bf16.mxu0 0
    %729 = vmatpush2.bf16.msra.mxu0 0
    %730 = vmatprep.subr.bf16.mxu0 0
    %731 = vmatpush2.bf16.msra.mxu0 0
    %732 = vmatprep.subr.bf16.mxu0 0
    %733 = vmatpush2.bf16.msra.mxu0 0
    %734 = vmatprep.subr.bf16.mxu0 0
    %735 = vmatpush2.bf16.msra.mxu0 0
    %736 = vmatprep.subr.bf16.mxu0 0
    %737 = vmatpush2.bf16.msra.mxu0 0
    %738 = vmatprep.subr.bf16.mxu0 0
    %739 = vmatpush2.bf16.msra.mxu0 0
    %740 = vmatprep.mubr.bf16.mxu0 0
    %741 = vmatmul.mubr.bf16.gmra.mxu0 %v706
    %v742 = vpop.f32.mrf.mxu0
    %v743 = vadd.f32 0.0, %v742
    %v744 = vpop.f32.mrf.mxu0
    %v745 = vpop.f32.mrf.mxu0
    %v746 = vpop.f32.mrf.mxu0
    %747 = vdwg.mxu0
    %v748 = vadd.f32 %v700, %v743
    %v749 = vxor.u32 %v748, 2147483648
    %v750 = vmul.f32 %v749, 1.442695
    %v751 = vpow.pop %v750
    %v752 = vadd.f32 %v751, 1.0
    %v753 = vrcp.pop %v752
    %v754 = vmul.f32 1.0, %v753
    %v755 = vtanh.pop %v748
    %v756 = vsel %vm104, %v755, %v754
    %v757 = vmul.f32 %v756, %v686
    %759 = vrot.lane.b32.xlu0 %v756, 64
    %v760 = vpop.permute.xlu0 %759
    %v762 = vmul.f32 %v756, %v760
    %764 = vrot.lane.b32.xlu0 %v762, 32
    %v765 = vpop.permute.xlu0 %764
    %v767 = vadd.f32 %v757, %v765
    %v768 = vtanh.pop %v767
    %770 = vrot.lane.b32.xlu0 %v768, 64
    %v771 = vpop.permute.xlu0 %770
    %v773 = vmul.f32 %v756, %v771
    %775 = vrot.lane.b32.xlu0 %v773, 32
    %v776 = vpop.permute.xlu0 %775
    %s778 = scalar_lea.vmem [#allocation3], 40
    %779 = vst.msk [vmem:[%s778] sm:$0xff] %vm361, %v776
    %s780 = scalar_lea.vmem [#allocation2], 48
    %v781 = vld [vmem:[%s780] sm:$0xff]
    %v782 = vpack.c.bf16 %v773, %v773
    %784 = vrot.lane.b32.xlu0 %v782, 32
    %v785 = vpop.permute.xlu0 %784
    %v787 = vsel %vm361, %v785, 0
    %789 = vmatprep.subr.bf16.mxu0 0
    %790 = vmatpush1.bf16.msra.mxu0 0
    %791 = vmatprep.subr.bf16.mxu0 0
    %792 = vmatpush1.bf16.msra.mxu0 0
    %793 = vmatprep.subr.bf16.mxu0 0
    %794 = vmatpush1.bf16.msra.mxu0 0
    %795 = vmatprep.subr.bf16.mxu0 0
    %796 = vmatpush1.bf16.msra.mxu0 0
    %797 = vmatprep.subr.bf16.mxu0 0
    %798 = vmatpush1.bf16.msra.mxu0 0
    %799 = vmatprep.subr.bf16.mxu0 0
    %800 = vmatpush1.bf16.msra.mxu0 0
    %801 = vmatprep.subr.bf16.mxu0 0
    %802 = vmatpush1.bf16.msra.mxu0 %v378
    %803 = vmatprep.subr.bf16.mxu0 0
    %804 = vmatpush1.bf16.msra.mxu0 %v377
    %805 = vmatprep.subr.bf16.mxu0 0
    %806 = vmatpush2.bf16.msra.mxu0 0
    %807 = vmatprep.subr.bf16.mxu0 0
    %808 = vmatpush2.bf16.msra.mxu0 0
    %809 = vmatprep.subr.bf16.mxu0 0
    %810 = vmatpush2.bf16.msra.mxu0 0
    %811 = vmatprep.subr.bf16.mxu0 0
    %812 = vmatpush2.bf16.msra.mxu0 0
    %813 = vmatprep.subr.bf16.mxu0 0
    %814 = vmatpush2.bf16.msra.mxu0 0
    %815 = vmatprep.subr.bf16.mxu0 0
    %816 = vmatpush2.bf16.msra.mxu0 0
    %817 = vmatprep.subr.bf16.mxu0 0
    %818 = vmatpush2.bf16.msra.mxu0 0
    %819 = vmatprep.subr.bf16.mxu0 0
    %820 = vmatpush2.bf16.msra.mxu0 0
    %821 = vmatprep.mubr.bf16.mxu0 0
    %822 = vmatmul.mubr.bf16.gmra.mxu0 %v787
    %v823 = vpop.f32.mrf.mxu0
    %v824 = vadd.f32 0.0, %v823
    %v825 = vpop.f32.mrf.mxu0
    %v826 = vpop.f32.mrf.mxu0
    %v827 = vpop.f32.mrf.mxu0
    %828 = vdwg.mxu0
    %v829 = vadd.f32 %v781, %v824
    %v830 = vxor.u32 %v829, 2147483648
    %v831 = vmul.f32 %v830, 1.442695
    %v832 = vpow.pop %v831
    %v833 = vadd.f32 %v832, 1.0
    %v834 = vrcp.pop %v833
    %v835 = vmul.f32 1.0, %v834
    %v836 = vtanh.pop %v829
    %v837 = vsel %vm104, %v836, %v835
    %v838 = vmul.f32 %v837, %v767
    %840 = vrot.lane.b32.xlu0 %v837, 64
    %v841 = vpop.permute.xlu0 %840
    %v843 = vmul.f32 %v837, %v841
    %845 = vrot.lane.b32.xlu0 %v843, 32
    %v846 = vpop.permute.xlu0 %845
    %v848 = vadd.f32 %v838, %v846
    %v849 = vtanh.pop %v848
    %851 = vrot.lane.b32.xlu0 %v849, 64
    %v852 = vpop.permute.xlu0 %851
    %v854 = vmul.f32 %v837, %v852
    %856 = vrot.lane.b32.xlu0 %v854, 32
    %v857 = vpop.permute.xlu0 %856
    %s859 = scalar_lea.vmem [#allocation3], 48
    %860 = vst.msk [vmem:[%s859] sm:$0xff] %vm361, %v857
    %s861 = scalar_lea.vmem [#allocation2], 56
    %v862 = vld [vmem:[%s861] sm:$0xff]
    %v863 = vpack.c.bf16 %v854, %v854
    %865 = vrot.lane.b32.xlu0 %v863, 32
    %v866 = vpop.permute.xlu0 %865
    %v868 = vsel %vm361, %v866, 0
    %870 = vmatprep.subr.bf16.mxu0 0
    %871 = vmatpush1.bf16.msra.mxu0 0
    %872 = vmatprep.subr.bf16.mxu0 0
    %873 = vmatpush1.bf16.msra.mxu0 0
    %874 = vmatprep.subr.bf16.mxu0 0
    %875 = vmatpush1.bf16.msra.mxu0 0
    %876 = vmatprep.subr.bf16.mxu0 0
    %877 = vmatpush1.bf16.msra.mxu0 0
    %878 = vmatprep.subr.bf16.mxu0 0
    %879 = vmatpush1.bf16.msra.mxu0 0
    %880 = vmatprep.subr.bf16.mxu0 0
    %881 = vmatpush1.bf16.msra.mxu0 0
    %882 = vmatprep.subr.bf16.mxu0 0
    %883 = vmatpush1.bf16.msra.mxu0 %v378
    %884 = vmatprep.subr.bf16.mxu0 0
    %885 = vmatpush1.bf16.msra.mxu0 %v377
    %886 = vmatprep.subr.bf16.mxu0 0
    %887 = vmatpush2.bf16.msra.mxu0 0
    %888 = vmatprep.subr.bf16.mxu0 0
    %889 = vmatpush2.bf16.msra.mxu0 0
    %890 = vmatprep.subr.bf16.mxu0 0
    %891 = vmatpush2.bf16.msra.mxu0 0
    %892 = vmatprep.subr.bf16.mxu0 0
    %893 = vmatpush2.bf16.msra.mxu0 0
    %894 = vmatprep.subr.bf16.mxu0 0
    %895 = vmatpush2.bf16.msra.mxu0 0
    %896 = vmatprep.subr.bf16.mxu0 0
    %897 = vmatpush2.bf16.msra.mxu0 0
    %898 = vmatprep.subr.bf16.mxu0 0
    %899 = vmatpush2.bf16.msra.mxu0 0
    %900 = vmatprep.subr.bf16.mxu0 0
    %901 = vmatpush2.bf16.msra.mxu0 0
    %902 = vmatprep.mubr.bf16.mxu0 0
    %903 = vmatmul.mubr.bf16.gmra.mxu0 %v868
    %v904 = vpop.f32.mrf.mxu0
    %v905 = vadd.f32 0.0, %v904
    %v906 = vpop.f32.mrf.mxu0
    %v907 = vpop.f32.mrf.mxu0
    %v908 = vpop.f32.mrf.mxu0
    %909 = vdwg.mxu0
    %v910 = vadd.f32 %v862, %v905
    %v911 = vxor.u32 %v910, 2147483648
    %v912 = vmul.f32 %v911, 1.442695
    %v913 = vpow.pop %v912
    %v914 = vadd.f32 %v913, 1.0
    %v915 = vrcp.pop %v914
    %v916 = vmul.f32 1.0, %v915
    %v917 = vtanh.pop %v910
    %v918 = vsel %vm104, %v917, %v916
    %v919 = vmul.f32 %v918, %v848
    %921 = vrot.lane.b32.xlu0 %v918, 64
    %v922 = vpop.permute.xlu0 %921
    %v924 = vmul.f32 %v918, %v922
    %926 = vrot.lane.b32.xlu0 %v924, 32
    %v927 = vpop.permute.xlu0 %926
    %v929 = vadd.f32 %v919, %v927
    %v930 = vtanh.pop %v929
    %932 = vrot.lane.b32.xlu0 %v930, 64
    %v933 = vpop.permute.xlu0 %932
    %v935 = vmul.f32 %v918, %v933
    %937 = vrot.lane.b32.xlu0 %v935, 32
    %v938 = vpop.permute.xlu0 %937
    %s940 = scalar_lea.vmem [#allocation3], 56
    %941 = vst.msk [vmem:[%s940] sm:$0xff] %vm361, %v938
    %s942 = scalar_lea.vmem [#allocation2], 64
    %v943 = vld [vmem:[%s942] sm:$0xff]
    %v944 = vpack.c.bf16 %v935, %v935
    %946 = vrot.lane.b32.xlu0 %v944, 32
    %v947 = vpop.permute.xlu0 %946
    %v949 = vsel %vm361, %v947, 0
    %951 = vmatprep.subr.bf16.mxu0 0
    %952 = vmatpush1.bf16.msra.mxu0 0
    %953 = vmatprep.subr.bf16.mxu0 0
    %954 = vmatpush1.bf16.msra.mxu0 0
    %955 = vmatprep.subr.bf16.mxu0 0
    %956 = vmatpush1.bf16.msra.mxu0 0
    %957 = vmatprep.subr.bf16.mxu0 0
    %958 = vmatpush1.bf16.msra.mxu0 0
    %959 = vmatprep.subr.bf16.mxu0 0
    %960 = vmatpush1.bf16.msra.mxu0 0
    %961 = vmatprep.subr.bf16.mxu0 0
    %962 = vmatpush1.bf16.msra.mxu0 0
    %963 = vmatprep.subr.bf16.mxu0 0
    %964 = vmatpush1.bf16.msra.mxu0 %v378
    %965 = vmatprep.subr.bf16.mxu0 0
    %966 = vmatpush1.bf16.msra.mxu0 %v377
    %967 = vmatprep.subr.bf16.mxu0 0
    %968 = vmatpush2.bf16.msra.mxu0 0
    %969 = vmatprep.subr.bf16.mxu0 0
    %970 = vmatpush2.bf16.msra.mxu0 0
    %971 = vmatprep.subr.bf16.mxu0 0
    %972 = vmatpush2.bf16.msra.mxu0 0
    %973 = vmatprep.subr.bf16.mxu0 0
    %974 = vmatpush2.bf16.msra.mxu0 0
    %975 = vmatprep.subr.bf16.mxu0 0
    %976 = vmatpush2.bf16.msra.mxu0 0
    %977 = vmatprep.subr.bf16.mxu0 0
    %978 = vmatpush2.bf16.msra.mxu0 0
    %979 = vmatprep.subr.bf16.mxu0 0
    %980 = vmatpush2.bf16.msra.mxu0 0
    %981 = vmatprep.subr.bf16.mxu0 0
    %982 = vmatpush2.bf16.msra.mxu0 0
    %983 = vmatprep.mubr.bf16.mxu0 0
    %984 = vmatmul.mubr.bf16.gmra.mxu0 %v949
    %v985 = vpop.f32.mrf.mxu0
    %v986 = vadd.f32 0.0, %v985
    %v987 = vpop.f32.mrf.mxu0
    %v988 = vpop.f32.mrf.mxu0
    %v989 = vpop.f32.mrf.mxu0
    %990 = vdwg.mxu0
    %v991 = vadd.f32 %v943, %v986
    %v992 = vxor.u32 %v991, 2147483648
    %v993 = vmul.f32 %v992, 1.442695
    %v994 = vpow.pop %v993
    %v995 = vadd.f32 %v994, 1.0
    %v996 = vrcp.pop %v995
    %v997 = vmul.f32 1.0, %v996
    %v998 = vtanh.pop %v991
    %v999 = vsel %vm104, %v998, %v997
    %v1000 = vmul.f32 %v999, %v929
    %1002 = vrot.lane.b32.xlu0 %v999, 64
    %v1003 = vpop.permute.xlu0 %1002
    %v1005 = vmul.f32 %v999, %v1003
    %1007 = vrot.lane.b32.xlu0 %v1005, 32
    %v1008 = vpop.permute.xlu0 %1007
    %v1010 = vadd.f32 %v1000, %v1008
    %v1011 = vtanh.pop %v1010
    %1013 = vrot.lane.b32.xlu0 %v1011, 64
    %v1014 = vpop.permute.xlu0 %1013
    %v1016 = vmul.f32 %v999, %v1014
    %1018 = vrot.lane.b32.xlu0 %v1016, 32
    %v1019 = vpop.permute.xlu0 %1018
    %s1021 = scalar_lea.vmem [#allocation3], 64
    %1022 = vst.msk [vmem:[%s1021] sm:$0xff] %vm361, %v1019
    %s1023 = scalar_lea.vmem [#allocation2], 72
    %v1024 = vld [vmem:[%s1023] sm:$0xff]
    %v1025 = vpack.c.bf16 %v1016, %v1016
    %1027 = vrot.lane.b32.xlu0 %v1025, 32
    %v1028 = vpop.permute.xlu0 %1027
    %v1030 = vsel %vm361, %v1028, 0
    %1032 = vmatprep.subr.bf16.mxu0 0
    %1033 = vmatpush1.bf16.msra.mxu0 0
    %1034 = vmatprep.subr.bf16.mxu0 0
    %1035 = vmatpush1.bf16.msra.mxu0 0
    %1036 = vmatprep.subr.bf16.mxu0 0
    %1037 = vmatpush1.bf16.msra.mxu0 0
    %1038 = vmatprep.subr.bf16.mxu0 0
    %1039 = vmatpush1.bf16.msra.mxu0 0
    %1040 = vmatprep.subr.bf16.mxu0 0
    %1041 = vmatpush1.bf16.msra.mxu0 0
    %1042 = vmatprep.subr.bf16.mxu0 0
    %1043 = vmatpush1.bf16.msra.mxu0 0
    %1044 = vmatprep.subr.bf16.mxu0 0
    %1045 = vmatpush1.bf16.msra.mxu0 %v378
    %1046 = vmatprep.subr.bf16.mxu0 0
    %1047 = vmatpush1.bf16.msra.mxu0 %v377
    %1048 = vmatprep.subr.bf16.mxu0 0
    %1049 = vmatpush2.bf16.msra.mxu0 0
    %1050 = vmatprep.subr.bf16.mxu0 0
    %1051 = vmatpush2.bf16.msra.mxu0 0
    %1052 = vmatprep.subr.bf16.mxu0 0
    %1053 = vmatpush2.bf16.msra.mxu0 0
    %1054 = vmatprep.subr.bf16.mxu0 0
    %1055 = vmatpush2.bf16.msra.mxu0 0
    %1056 = vmatprep.subr.bf16.mxu0 0
    %1057 = vmatpush2.bf16.msra.mxu0 0
    %1058 = vmatprep.subr.bf16.mxu0 0
    %1059 = vmatpush2.bf16.msra.mxu0 0
    %1060 = vmatprep.subr.bf16.mxu0 0
    %1061 = vmatpush2.bf16.msra.mxu0 0
    %1062 = vmatprep.subr.bf16.mxu0 0
    %1063 = vmatpush2.bf16.msra.mxu0 0
    %1064 = vmatprep.mubr.bf16.mxu0 0
    %1065 = vmatmul.mubr.bf16.gmra.mxu0 %v1030
    %v1066 = vpop.f32.mrf.mxu0
    %v1067 = vadd.f32 0.0, %v1066
    %v1068 = vpop.f32.mrf.mxu0
    %v1069 = vpop.f32.mrf.mxu0
    %v1070 = vpop.f32.mrf.mxu0
    %1071 = vdwg.mxu0
    %v1072 = vadd.f32 %v1024, %v1067
    %v1073 = vxor.u32 %v1072, 2147483648
    %v1074 = vmul.f32 %v1073, 1.442695
    %v1075 = vpow.pop %v1074
    %v1076 = vadd.f32 %v1075, 1.0
    %v1077 = vrcp.pop %v1076
    %v1078 = vmul.f32 1.0, %v1077
    %v1079 = vtanh.pop %v1072
    %v1080 = vsel %vm104, %v1079, %v1078
    %v1081 = vmul.f32 %v1080, %v1010
    %1083 = vrot.lane.b32.xlu0 %v1080, 64
    %v1084 = vpop.permute.xlu0 %1083
    %v1086 = vmul.f32 %v1080, %v1084
    %1088 = vrot.lane.b32.xlu0 %v1086, 32
    %v1089 = vpop.permute.xlu0 %1088
    %v1091 = vadd.f32 %v1081, %v1089
    %v1092 = vtanh.pop %v1091
    %1094 = vrot.lane.b32.xlu0 %v1092, 64
    %v1095 = vpop.permute.xlu0 %1094
    %v1097 = vmul.f32 %v1080, %v1095
    %1099 = vrot.lane.b32.xlu0 %v1097, 32
    %v1100 = vpop.permute.xlu0 %1099
    %s1102 = scalar_lea.vmem [#allocation3], 72
    %1103 = vst.msk [vmem:[%s1102] sm:$0xff] %vm361, %v1100
    %s1104 = scalar_lea.vmem [#allocation2], 80
    %v1105 = vld [vmem:[%s1104] sm:$0xff]
    %v1106 = vpack.c.bf16 %v1097, %v1097
    %1108 = vrot.lane.b32.xlu0 %v1106, 32
    %v1109 = vpop.permute.xlu0 %1108
    %v1111 = vsel %vm361, %v1109, 0
    %1113 = vmatprep.subr.bf16.mxu0 0
    %1114 = vmatpush1.bf16.msra.mxu0 0
    %1115 = vmatprep.subr.bf16.mxu0 0
    %1116 = vmatpush1.bf16.msra.mxu0 0
    %1117 = vmatprep.subr.bf16.mxu0 0
    %1118 = vmatpush1.bf16.msra.mxu0 0
    %1119 = vmatprep.subr.bf16.mxu0 0
    %1120 = vmatpush1.bf16.msra.mxu0 0
    %1121 = vmatprep.subr.bf16.mxu0 0
    %1122 = vmatpush1.bf16.msra.mxu0 0
    %1123 = vmatprep.subr.bf16.mxu0 0
    %1124 = vmatpush1.bf16.msra.mxu0 0
    %1125 = vmatprep.subr.bf16.mxu0 0
    %1126 = vmatpush1.bf16.msra.mxu0 %v378
    %1127 = vmatprep.subr.bf16.mxu0 0
    %1128 = vmatpush1.bf16.msra.mxu0 %v377
    %1129 = vmatprep.subr.bf16.mxu0 0
    %1130 = vmatpush2.bf16.msra.mxu0 0
    %1131 = vmatprep.subr.bf16.mxu0 0
    %1132 = vmatpush2.bf16.msra.mxu0 0
    %1133 = vmatprep.subr.bf16.mxu0 0
    %1134 = vmatpush2.bf16.msra.mxu0 0
    %1135 = vmatprep.subr.bf16.mxu0 0
    %1136 = vmatpush2.bf16.msra.mxu0 0
    %1137 = vmatprep.subr.bf16.mxu0 0
    %1138 = vmatpush2.bf16.msra.mxu0 0
    %1139 = vmatprep.subr.bf16.mxu0 0
    %1140 = vmatpush2.bf16.msra.mxu0 0
    %1141 = vmatprep.subr.bf16.mxu0 0
    %1142 = vmatpush2.bf16.msra.mxu0 0
    %1143 = vmatprep.subr.bf16.mxu0 0
    %1144 = vmatpush2.bf16.msra.mxu0 0
    %1145 = vmatprep.mubr.bf16.mxu0 0
    %1146 = vmatmul.mubr.bf16.gmra.mxu0 %v1111
    %v1147 = vpop.f32.mrf.mxu0
    %v1148 = vadd.f32 0.0, %v1147
    %v1149 = vpop.f32.mrf.mxu0
    %v1150 = vpop.f32.mrf.mxu0
    %v1151 = vpop.f32.mrf.mxu0
    %1152 = vdwg.mxu0
    %v1153 = vadd.f32 %v1105, %v1148
    %v1154 = vxor.u32 %v1153, 2147483648
    %v1155 = vmul.f32 %v1154, 1.442695
    %v1156 = vpow.pop %v1155
    %v1157 = vadd.f32 %v1156, 1.0
    %v1158 = vrcp.pop %v1157
    %v1159 = vmul.f32 1.0, %v1158
    %v1160 = vtanh.pop %v1153
    %v1161 = vsel %vm104, %v1160, %v1159
    %v1162 = vmul.f32 %v1161, %v1091
    %1164 = vrot.lane.b32.xlu0 %v1161, 64
    %v1165 = vpop.permute.xlu0 %1164
    %v1167 = vmul.f32 %v1161, %v1165
    %1169 = vrot.lane.b32.xlu0 %v1167, 32
    %v1170 = vpop.permute.xlu0 %1169
    %v1172 = vadd.f32 %v1162, %v1170
    %v1173 = vtanh.pop %v1172
    %1175 = vrot.lane.b32.xlu0 %v1173, 64
    %v1176 = vpop.permute.xlu0 %1175
    %v1178 = vmul.f32 %v1161, %v1176
    %1180 = vrot.lane.b32.xlu0 %v1178, 32
    %v1181 = vpop.permute.xlu0 %1180
    %s1183 = scalar_lea.vmem [#allocation3], 80
    %1184 = vst.msk [vmem:[%s1183] sm:$0xff] %vm361, %v1181
    %s1185 = scalar_lea.vmem [#allocation2], 88
    %v1186 = vld [vmem:[%s1185] sm:$0xff]
    %v1187 = vpack.c.bf16 %v1178, %v1178
    %1189 = vrot.lane.b32.xlu0 %v1187, 32
    %v1190 = vpop.permute.xlu0 %1189
    %v1192 = vsel %vm361, %v1190, 0
    %1194 = vmatprep.subr.bf16.mxu0 0
    %1195 = vmatpush1.bf16.msra.mxu0 0
    %1196 = vmatprep.subr.bf16.mxu0 0
    %1197 = vmatpush1.bf16.msra.mxu0 0
    %1198 = vmatprep.subr.bf16.mxu0 0
    %1199 = vmatpush1.bf16.msra.mxu0 0
    %1200 = vmatprep.subr.bf16.mxu0 0
    %1201 = vmatpush1.bf16.msra.mxu0 0
    %1202 = vmatprep.subr.bf16.mxu0 0
    %1203 = vmatpush1.bf16.msra.mxu0 0
    %1204 = vmatprep.subr.bf16.mxu0 0
    %1205 = vmatpush1.bf16.msra.mxu0 0
    %1206 = vmatprep.subr.bf16.mxu0 0
    %1207 = vmatpush1.bf16.msra.mxu0 %v378
    %1208 = vmatprep.subr.bf16.mxu0 0
    %1209 = vmatpush1.bf16.msra.mxu0 %v377
    %1210 = vmatprep.subr.bf16.mxu0 0
    %1211 = vmatpush2.bf16.msra.mxu0 0
    %1212 = vmatprep.subr.bf16.mxu0 0
    %1213 = vmatpush2.bf16.msra.mxu0 0
    %1214 = vmatprep.subr.bf16.mxu0 0
    %1215 = vmatpush2.bf16.msra.mxu0 0
    %1216 = vmatprep.subr.bf16.mxu0 0
    %1217 = vmatpush2.bf16.msra.mxu0 0
    %1218 = vmatprep.subr.bf16.mxu0 0
    %1219 = vmatpush2.bf16.msra.mxu0 0
    %1220 = vmatprep.subr.bf16.mxu0 0
    %1221 = vmatpush2.bf16.msra.mxu0 0
    %1222 = vmatprep.subr.bf16.mxu0 0
    %1223 = vmatpush2.bf16.msra.mxu0 0
    %1224 = vmatprep.subr.bf16.mxu0 0
    %1225 = vmatpush2.bf16.msra.mxu0 0
    %1226 = vmatprep.mubr.bf16.mxu0 0
    %1227 = vmatmul.mubr.bf16.gmra.mxu0 %v1192
    %v1228 = vpop.f32.mrf.mxu0
    %v1229 = vadd.f32 0.0, %v1228
    %v1230 = vpop.f32.mrf.mxu0
    %v1231 = vpop.f32.mrf.mxu0
    %v1232 = vpop.f32.mrf.mxu0
    %1233 = vdwg.mxu0
    %v1234 = vadd.f32 %v1186, %v1229
    %v1235 = vxor.u32 %v1234, 2147483648
    %v1236 = vmul.f32 %v1235, 1.442695
    %v1237 = vpow.pop %v1236
    %v1238 = vadd.f32 %v1237, 1.0
    %v1239 = vrcp.pop %v1238
    %v1240 = vmul.f32 1.0, %v1239
    %v1241 = vtanh.pop %v1234
    %v1242 = vsel %vm104, %v1241, %v1240
    %v1243 = vmul.f32 %v1242, %v1172
    %1245 = vrot.lane.b32.xlu0 %v1242, 64
    %v1246 = vpop.permute.xlu0 %1245
    %v1248 = vmul.f32 %v1242, %v1246
    %1250 = vrot.lane.b32.xlu0 %v1248, 32
    %v1251 = vpop.permute.xlu0 %1250
    %v1253 = vadd.f32 %v1243, %v1251
    %v1254 = vtanh.pop %v1253
    %1256 = vrot.lane.b32.xlu0 %v1254, 64
    %v1257 = vpop.permute.xlu0 %1256
    %v1259 = vmul.f32 %v1242, %v1257
    %1261 = vrot.lane.b32.xlu0 %v1259, 32
    %v1262 = vpop.permute.xlu0 %1261
    %s1264 = scalar_lea.vmem [#allocation3], 88
    %1265 = vst.msk [vmem:[%s1264] sm:$0xff] %vm361, %v1262
    %s1266 = scalar_lea.vmem [#allocation2], 96
    %v1267 = vld [vmem:[%s1266] sm:$0xff]
    %v1268 = vpack.c.bf16 %v1259, %v1259
    %1270 = vrot.lane.b32.xlu0 %v1268, 32
    %v1271 = vpop.permute.xlu0 %1270
    %v1273 = vsel %vm361, %v1271, 0
    %1275 = vmatprep.subr.bf16.mxu0 0
    %1276 = vmatpush1.bf16.msra.mxu0 0
    %1277 = vmatprep.subr.bf16.mxu0 0
    %1278 = vmatpush1.bf16.msra.mxu0 0
    %1279 = vmatprep.subr.bf16.mxu0 0
    %1280 = vmatpush1.bf16.msra.mxu0 0
    %1281 = vmatprep.subr.bf16.mxu0 0
    %1282 = vmatpush1.bf16.msra.mxu0 0
    %1283 = vmatprep.subr.bf16.mxu0 0
    %1284 = vmatpush1.bf16.msra.mxu0 0
    %1285 = vmatprep.subr.bf16.mxu0 0
    %1286 = vmatpush1.bf16.msra.mxu0 0
    %1287 = vmatprep.subr.bf16.mxu0 0
    %1288 = vmatpush1.bf16.msra.mxu0 %v378
    %1289 = vmatprep.subr.bf16.mxu0 0
    %1290 = vmatpush1.bf16.msra.mxu0 %v377
    %1291 = vmatprep.subr.bf16.mxu0 0
    %1292 = vmatpush2.bf16.msra.mxu0 0
    %1293 = vmatprep.subr.bf16.mxu0 0
    %1294 = vmatpush2.bf16.msra.mxu0 0
    %1295 = vmatprep.subr.bf16.mxu0 0
    %1296 = vmatpush2.bf16.msra.mxu0 0
    %1297 = vmatprep.subr.bf16.mxu0 0
    %1298 = vmatpush2.bf16.msra.mxu0 0
    %1299 = vmatprep.subr.bf16.mxu0 0
    %1300 = vmatpush2.bf16.msra.mxu0 0
    %1301 = vmatprep.subr.bf16.mxu0 0
    %1302 = vmatpush2.bf16.msra.mxu0 0
    %1303 = vmatprep.subr.bf16.mxu0 0
    %1304 = vmatpush2.bf16.msra.mxu0 0
    %1305 = vmatprep.subr.bf16.mxu0 0
    %1306 = vmatpush2.bf16.msra.mxu0 0
    %1307 = vmatprep.mubr.bf16.mxu0 0
    %1308 = vmatmul.mubr.bf16.gmra.mxu0 %v1273
    %v1309 = vpop.f32.mrf.mxu0
    %v1310 = vadd.f32 0.0, %v1309
    %v1311 = vpop.f32.mrf.mxu0
    %v1312 = vpop.f32.mrf.mxu0
    %v1313 = vpop.f32.mrf.mxu0
    %1314 = vdwg.mxu0
    %v1315 = vadd.f32 %v1267, %v1310
    %v1316 = vxor.u32 %v1315, 2147483648
    %v1317 = vmul.f32 %v1316, 1.442695
    %v1318 = vpow.pop %v1317
    %v1319 = vadd.f32 %v1318, 1.0
    %v1320 = vrcp.pop %v1319
    %v1321 = vmul.f32 1.0, %v1320
    %v1322 = vtanh.pop %v1315
    %v1323 = vsel %vm104, %v1322, %v1321
    %v1324 = vmul.f32 %v1323, %v1253
    %1326 = vrot.lane.b32.xlu0 %v1323, 64
    %v1327 = vpop.permute.xlu0 %1326
    %v1329 = vmul.f32 %v1323, %v1327
    %1331 = vrot.lane.b32.xlu0 %v1329, 32
    %v1332 = vpop.permute.xlu0 %1331
    %v1334 = vadd.f32 %v1324, %v1332
    %v1335 = vtanh.pop %v1334
    %1337 = vrot.lane.b32.xlu0 %v1335, 64
    %v1338 = vpop.permute.xlu0 %1337
    %v1340 = vmul.f32 %v1323, %v1338
    %1342 = vrot.lane.b32.xlu0 %v1340, 32
    %v1343 = vpop.permute.xlu0 %1342
    %s1345 = scalar_lea.vmem [#allocation3], 96
    %1346 = vst.msk [vmem:[%s1345] sm:$0xff] %vm361, %v1343
    %s1347 = scalar_lea.vmem [#allocation2], 104
    %v1348 = vld [vmem:[%s1347] sm:$0xff]
    %v1349 = vpack.c.bf16 %v1340, %v1340
    %1351 = vrot.lane.b32.xlu0 %v1349, 32
    %v1352 = vpop.permute.xlu0 %1351
    %v1354 = vsel %vm361, %v1352, 0
    %1356 = vmatprep.subr.bf16.mxu0 0
    %1357 = vmatpush1.bf16.msra.mxu0 0
    %1358 = vmatprep.subr.bf16.mxu0 0
    %1359 = vmatpush1.bf16.msra.mxu0 0
    %1360 = vmatprep.subr.bf16.mxu0 0
    %1361 = vmatpush1.bf16.msra.mxu0 0
    %1362 = vmatprep.subr.bf16.mxu0 0
    %1363 = vmatpush1.bf16.msra.mxu0 0
    %1364 = vmatprep.subr.bf16.mxu0 0
    %1365 = vmatpush1.bf16.msra.mxu0 0
    %1366 = vmatprep.subr.bf16.mxu0 0
    %1367 = vmatpush1.bf16.msra.mxu0 0
    %1368 = vmatprep.subr.bf16.mxu0 0
    %1369 = vmatpush1.bf16.msra.mxu0 %v378
    %1370 = vmatprep.subr.bf16.mxu0 0
    %1371 = vmatpush1.bf16.msra.mxu0 %v377
    %1372 = vmatprep.subr.bf16.mxu0 0
    %1373 = vmatpush2.bf16.msra.mxu0 0
    %1374 = vmatprep.subr.bf16.mxu0 0
    %1375 = vmatpush2.bf16.msra.mxu0 0
    %1376 = vmatprep.subr.bf16.mxu0 0
    %1377 = vmatpush2.bf16.msra.mxu0 0
    %1378 = vmatprep.subr.bf16.mxu0 0
    %1379 = vmatpush2.bf16.msra.mxu0 0
    %1380 = vmatprep.subr.bf16.mxu0 0
    %1381 = vmatpush2.bf16.msra.mxu0 0
    %1382 = vmatprep.subr.bf16.mxu0 0
    %1383 = vmatpush2.bf16.msra.mxu0 0
    %1384 = vmatprep.subr.bf16.mxu0 0
    %1385 = vmatpush2.bf16.msra.mxu0 0
    %1386 = vmatprep.subr.bf16.mxu0 0
    %1387 = vmatpush2.bf16.msra.mxu0 0
    %1388 = vmatprep.mubr.bf16.mxu0 0
    %1389 = vmatmul.mubr.bf16.gmra.mxu0 %v1354
    %v1390 = vpop.f32.mrf.mxu0
    %v1391 = vadd.f32 0.0, %v1390
    %v1392 = vpop.f32.mrf.mxu0
    %v1393 = vpop.f32.mrf.mxu0
    %v1394 = vpop.f32.mrf.mxu0
    %1395 = vdwg.mxu0
    %v1396 = vadd.f32 %v1348, %v1391
    %v1397 = vxor.u32 %v1396, 2147483648
    %v1398 = vmul.f32 %v1397, 1.442695
    %v1399 = vpow.pop %v1398
    %v1400 = vadd.f32 %v1399, 1.0
    %v1401 = vrcp.pop %v1400
    %v1402 = vmul.f32 1.0, %v1401
    %v1403 = vtanh.pop %v1396
    %v1404 = vsel %vm104, %v1403, %v1402
    %v1405 = vmul.f32 %v1404, %v1334
    %1407 = vrot.lane.b32.xlu0 %v1404, 64
    %v1408 = vpop.permute.xlu0 %1407
    %v1410 = vmul.f32 %v1404, %v1408
    %1412 = vrot.lane.b32.xlu0 %v1410, 32
    %v1413 = vpop.permute.xlu0 %1412
    %v1415 = vadd.f32 %v1405, %v1413
    %v1416 = vtanh.pop %v1415
    %1418 = vrot.lane.b32.xlu0 %v1416, 64
    %v1419 = vpop.permute.xlu0 %1418
    %v1421 = vmul.f32 %v1404, %v1419
    %1423 = vrot.lane.b32.xlu0 %v1421, 32
    %v1424 = vpop.permute.xlu0 %1423
    %s1426 = scalar_lea.vmem [#allocation3], 104
    %1427 = vst.msk [vmem:[%s1426] sm:$0xff] %vm361, %v1424
    %s1428 = scalar_lea.vmem [#allocation2], 112
    %v1429 = vld [vmem:[%s1428] sm:$0xff]
    %v1430 = vpack.c.bf16 %v1421, %v1421
    %1432 = vrot.lane.b32.xlu0 %v1430, 32
    %v1433 = vpop.permute.xlu0 %1432
    %v1435 = vsel %vm361, %v1433, 0
    %1437 = vmatprep.subr.bf16.mxu0 0
    %1438 = vmatpush1.bf16.msra.mxu0 0
    %1439 = vmatprep.subr.bf16.mxu0 0
    %1440 = vmatpush1.bf16.msra.mxu0 0
    %1441 = vmatprep.subr.bf16.mxu0 0
    %1442 = vmatpush1.bf16.msra.mxu0 0
    %1443 = vmatprep.subr.bf16.mxu0 0
    %1444 = vmatpush1.bf16.msra.mxu0 0
    %1445 = vmatprep.subr.bf16.mxu0 0
    %1446 = vmatpush1.bf16.msra.mxu0 0
    %1447 = vmatprep.subr.bf16.mxu0 0
    %1448 = vmatpush1.bf16.msra.mxu0 0
    %1449 = vmatprep.subr.bf16.mxu0 0
    %1450 = vmatpush1.bf16.msra.mxu0 %v378
    %1451 = vmatprep.subr.bf16.mxu0 0
    %1452 = vmatpush1.bf16.msra.mxu0 %v377
    %1453 = vmatprep.subr.bf16.mxu0 0
    %1454 = vmatpush2.bf16.msra.mxu0 0
    %1455 = vmatprep.subr.bf16.mxu0 0
    %1456 = vmatpush2.bf16.msra.mxu0 0
    %1457 = vmatprep.subr.bf16.mxu0 0
    %1458 = vmatpush2.bf16.msra.mxu0 0
    %1459 = vmatprep.subr.bf16.mxu0 0
    %1460 = vmatpush2.bf16.msra.mxu0 0
    %1461 = vmatprep.subr.bf16.mxu0 0
    %1462 = vmatpush2.bf16.msra.mxu0 0
    %1463 = vmatprep.subr.bf16.mxu0 0
    %1464 = vmatpush2.bf16.msra.mxu0 0
    %1465 = vmatprep.subr.bf16.mxu0 0
    %1466 = vmatpush2.bf16.msra.mxu0 0
    %1467 = vmatprep.subr.bf16.mxu0 0
    %1468 = vmatpush2.bf16.msra.mxu0 0
    %1469 = vmatprep.mubr.bf16.mxu0 0
    %1470 = vmatmul.mubr.bf16.gmra.mxu0 %v1435
    %v1471 = vpop.f32.mrf.mxu0
    %v1472 = vadd.f32 0.0, %v1471
    %v1473 = vpop.f32.mrf.mxu0
    %v1474 = vpop.f32.mrf.mxu0
    %v1475 = vpop.f32.mrf.mxu0
    %1476 = vdwg.mxu0
    %v1477 = vadd.f32 %v1429, %v1472
    %v1478 = vxor.u32 %v1477, 2147483648
    %v1479 = vmul.f32 %v1478, 1.442695
    %v1480 = vpow.pop %v1479
    %v1481 = vadd.f32 %v1480, 1.0
    %v1482 = vrcp.pop %v1481
    %v1483 = vmul.f32 1.0, %v1482
    %v1484 = vtanh.pop %v1477
    %v1485 = vsel %vm104, %v1484, %v1483
    %v1486 = vmul.f32 %v1485, %v1415
    %1488 = vrot.lane.b32.xlu0 %v1485, 64
    %v1489 = vpop.permute.xlu0 %1488
    %v1491 = vmul.f32 %v1485, %v1489
    %1493 = vrot.lane.b32.xlu0 %v1491, 32
    %v1494 = vpop.permute.xlu0 %1493
    %v1496 = vadd.f32 %v1486, %v1494
    %v1497 = vtanh.pop %v1496
    %1499 = vrot.lane.b32.xlu0 %v1497, 64
    %v1500 = vpop.permute.xlu0 %1499
    %v1502 = vmul.f32 %v1485, %v1500
    %1504 = vrot.lane.b32.xlu0 %v1502, 32
    %v1505 = vpop.permute.xlu0 %1504
    %s1507 = scalar_lea.vmem [#allocation3], 112
    %1508 = vst.msk [vmem:[%s1507] sm:$0xff] %vm361, %v1505
    %s1509 = scalar_lea.vmem [#allocation2], 120
    %v1510 = vld [vmem:[%s1509] sm:$0xff]
    %v1511 = vpack.c.bf16 %v1502, %v1502
    %1513 = vrot.lane.b32.xlu0 %v1511, 32
    %v1514 = vpop.permute.xlu0 %1513
    %v1516 = vsel %vm361, %v1514, 0
    %1518 = vmatprep.subr.bf16.mxu0 0
    %1519 = vmatpush1.bf16.msra.mxu0 0
    %1520 = vmatprep.subr.bf16.mxu0 0
    %1521 = vmatpush1.bf16.msra.mxu0 0
    %1522 = vmatprep.subr.bf16.mxu0 0
    %1523 = vmatpush1.bf16.msra.mxu0 0
    %1524 = vmatprep.subr.bf16.mxu0 0
    %1525 = vmatpush1.bf16.msra.mxu0 0
    %1526 = vmatprep.subr.bf16.mxu0 0
    %1527 = vmatpush1.bf16.msra.mxu0 0
    %1528 = vmatprep.subr.bf16.mxu0 0
    %1529 = vmatpush1.bf16.msra.mxu0 0
    %1530 = vmatprep.subr.bf16.mxu0 0
    %1531 = vmatpush1.bf16.msra.mxu0 %v378
    %1532 = vmatprep.subr.bf16.mxu0 0
    %1533 = vmatpush1.bf16.msra.mxu0 %v377
    %1534 = vmatprep.subr.bf16.mxu0 0
    %1535 = vmatpush2.bf16.msra.mxu0 0
    %1536 = vmatprep.subr.bf16.mxu0 0
    %1537 = vmatpush2.bf16.msra.mxu0 0
    %1538 = vmatprep.subr.bf16.mxu0 0
    %1539 = vmatpush2.bf16.msra.mxu0 0
    %1540 = vmatprep.subr.bf16.mxu0 0
    %1541 = vmatpush2.bf16.msra.mxu0 0
    %1542 = vmatprep.subr.bf16.mxu0 0
    %1543 = vmatpush2.bf16.msra.mxu0 0
    %1544 = vmatprep.subr.bf16.mxu0 0
    %1545 = vmatpush2.bf16.msra.mxu0 0
    %1546 = vmatprep.subr.bf16.mxu0 0
    %1547 = vmatpush2.bf16.msra.mxu0 0
    %1548 = vmatprep.subr.bf16.mxu0 0
    %1549 = vmatpush2.bf16.msra.mxu0 0
    %1550 = vmatprep.mubr.bf16.mxu0 0
    %1551 = vmatmul.mubr.bf16.gmra.mxu0 %v1516
    %v1552 = vpop.f32.mrf.mxu0
    %v1553 = vadd.f32 0.0, %v1552
    %v1554 = vpop.f32.mrf.mxu0
    %v1555 = vpop.f32.mrf.mxu0
    %v1556 = vpop.f32.mrf.mxu0
    %1557 = vdwg.mxu0
    %v1558 = vadd.f32 %v1510, %v1553
    %v1559 = vxor.u32 %v1558, 2147483648
    %v1560 = vmul.f32 %v1559, 1.442695
    %v1561 = vpow.pop %v1560
    %v1562 = vadd.f32 %v1561, 1.0
    %v1563 = vrcp.pop %v1562
    %v1564 = vmul.f32 1.0, %v1563
    %v1565 = vtanh.pop %v1558
    %v1566 = vsel %vm104, %v1565, %v1564
    %v1567 = vmul.f32 %v1566, %v1496
    %1569 = vrot.lane.b32.xlu0 %v1566, 64
    %v1570 = vpop.permute.xlu0 %1569
    %v1572 = vmul.f32 %v1566, %v1570
    %1574 = vrot.lane.b32.xlu0 %v1572, 32
    %v1575 = vpop.permute.xlu0 %1574
    %v1577 = vadd.f32 %v1567, %v1575
    %v1578 = vtanh.pop %v1577
    %1580 = vrot.lane.b32.xlu0 %v1578, 64
    %v1581 = vpop.permute.xlu0 %1580
    %v1583 = vmul.f32 %v1566, %v1581
    %1585 = vrot.lane.b32.xlu0 %v1583, 32
    %v1586 = vpop.permute.xlu0 %1585
    %s1588 = scalar_lea.vmem [#allocation3], 120
    %1589 = vst.msk [vmem:[%s1588] sm:$0xff] %vm361, %v1586
    %v1590 = vld [vmem:[#allocation3] sm:$0xff]
    %v1591 = vld [vmem:[#allocation3 + $0x8] sm:$0xff]
    %v1592 = vld [vmem:[#allocation3 + $0x10] sm:$0xff]
    %v1593 = vld [vmem:[#allocation3 + $0x18] sm:$0xff]
    %v1594 = vld [vmem:[#allocation3 + $0x20] sm:$0xff]
    %v1595 = vld [vmem:[#allocation3 + $0x28] sm:$0xff]
    %v1596 = vld [vmem:[#allocation3 + $0x30] sm:$0xff]
    %v1597 = vld [vmem:[#allocation3 + $0x38] sm:$0xff]
    %v1598 = vld [vmem:[#allocation3 + $0x40] sm:$0xff]
    %v1599 = vld [vmem:[#allocation3 + $0x48] sm:$0xff]
    %v1600 = vld [vmem:[#allocation3 + $0x50] sm:$0xff]
    %v1601 = vld [vmem:[#allocation3 + $0x58] sm:$0xff]
    %v1602 = vld [vmem:[#allocation3 + $0x60] sm:$0xff]
    %v1603 = vld [vmem:[#allocation3 + $0x68] sm:$0xff]
    %v1604 = vld [vmem:[#allocation3 + $0x70] sm:$0xff]
    %v1605 = vld [vmem:[#allocation3 + $0x78] sm:$0xff]
    %v1606 = vpack.c.bf16 %v1590, %v1590
    %v1607 = vpack.c.bf16 %v1591, %v1591
    %v1608 = vpack.c.bf16 %v1592, %v1592
    %v1609 = vpack.c.bf16 %v1593, %v1593
    %v1610 = vpack.c.bf16 %v1594, %v1594
    %v1611 = vpack.c.bf16 %v1595, %v1595
    %v1612 = vpack.c.bf16 %v1596, %v1596
    %v1613 = vpack.c.bf16 %v1597, %v1597
    %v1614 = vpack.c.bf16 %v1598, %v1598
    %v1615 = vpack.c.bf16 %v1599, %v1599
    %v1616 = vpack.c.bf16 %v1600, %v1600
    %v1617 = vpack.c.bf16 %v1601, %v1601
    %v1618 = vpack.c.bf16 %v1602, %v1602
    %v1619 = vpack.c.bf16 %v1603, %v1603
    %v1620 = vpack.c.bf16 %v1604, %v1604
    %v1621 = vpack.c.bf16 %v1605, %v1605
    %v1622 = vld [vmem:[%s4] sm:$0xf]
    %v1623 = vld [vmem:[%s4 + $0x4] sm:$0xf]
    %v1624 = vld [vmem:[%s4 + $0x8] sm:$0xf]
    %v1625 = vld [vmem:[%s4 + $0xc] sm:$0xf]
    %v1642 = vunpack.c.l.b16 %v1606
    %v1643 = vunpack.c.l.b16 %v1607
    %v1644 = vunpack.c.l.b16 %v1608
    %v1645 = vunpack.c.l.b16 %v1609
    %v1646 = vunpack.c.l.b16 %v1610
    %v1647 = vunpack.c.l.b16 %v1611
    %v1648 = vunpack.c.l.b16 %v1612
    %v1649 = vunpack.c.l.b16 %v1613
    %v1650 = vunpack.c.l.b16 %v1614
    %v1651 = vunpack.c.l.b16 %v1615
    %v1652 = vunpack.c.l.b16 %v1616
    %v1653 = vunpack.c.l.b16 %v1617
    %v1654 = vunpack.c.l.b16 %v1618
    %v1655 = vunpack.c.l.b16 %v1619
    %v1656 = vunpack.c.l.b16 %v1620
    %v1657 = vunpack.c.l.b16 %v1621
    %v1658 = vpack.c.b16 %v1643, %v1642
    %v1659 = vpack.c.b16 %v1645, %v1644
    %v1660 = vpack.c.b16 %v1647, %v1646
    %v1661 = vpack.c.b16 %v1649, %v1648
    %v1662 = vpack.c.b16 %v1651, %v1650
    %v1663 = vpack.c.b16 %v1653, %v1652
    %v1664 = vpack.c.b16 %v1655, %v1654
    %v1665 = vpack.c.b16 %v1657, %v1656
    %v1670 = vunpack.c.l.b16 %v1622
    %v1671 = vunpack.c.l.b16 %v1623
    %v1672 = vunpack.c.l.b16 %v1624
    %v1673 = vunpack.c.l.b16 %v1625
    %v1674 = vpack.c.b16 %v1671, %v1670
    %v1675 = vpack.c.b16 %v1673, %v1672
    %v1679 = vsel %vm361, %v1658, 0
    %v1682 = vsel %vm361, %v1659, 0
    %v1685 = vsel %vm361, %v1660, 0
    %v1688 = vsel %vm361, %v1661, 0
    %v1691 = vsel %vm361, %v1662, 0
    %v1694 = vsel %vm361, %v1663, 0
    %v1697 = vsel %vm361, %v1664, 0
    %v1700 = vsel %vm361, %v1665, 0
    %1702 = vmatprep.subr.bf16.mxu0 0
    %1703 = vmatpush1.bf16.msra.mxu0 0
    %1704 = vmatprep.subr.bf16.mxu0 0
    %1705 = vmatpush1.bf16.msra.mxu0 0
    %1706 = vmatprep.subr.bf16.mxu0 0
    %1707 = vmatpush1.bf16.msra.mxu0 0
    %1708 = vmatprep.subr.bf16.mxu0 0
    %1709 = vmatpush1.bf16.msra.mxu0 0
    %1710 = vmatprep.subr.bf16.mxu0 0
    %1711 = vmatpush1.bf16.msra.mxu0 0
    %1712 = vmatprep.subr.bf16.mxu0 0
    %1713 = vmatpush1.bf16.msra.mxu0 0
    %1714 = vmatprep.subr.bf16.mxu0 0
    %1715 = vmatpush1.bf16.msra.mxu0 %v1675
    %1716 = vmatprep.subr.bf16.mxu0 0
    %1717 = vmatpush1.bf16.msra.mxu0 %v1674
    %1718 = vmatprep.subr.bf16.mxu0 0
    %1719 = vmatpush2.bf16.msra.mxu0 0
    %1720 = vmatprep.subr.bf16.mxu0 0
    %1721 = vmatpush2.bf16.msra.mxu0 0
    %1722 = vmatprep.subr.bf16.mxu0 0
    %1723 = vmatpush2.bf16.msra.mxu0 0
    %1724 = vmatprep.subr.bf16.mxu0 0
    %1725 = vmatpush2.bf16.msra.mxu0 0
    %1726 = vmatprep.subr.bf16.mxu0 0
    %1727 = vmatpush2.bf16.msra.mxu0 0
    %1728 = vmatprep.subr.bf16.mxu0 0
    %1729 = vmatpush2.bf16.msra.mxu0 0
    %1730 = vmatprep.subr.bf16.mxu0 0
    %1731 = vmatpush2.bf16.msra.mxu0 0
    %1732 = vmatprep.subr.bf16.mxu0 0
    %1733 = vmatpush2.bf16.msra.mxu0 0
    %1734 = vmatprep.mubr.bf16.mxu0 0
    %1735 = vmatmul.mubr.bf16.gmra.mxu0 %v1679
    %v1736 = vpop.f32.mrf.mxu0
    %v1737 = vadd.f32 0.0, %v1736
    %v1738 = vpop.f32.mrf.mxu0
    %v1739 = vpop.f32.mrf.mxu0
    %v1740 = vadd.f32 0.0, %v1739
    %v1741 = vpop.f32.mrf.mxu0
    %1742 = vmatprep.mubr.bf16.mxu0 0
    %1743 = vmatmul.mubr.bf16.gmra.mxu0 %v1682
    %v1744 = vpop.f32.mrf.mxu0
    %v1745 = vadd.f32 0.0, %v1744
    %v1746 = vpop.f32.mrf.mxu0
    %v1747 = vpop.f32.mrf.mxu0
    %v1748 = vadd.f32 0.0, %v1747
    %v1749 = vpop.f32.mrf.mxu0
    %1750 = vmatprep.mubr.bf16.mxu0 0
    %1751 = vmatmul.mubr.bf16.gmra.mxu0 %v1685
    %v1752 = vpop.f32.mrf.mxu0
    %v1753 = vadd.f32 0.0, %v1752
    %v1754 = vpop.f32.mrf.mxu0
    %v1755 = vpop.f32.mrf.mxu0
    %v1756 = vadd.f32 0.0, %v1755
    %v1757 = vpop.f32.mrf.mxu0
    %1758 = vmatprep.mubr.bf16.mxu0 0
    %1759 = vmatmul.mubr.bf16.gmra.mxu0 %v1688
    %v1760 = vpop.f32.mrf.mxu0
    %v1761 = vadd.f32 0.0, %v1760
    %v1762 = vpop.f32.mrf.mxu0
    %v1763 = vpop.f32.mrf.mxu0
    %v1764 = vadd.f32 0.0, %v1763
    %v1765 = vpop.f32.mrf.mxu0
    %1766 = vmatprep.mubr.bf16.mxu0 0
    %1767 = vmatmul.mubr.bf16.gmra.mxu0 %v1691
    %v1768 = vpop.f32.mrf.mxu0
    %v1769 = vadd.f32 0.0, %v1768
    %v1770 = vpop.f32.mrf.mxu0
    %v1771 = vpop.f32.mrf.mxu0
    %v1772 = vadd.f32 0.0, %v1771
    %v1773 = vpop.f32.mrf.mxu0
    %1774 = vmatprep.mubr.bf16.mxu0 0
    %1775 = vmatmul.mubr.bf16.gmra.mxu0 %v1694
    %v1776 = vpop.f32.mrf.mxu0
    %v1777 = vadd.f32 0.0, %v1776
    %v1778 = vpop.f32.mrf.mxu0
    %v1779 = vpop.f32.mrf.mxu0
    %v1780 = vadd.f32 0.0, %v1779
    %v1781 = vpop.f32.mrf.mxu0
    %1782 = vmatprep.mubr.bf16.mxu0 0
    %1783 = vmatmul.mubr.bf16.gmra.mxu0 %v1697
    %v1784 = vpop.f32.mrf.mxu0
    %v1785 = vadd.f32 0.0, %v1784
    %v1786 = vpop.f32.mrf.mxu0
    %v1787 = vpop.f32.mrf.mxu0
    %v1788 = vadd.f32 0.0, %v1787
    %v1789 = vpop.f32.mrf.mxu0
    %1790 = vmatprep.mubr.bf16.mxu0 0
    %1791 = vmatmul.mubr.bf16.gmra.mxu0 %v1700
    %v1792 = vpop.f32.mrf.mxu0
    %v1793 = vadd.f32 0.0, %v1792
    %v1794 = vpop.f32.mrf.mxu0
    %v1795 = vpop.f32.mrf.mxu0
    %v1796 = vadd.f32 0.0, %v1795
    %v1797 = vpop.f32.mrf.mxu0
    %1798 = vdwg.mxu0
    %v1799 = vld [vmem:[#allocation9] sm:$0x1]
    %v1801 = vlaneseq
    %v1802 = vshrl.u32 %v1801, 7
    %v1803 = vsub.s32 0, %v1802
    %v1804 = vrot.slane %v1799, %v1803
    %v1806 = vadd.f32 %v1737, %v1804
    %v1807 = vadd.f32 %v1740, %v1804
    %v1808 = vadd.f32 %v1745, %v1804
    %v1809 = vadd.f32 %v1748, %v1804
    %v1810 = vadd.f32 %v1753, %v1804
    %v1811 = vadd.f32 %v1756, %v1804
    %v1812 = vadd.f32 %v1761, %v1804
    %v1813 = vadd.f32 %v1764, %v1804
    %v1814 = vadd.f32 %v1769, %v1804
    %v1815 = vadd.f32 %v1772, %v1804
    %v1816 = vadd.f32 %v1777, %v1804
    %v1817 = vadd.f32 %v1780, %v1804
    %v1818 = vadd.f32 %v1785, %v1804
    %v1819 = vadd.f32 %v1788, %v1804
    %v1820 = vadd.f32 %v1793, %v1804
    %v1821 = vadd.f32 %v1796, %v1804
    %1822 = vst [vmem:[#allocation2] sm:$0xff] %v1806
    %1823 = vst [vmem:[#allocation2 + $0x8] sm:$0xff] %v1807
    %1824 = vst [vmem:[#allocation2 + $0x10] sm:$0xff] %v1808
    %1825 = vst [vmem:[#allocation2 + $0x18] sm:$0xff] %v1809
    %1826 = vst [vmem:[#allocation2 + $0x20] sm:$0xff] %v1810
    %1827 = vst [vmem:[#allocation2 + $0x28] sm:$0xff] %v1811
    %1828 = vst [vmem:[#allocation2 + $0x30] sm:$0xff] %v1812
    %1829 = vst [vmem:[#allocation2 + $0x38] sm:$0xff] %v1813
    %1830 = vst [vmem:[#allocation2 + $0x40] sm:$0xff] %v1814
    %1831 = vst [vmem:[#allocation2 + $0x48] sm:$0xff] %v1815
    %1832 = vst [vmem:[#allocation2 + $0x50] sm:$0xff] %v1816
    %1833 = vst [vmem:[#allocation2 + $0x58] sm:$0xff] %v1817
    %1834 = vst [vmem:[#allocation2 + $0x60] sm:$0xff] %v1818
    %1835 = vst [vmem:[#allocation2 + $0x68] sm:$0xff] %v1819
    %1836 = vst [vmem:[#allocation2 + $0x70] sm:$0xff] %v1820
    %1837 = vst [vmem:[#allocation2 + $0x78] sm:$0xff] %v1821
    %v1838 = vld [vmem:[%s5] sm:$0xf]
    %v1839 = vld [vmem:[%s5 + $0x4] sm:$0xf]
    %v1840 = vld [vmem:[%s5 + $0x8] sm:$0xf]
    %v1841 = vld [vmem:[%s5 + $0xc] sm:$0xf]
    %v1842 = vld [vmem:[#allocation2] sm:$0xff]
    %v1843 = vxor.u32 %v1842, 2147483648
    %v1844 = vmul.f32 %v1843, 1.442695
    %v1845 = vpow.pop %v1844
    %v1846 = vadd.f32 %v1845, 1.0
    %v1847 = vrcp.pop %v1846
    %v1848 = vmul.f32 1.0, %v1847
    %v1849 = vtanh.pop %v1842
    %v1850 = vsel %vm104, %v1849, %v1848
    %v1851 = vmul.f32 %v1850, 0.0
    %1853 = vrot.lane.b32.xlu0 %v1850, 64
    %v1854 = vpop.permute.xlu0 %1853
    %v1856 = vmul.f32 %v1850, %v1854
    %1858 = vrot.lane.b32.xlu0 %v1856, 32
    %v1859 = vpop.permute.xlu0 %1858
    %v1861 = vadd.f32 %v1851, %v1859
    %v1862 = vtanh.pop %v1861
    %1864 = vrot.lane.b32.xlu0 %v1862, 64
    %v1865 = vpop.permute.xlu0 %1864
    %v1867 = vmul.f32 %v1850, %v1865
    %v1868 = vld [vmem:[%s363] sm:$0xff]
    %v1869 = vpack.c.bf16 %v1867, %v1867
    %1871 = vrot.lane.b32.xlu0 %v1869, 32
    %v1872 = vpop.permute.xlu0 %1871
    %v1877 = vunpack.c.l.b16 %v1838
    %v1878 = vunpack.c.l.b16 %v1839
    %v1879 = vunpack.c.l.b16 %v1840
    %v1880 = vunpack.c.l.b16 %v1841
    %v1881 = vpack.c.b16 %v1878, %v1877
    %v1882 = vpack.c.b16 %v1880, %v1879
    %v1886 = vsel %vm361, %v1872, 0
    %1888 = vmatprep.subr.bf16.mxu0 0
    %1889 = vmatpush1.bf16.msra.mxu0 0
    %1890 = vmatprep.subr.bf16.mxu0 0
    %1891 = vmatpush1.bf16.msra.mxu0 0
    %1892 = vmatprep.subr.bf16.mxu0 0
    %1893 = vmatpush1.bf16.msra.mxu0 0
    %1894 = vmatprep.subr.bf16.mxu0 0
    %1895 = vmatpush1.bf16.msra.mxu0 0
    %1896 = vmatprep.subr.bf16.mxu0 0
    %1897 = vmatpush1.bf16.msra.mxu0 0
    %1898 = vmatprep.subr.bf16.mxu0 0
    %1899 = vmatpush1.bf16.msra.mxu0 0
    %1900 = vmatprep.subr.bf16.mxu0 0
    %1901 = vmatpush1.bf16.msra.mxu0 %v1882
    %1902 = vmatprep.subr.bf16.mxu0 0
    %1903 = vmatpush1.bf16.msra.mxu0 %v1881
    %1904 = vmatprep.subr.bf16.mxu0 0
    %1905 = vmatpush2.bf16.msra.mxu0 0
    %1906 = vmatprep.subr.bf16.mxu0 0
    %1907 = vmatpush2.bf16.msra.mxu0 0
    %1908 = vmatprep.subr.bf16.mxu0 0
    %1909 = vmatpush2.bf16.msra.mxu0 0
    %1910 = vmatprep.subr.bf16.mxu0 0
    %1911 = vmatpush2.bf16.msra.mxu0 0
    %1912 = vmatprep.subr.bf16.mxu0 0
    %1913 = vmatpush2.bf16.msra.mxu0 0
    %1914 = vmatprep.subr.bf16.mxu0 0
    %1915 = vmatpush2.bf16.msra.mxu0 0
    %1916 = vmatprep.subr.bf16.mxu0 0
    %1917 = vmatpush2.bf16.msra.mxu0 0
    %1918 = vmatprep.subr.bf16.mxu0 0
    %1919 = vmatpush2.bf16.msra.mxu0 0
    %1920 = vmatprep.mubr.bf16.mxu0 0
    %1921 = vmatmul.mubr.bf16.gmra.mxu0 %v1886
    %v1922 = vpop.f32.mrf.mxu0
    %v1923 = vadd.f32 0.0, %v1922
    %v1924 = vpop.f32.mrf.mxu0
    %v1925 = vpop.f32.mrf.mxu0
    %v1926 = vpop.f32.mrf.mxu0
    %1927 = vdwg.mxu0
    %v1928 = vadd.f32 %v1868, %v1923
    %v1929 = vxor.u32 %v1928, 2147483648
    %v1930 = vmul.f32 %v1929, 1.442695
    %v1931 = vpow.pop %v1930
    %v1932 = vadd.f32 %v1931, 1.0
    %v1933 = vrcp.pop %v1932
    %v1934 = vmul.f32 1.0, %v1933
    %v1935 = vtanh.pop %v1928
    %v1936 = vsel %vm104, %v1935, %v1934
    %v1937 = vmul.f32 %v1936, %v1861
    %1939 = vrot.lane.b32.xlu0 %v1936, 64
    %v1940 = vpop.permute.xlu0 %1939
    %v1942 = vmul.f32 %v1936, %v1940
    %1944 = vrot.lane.b32.xlu0 %v1942, 32
    %v1945 = vpop.permute.xlu0 %1944
    %v1947 = vadd.f32 %v1937, %v1945
    %v1948 = vtanh.pop %v1947
    %1950 = vrot.lane.b32.xlu0 %v1948, 64
    %v1951 = vpop.permute.xlu0 %1950
    %v1953 = vmul.f32 %v1936, %v1951
    %v1954 = vld [vmem:[%s456] sm:$0xff]
    %v1955 = vpack.c.bf16 %v1953, %v1953
    %1957 = vrot.lane.b32.xlu0 %v1955, 32
    %v1958 = vpop.permute.xlu0 %1957
    %v1960 = vsel %vm361, %v1958, 0
    %1962 = vmatprep.subr.bf16.mxu0 0
    %1963 = vmatpush1.bf16.msra.mxu0 0
    %1964 = vmatprep.subr.bf16.mxu0 0
    %1965 = vmatpush1.bf16.msra.mxu0 0
    %1966 = vmatprep.subr.bf16.mxu0 0
    %1967 = vmatpush1.bf16.msra.mxu0 0
    %1968 = vmatprep.subr.bf16.mxu0 0
    %1969 = vmatpush1.bf16.msra.mxu0 0
    %1970 = vmatprep.subr.bf16.mxu0 0
    %1971 = vmatpush1.bf16.msra.mxu0 0
    %1972 = vmatprep.subr.bf16.mxu0 0
    %1973 = vmatpush1.bf16.msra.mxu0 0
    %1974 = vmatprep.subr.bf16.mxu0 0
    %1975 = vmatpush1.bf16.msra.mxu0 %v1882
    %1976 = vmatprep.subr.bf16.mxu0 0
    %1977 = vmatpush1.bf16.msra.mxu0 %v1881
    %1978 = vmatprep.subr.bf16.mxu0 0
    %1979 = vmatpush2.bf16.msra.mxu0 0
    %1980 = vmatprep.subr.bf16.mxu0 0
    %1981 = vmatpush2.bf16.msra.mxu0 0
    %1982 = vmatprep.subr.bf16.mxu0 0
    %1983 = vmatpush2.bf16.msra.mxu0 0
    %1984 = vmatprep.subr.bf16.mxu0 0
    %1985 = vmatpush2.bf16.msra.mxu0 0
    %1986 = vmatprep.subr.bf16.mxu0 0
    %1987 = vmatpush2.bf16.msra.mxu0 0
    %1988 = vmatprep.subr.bf16.mxu0 0
    %1989 = vmatpush2.bf16.msra.mxu0 0
    %1990 = vmatprep.subr.bf16.mxu0 0
    %1991 = vmatpush2.bf16.msra.mxu0 0
    %1992 = vmatprep.subr.bf16.mxu0 0
    %1993 = vmatpush2.bf16.msra.mxu0 0
    %1994 = vmatprep.mubr.bf16.mxu0 0
    %1995 = vmatmul.mubr.bf16.gmra.mxu0 %v1960
    %v1996 = vpop.f32.mrf.mxu0
    %v1997 = vadd.f32 0.0, %v1996
    %v1998 = vpop.f32.mrf.mxu0
    %v1999 = vpop.f32.mrf.mxu0
    %v2000 = vpop.f32.mrf.mxu0
    %2001 = vdwg.mxu0
    %v2002 = vadd.f32 %v1954, %v1997
    %v2003 = vxor.u32 %v2002, 2147483648
    %v2004 = vmul.f32 %v2003, 1.442695
    %v2005 = vpow.pop %v2004
    %v2006 = vadd.f32 %v2005, 1.0
    %v2007 = vrcp.pop %v2006
    %v2008 = vmul.f32 1.0, %v2007
    %v2009 = vtanh.pop %v2002
    %v2010 = vsel %vm104, %v2009, %v2008
    %v2011 = vmul.f32 %v2010, %v1947
    %2013 = vrot.lane.b32.xlu0 %v2010, 64
    %v2014 = vpop.permute.xlu0 %2013
    %v2016 = vmul.f32 %v2010, %v2014
    %2018 = vrot.lane.b32.xlu0 %v2016, 32
    %v2019 = vpop.permute.xlu0 %2018
    %v2021 = vadd.f32 %v2011, %v2019
    %v2022 = vtanh.pop %v2021
    %2024 = vrot.lane.b32.xlu0 %v2022, 64
    %v2025 = vpop.permute.xlu0 %2024
    %v2027 = vmul.f32 %v2010, %v2025
    %v2028 = vld [vmem:[%s537] sm:$0xff]
    %v2029 = vpack.c.bf16 %v2027, %v2027
    %2031 = vrot.lane.b32.xlu0 %v2029, 32
    %v2032 = vpop.permute.xlu0 %2031
    %v2034 = vsel %vm361, %v2032, 0
    %2036 = vmatprep.subr.bf16.mxu0 0
    %2037 = vmatpush1.bf16.msra.mxu0 0
    %2038 = vmatprep.subr.bf16.mxu0 0
    %2039 = vmatpush1.bf16.msra.mxu0 0
    %2040 = vmatprep.subr.bf16.mxu0 0
    %2041 = vmatpush1.bf16.msra.mxu0 0
    %2042 = vmatprep.subr.bf16.mxu0 0
    %2043 = vmatpush1.bf16.msra.mxu0 0
    %2044 = vmatprep.subr.bf16.mxu0 0
    %2045 = vmatpush1.bf16.msra.mxu0 0
    %2046 = vmatprep.subr.bf16.mxu0 0
    %2047 = vmatpush1.bf16.msra.mxu0 0
    %2048 = vmatprep.subr.bf16.mxu0 0
    %2049 = vmatpush1.bf16.msra.mxu0 %v1882
    %2050 = vmatprep.subr.bf16.mxu0 0
    %2051 = vmatpush1.bf16.msra.mxu0 %v1881
    %2052 = vmatprep.subr.bf16.mxu0 0
    %2053 = vmatpush2.bf16.msra.mxu0 0
    %2054 = vmatprep.subr.bf16.mxu0 0
    %2055 = vmatpush2.bf16.msra.mxu0 0
    %2056 = vmatprep.subr.bf16.mxu0 0
    %2057 = vmatpush2.bf16.msra.mxu0 0
    %2058 = vmatprep.subr.bf16.mxu0 0
    %2059 = vmatpush2.bf16.msra.mxu0 0
    %2060 = vmatprep.subr.bf16.mxu0 0
    %2061 = vmatpush2.bf16.msra.mxu0 0
    %2062 = vmatprep.subr.bf16.mxu0 0
    %2063 = vmatpush2.bf16.msra.mxu0 0
    %2064 = vmatprep.subr.bf16.mxu0 0
    %2065 = vmatpush2.bf16.msra.mxu0 0
    %2066 = vmatprep.subr.bf16.mxu0 0
    %2067 = vmatpush2.bf16.msra.mxu0 0
    %2068 = vmatprep.mubr.bf16.mxu0 0
    %2069 = vmatmul.mubr.bf16.gmra.mxu0 %v2034
    %v2070 = vpop.f32.mrf.mxu0
    %v2071 = vadd.f32 0.0, %v2070
    %v2072 = vpop.f32.mrf.mxu0
    %v2073 = vpop.f32.mrf.mxu0
    %v2074 = vpop.f32.mrf.mxu0
    %2075 = vdwg.mxu0
    %v2076 = vadd.f32 %v2028, %v2071
    %v2077 = vxor.u32 %v2076, 2147483648
    %v2078 = vmul.f32 %v2077, 1.442695
    %v2079 = vpow.pop %v2078
    %v2080 = vadd.f32 %v2079, 1.0
    %v2081 = vrcp.pop %v2080
    %v2082 = vmul.f32 1.0, %v2081
    %v2083 = vtanh.pop %v2076
    %v2084 = vsel %vm104, %v2083, %v2082
    %v2085 = vmul.f32 %v2084, %v2021
    %2087 = vrot.lane.b32.xlu0 %v2084, 64
    %v2088 = vpop.permute.xlu0 %2087
    %v2090 = vmul.f32 %v2084, %v2088
    %2092 = vrot.lane.b32.xlu0 %v2090, 32
    %v2093 = vpop.permute.xlu0 %2092
    %v2095 = vadd.f32 %v2085, %v2093
    %v2096 = vtanh.pop %v2095
    %2098 = vrot.lane.b32.xlu0 %v2096, 64
    %v2099 = vpop.permute.xlu0 %2098
    %v2101 = vmul.f32 %v2084, %v2099
    %v2102 = vld [vmem:[%s618] sm:$0xff]
    %v2103 = vpack.c.bf16 %v2101, %v2101
    %2105 = vrot.lane.b32.xlu0 %v2103, 32
    %v2106 = vpop.permute.xlu0 %2105
    %v2108 = vsel %vm361, %v2106, 0
    %2110 = vmatprep.subr.bf16.mxu0 0
    %2111 = vmatpush1.bf16.msra.mxu0 0
    %2112 = vmatprep.subr.bf16.mxu0 0
    %2113 = vmatpush1.bf16.msra.mxu0 0
    %2114 = vmatprep.subr.bf16.mxu0 0
    %2115 = vmatpush1.bf16.msra.mxu0 0
    %2116 = vmatprep.subr.bf16.mxu0 0
    %2117 = vmatpush1.bf16.msra.mxu0 0
    %2118 = vmatprep.subr.bf16.mxu0 0
    %2119 = vmatpush1.bf16.msra.mxu0 0
    %2120 = vmatprep.subr.bf16.mxu0 0
    %2121 = vmatpush1.bf16.msra.mxu0 0
    %2122 = vmatprep.subr.bf16.mxu0 0
    %2123 = vmatpush1.bf16.msra.mxu0 %v1882
    %2124 = vmatprep.subr.bf16.mxu0 0
    %2125 = vmatpush1.bf16.msra.mxu0 %v1881
    %2126 = vmatprep.subr.bf16.mxu0 0
    %2127 = vmatpush2.bf16.msra.mxu0 0
    %2128 = vmatprep.subr.bf16.mxu0 0
    %2129 = vmatpush2.bf16.msra.mxu0 0
    %2130 = vmatprep.subr.bf16.mxu0 0
    %2131 = vmatpush2.bf16.msra.mxu0 0
    %2132 = vmatprep.subr.bf16.mxu0 0
    %2133 = vmatpush2.bf16.msra.mxu0 0
    %2134 = vmatprep.subr.bf16.mxu0 0
    %2135 = vmatpush2.bf16.msra.mxu0 0
    %2136 = vmatprep.subr.bf16.mxu0 0
    %2137 = vmatpush2.bf16.msra.mxu0 0
    %2138 = vmatprep.subr.bf16.mxu0 0
    %2139 = vmatpush2.bf16.msra.mxu0 0
    %2140 = vmatprep.subr.bf16.mxu0 0
    %2141 = vmatpush2.bf16.msra.mxu0 0
    %2142 = vmatprep.mubr.bf16.mxu0 0
    %2143 = vmatmul.mubr.bf16.gmra.mxu0 %v2108
    %v2144 = vpop.f32.mrf.mxu0
    %v2145 = vadd.f32 0.0, %v2144
    %v2146 = vpop.f32.mrf.mxu0
    %v2147 = vpop.f32.mrf.mxu0
    %v2148 = vpop.f32.mrf.mxu0
    %2149 = vdwg.mxu0
    %v2150 = vadd.f32 %v2102, %v2145
    %v2151 = vxor.u32 %v2150, 2147483648
    %v2152 = vmul.f32 %v2151, 1.442695
    %v2153 = vpow.pop %v2152
    %v2154 = vadd.f32 %v2153, 1.0
    %v2155 = vrcp.pop %v2154
    %v2156 = vmul.f32 1.0, %v2155
    %v2157 = vtanh.pop %v2150
    %v2158 = vsel %vm104, %v2157, %v2156
    %v2159 = vmul.f32 %v2158, %v2095
    %2161 = vrot.lane.b32.xlu0 %v2158, 64
    %v2162 = vpop.permute.xlu0 %2161
    %v2164 = vmul.f32 %v2158, %v2162
    %2166 = vrot.lane.b32.xlu0 %v2164, 32
    %v2167 = vpop.permute.xlu0 %2166
    %v2169 = vadd.f32 %v2159, %v2167
    %v2170 = vtanh.pop %v2169
    %2172 = vrot.lane.b32.xlu0 %v2170, 64
    %v2173 = vpop.permute.xlu0 %2172
    %v2175 = vmul.f32 %v2158, %v2173
    %v2176 = vld [vmem:[%s699] sm:$0xff]
    %v2177 = vpack.c.bf16 %v2175, %v2175
    %2179 = vrot.lane.b32.xlu0 %v2177, 32
    %v2180 = vpop.permute.xlu0 %2179
    %v2182 = vsel %vm361, %v2180, 0
    %2184 = vmatprep.subr.bf16.mxu0 0
    %2185 = vmatpush1.bf16.msra.mxu0 0
    %2186 = vmatprep.subr.bf16.mxu0 0
    %2187 = vmatpush1.bf16.msra.mxu0 0
    %2188 = vmatprep.subr.bf16.mxu0 0
    %2189 = vmatpush1.bf16.msra.mxu0 0
    %2190 = vmatprep.subr.bf16.mxu0 0
    %2191 = vmatpush1.bf16.msra.mxu0 0
    %2192 = vmatprep.subr.bf16.mxu0 0
    %2193 = vmatpush1.bf16.msra.mxu0 0
    %2194 = vmatprep.subr.bf16.mxu0 0
    %2195 = vmatpush1.bf16.msra.mxu0 0
    %2196 = vmatprep.subr.bf16.mxu0 0
    %2197 = vmatpush1.bf16.msra.mxu0 %v1882
    %2198 = vmatprep.subr.bf16.mxu0 0
    %2199 = vmatpush1.bf16.msra.mxu0 %v1881
    %2200 = vmatprep.subr.bf16.mxu0 0
    %2201 = vmatpush2.bf16.msra.mxu0 0
    %2202 = vmatprep.subr.bf16.mxu0 0
    %2203 = vmatpush2.bf16.msra.mxu0 0
    %2204 = vmatprep.subr.bf16.mxu0 0
    %2205 = vmatpush2.bf16.msra.mxu0 0
    %2206 = vmatprep.subr.bf16.mxu0 0
    %2207 = vmatpush2.bf16.msra.mxu0 0
    %2208 = vmatprep.subr.bf16.mxu0 0
    %2209 = vmatpush2.bf16.msra.mxu0 0
    %2210 = vmatprep.subr.bf16.mxu0 0
    %2211 = vmatpush2.bf16.msra.mxu0 0
    %2212 = vmatprep.subr.bf16.mxu0 0
    %2213 = vmatpush2.bf16.msra.mxu0 0
    %2214 = vmatprep.subr.bf16.mxu0 0
    %2215 = vmatpush2.bf16.msra.mxu0 0
    %2216 = vmatprep.mubr.bf16.mxu0 0
    %2217 = vmatmul.mubr.bf16.gmra.mxu0 %v2182
    %v2218 = vpop.f32.mrf.mxu0
    %v2219 = vadd.f32 0.0, %v2218
    %v2220 = vpop.f32.mrf.mxu0
    %v2221 = vpop.f32.mrf.mxu0
    %v2222 = vpop.f32.mrf.mxu0
    %2223 = vdwg.mxu0
    %v2224 = vadd.f32 %v2176, %v2219
    %v2225 = vxor.u32 %v2224, 2147483648
    %v2226 = vmul.f32 %v2225, 1.442695
    %v2227 = vpow.pop %v2226
    %v2228 = vadd.f32 %v2227, 1.0
    %v2229 = vrcp.pop %v2228
    %v2230 = vmul.f32 1.0, %v2229
    %v2231 = vtanh.pop %v2224
    %v2232 = vsel %vm104, %v2231, %v2230
    %v2233 = vmul.f32 %v2232, %v2169
    %2235 = vrot.lane.b32.xlu0 %v2232, 64
    %v2236 = vpop.permute.xlu0 %2235
    %v2238 = vmul.f32 %v2232, %v2236
    %2240 = vrot.lane.b32.xlu0 %v2238, 32
    %v2241 = vpop.permute.xlu0 %2240
    %v2243 = vadd.f32 %v2233, %v2241
    %v2244 = vtanh.pop %v2243
    %2246 = vrot.lane.b32.xlu0 %v2244, 64
    %v2247 = vpop.permute.xlu0 %2246
    %v2249 = vmul.f32 %v2232, %v2247
    %v2250 = vld [vmem:[%s780] sm:$0xff]
    %v2251 = vpack.c.bf16 %v2249, %v2249
    %2253 = vrot.lane.b32.xlu0 %v2251, 32
    %v2254 = vpop.permute.xlu0 %2253
    %v2256 = vsel %vm361, %v2254, 0
    %2258 = vmatprep.subr.bf16.mxu0 0
    %2259 = vmatpush1.bf16.msra.mxu0 0
    %2260 = vmatprep.subr.bf16.mxu0 0
    %2261 = vmatpush1.bf16.msra.mxu0 0
    %2262 = vmatprep.subr.bf16.mxu0 0
    %2263 = vmatpush1.bf16.msra.mxu0 0
    %2264 = vmatprep.subr.bf16.mxu0 0
    %2265 = vmatpush1.bf16.msra.mxu0 0
    %2266 = vmatprep.subr.bf16.mxu0 0
    %2267 = vmatpush1.bf16.msra.mxu0 0
    %2268 = vmatprep.subr.bf16.mxu0 0
    %2269 = vmatpush1.bf16.msra.mxu0 0
    %2270 = vmatprep.subr.bf16.mxu0 0
    %2271 = vmatpush1.bf16.msra.mxu0 %v1882
    %2272 = vmatprep.subr.bf16.mxu0 0
    %2273 = vmatpush1.bf16.msra.mxu0 %v1881
    %2274 = vmatprep.subr.bf16.mxu0 0
    %2275 = vmatpush2.bf16.msra.mxu0 0
    %2276 = vmatprep.subr.bf16.mxu0 0
    %2277 = vmatpush2.bf16.msra.mxu0 0
    %2278 = vmatprep.subr.bf16.mxu0 0
    %2279 = vmatpush2.bf16.msra.mxu0 0
    %2280 = vmatprep.subr.bf16.mxu0 0
    %2281 = vmatpush2.bf16.msra.mxu0 0
    %2282 = vmatprep.subr.bf16.mxu0 0
    %2283 = vmatpush2.bf16.msra.mxu0 0
    %2284 = vmatprep.subr.bf16.mxu0 0
    %2285 = vmatpush2.bf16.msra.mxu0 0
    %2286 = vmatprep.subr.bf16.mxu0 0
    %2287 = vmatpush2.bf16.msra.mxu0 0
    %2288 = vmatprep.subr.bf16.mxu0 0
    %2289 = vmatpush2.bf16.msra.mxu0 0
    %2290 = vmatprep.mubr.bf16.mxu0 0
    %2291 = vmatmul.mubr.bf16.gmra.mxu0 %v2256
    %v2292 = vpop.f32.mrf.mxu0
    %v2293 = vadd.f32 0.0, %v2292
    %v2294 = vpop.f32.mrf.mxu0
    %v2295 = vpop.f32.mrf.mxu0
    %v2296 = vpop.f32.mrf.mxu0
    %2297 = vdwg.mxu0
    %v2298 = vadd.f32 %v2250, %v2293
    %v2299 = vxor.u32 %v2298, 2147483648
    %v2300 = vmul.f32 %v2299, 1.442695
    %v2301 = vpow.pop %v2300
    %v2302 = vadd.f32 %v2301, 1.0
    %v2303 = vrcp.pop %v2302
    %v2304 = vmul.f32 1.0, %v2303
    %v2305 = vtanh.pop %v2298
    %v2306 = vsel %vm104, %v2305, %v2304
    %v2307 = vmul.f32 %v2306, %v2243
    %2309 = vrot.lane.b32.xlu0 %v2306, 64
    %v2310 = vpop.permute.xlu0 %2309
    %v2312 = vmul.f32 %v2306, %v2310
    %2314 = vrot.lane.b32.xlu0 %v2312, 32
    %v2315 = vpop.permute.xlu0 %2314
    %v2317 = vadd.f32 %v2307, %v2315
    %v2318 = vtanh.pop %v2317
    %2320 = vrot.lane.b32.xlu0 %v2318, 64
    %v2321 = vpop.permute.xlu0 %2320
    %v2323 = vmul.f32 %v2306, %v2321
    %v2324 = vld [vmem:[%s861] sm:$0xff]
    %v2325 = vpack.c.bf16 %v2323, %v2323
    %2327 = vrot.lane.b32.xlu0 %v2325, 32
    %v2328 = vpop.permute.xlu0 %2327
    %v2330 = vsel %vm361, %v2328, 0
    %2332 = vmatprep.subr.bf16.mxu0 0
    %2333 = vmatpush1.bf16.msra.mxu0 0
    %2334 = vmatprep.subr.bf16.mxu0 0
    %2335 = vmatpush1.bf16.msra.mxu0 0
    %2336 = vmatprep.subr.bf16.mxu0 0
    %2337 = vmatpush1.bf16.msra.mxu0 0
    %2338 = vmatprep.subr.bf16.mxu0 0
    %2339 = vmatpush1.bf16.msra.mxu0 0
    %2340 = vmatprep.subr.bf16.mxu0 0
    %2341 = vmatpush1.bf16.msra.mxu0 0
    %2342 = vmatprep.subr.bf16.mxu0 0
    %2343 = vmatpush1.bf16.msra.mxu0 0
    %2344 = vmatprep.subr.bf16.mxu0 0
    %2345 = vmatpush1.bf16.msra.mxu0 %v1882
    %2346 = vmatprep.subr.bf16.mxu0 0
    %2347 = vmatpush1.bf16.msra.mxu0 %v1881
    %2348 = vmatprep.subr.bf16.mxu0 0
    %2349 = vmatpush2.bf16.msra.mxu0 0
    %2350 = vmatprep.subr.bf16.mxu0 0
    %2351 = vmatpush2.bf16.msra.mxu0 0
    %2352 = vmatprep.subr.bf16.mxu0 0
    %2353 = vmatpush2.bf16.msra.mxu0 0
    %2354 = vmatprep.subr.bf16.mxu0 0
    %2355 = vmatpush2.bf16.msra.mxu0 0
    %2356 = vmatprep.subr.bf16.mxu0 0
    %2357 = vmatpush2.bf16.msra.mxu0 0
    %2358 = vmatprep.subr.bf16.mxu0 0
    %2359 = vmatpush2.bf16.msra.mxu0 0
    %2360 = vmatprep.subr.bf16.mxu0 0
    %2361 = vmatpush2.bf16.msra.mxu0 0
    %2362 = vmatprep.subr.bf16.mxu0 0
    %2363 = vmatpush2.bf16.msra.mxu0 0
    %2364 = vmatprep.mubr.bf16.mxu0 0
    %2365 = vmatmul.mubr.bf16.gmra.mxu0 %v2330
    %v2366 = vpop.f32.mrf.mxu0
    %v2367 = vadd.f32 0.0, %v2366
    %v2368 = vpop.f32.mrf.mxu0
    %v2369 = vpop.f32.mrf.mxu0
    %v2370 = vpop.f32.mrf.mxu0
    %2371 = vdwg.mxu0
    %v2372 = vadd.f32 %v2324, %v2367
    %v2373 = vxor.u32 %v2372, 2147483648
    %v2374 = vmul.f32 %v2373, 1.442695
    %v2375 = vpow.pop %v2374
    %v2376 = vadd.f32 %v2375, 1.0
    %v2377 = vrcp.pop %v2376
    %v2378 = vmul.f32 1.0, %v2377
    %v2379 = vtanh.pop %v2372
    %v2380 = vsel %vm104, %v2379, %v2378
    %v2381 = vmul.f32 %v2380, %v2317
    %2383 = vrot.lane.b32.xlu0 %v2380, 64
    %v2384 = vpop.permute.xlu0 %2383
    %v2386 = vmul.f32 %v2380, %v2384
    %2388 = vrot.lane.b32.xlu0 %v2386, 32
    %v2389 = vpop.permute.xlu0 %2388
    %v2391 = vadd.f32 %v2381, %v2389
    %v2392 = vtanh.pop %v2391
    %2394 = vrot.lane.b32.xlu0 %v2392, 64
    %v2395 = vpop.permute.xlu0 %2394
    %v2397 = vmul.f32 %v2380, %v2395
    %v2398 = vld [vmem:[%s942] sm:$0xff]
    %v2399 = vpack.c.bf16 %v2397, %v2397
    %2401 = vrot.lane.b32.xlu0 %v2399, 32
    %v2402 = vpop.permute.xlu0 %2401
    %v2404 = vsel %vm361, %v2402, 0
    %2406 = vmatprep.subr.bf16.mxu0 0
    %2407 = vmatpush1.bf16.msra.mxu0 0
    %2408 = vmatprep.subr.bf16.mxu0 0
    %2409 = vmatpush1.bf16.msra.mxu0 0
    %2410 = vmatprep.subr.bf16.mxu0 0
    %2411 = vmatpush1.bf16.msra.mxu0 0
    %2412 = vmatprep.subr.bf16.mxu0 0
    %2413 = vmatpush1.bf16.msra.mxu0 0
    %2414 = vmatprep.subr.bf16.mxu0 0
    %2415 = vmatpush1.bf16.msra.mxu0 0
    %2416 = vmatprep.subr.bf16.mxu0 0
    %2417 = vmatpush1.bf16.msra.mxu0 0
    %2418 = vmatprep.subr.bf16.mxu0 0
    %2419 = vmatpush1.bf16.msra.mxu0 %v1882
    %2420 = vmatprep.subr.bf16.mxu0 0
    %2421 = vmatpush1.bf16.msra.mxu0 %v1881
    %2422 = vmatprep.subr.bf16.mxu0 0
    %2423 = vmatpush2.bf16.msra.mxu0 0
    %2424 = vmatprep.subr.bf16.mxu0 0
    %2425 = vmatpush2.bf16.msra.mxu0 0
    %2426 = vmatprep.subr.bf16.mxu0 0
    %2427 = vmatpush2.bf16.msra.mxu0 0
    %2428 = vmatprep.subr.bf16.mxu0 0
    %2429 = vmatpush2.bf16.msra.mxu0 0
    %2430 = vmatprep.subr.bf16.mxu0 0
    %2431 = vmatpush2.bf16.msra.mxu0 0
    %2432 = vmatprep.subr.bf16.mxu0 0
    %2433 = vmatpush2.bf16.msra.mxu0 0
    %2434 = vmatprep.subr.bf16.mxu0 0
    %2435 = vmatpush2.bf16.msra.mxu0 0
    %2436 = vmatprep.subr.bf16.mxu0 0
    %2437 = vmatpush2.bf16.msra.mxu0 0
    %2438 = vmatprep.mubr.bf16.mxu0 0
    %2439 = vmatmul.mubr.bf16.gmra.mxu0 %v2404
    %v2440 = vpop.f32.mrf.mxu0
    %v2441 = vadd.f32 0.0, %v2440
    %v2442 = vpop.f32.mrf.mxu0
    %v2443 = vpop.f32.mrf.mxu0
    %v2444 = vpop.f32.mrf.mxu0
    %2445 = vdwg.mxu0
    %v2446 = vadd.f32 %v2398, %v2441
    %v2447 = vxor.u32 %v2446, 2147483648
    %v2448 = vmul.f32 %v2447, 1.442695
    %v2449 = vpow.pop %v2448
    %v2450 = vadd.f32 %v2449, 1.0
    %v2451 = vrcp.pop %v2450
    %v2452 = vmul.f32 1.0, %v2451
    %v2453 = vtanh.pop %v2446
    %v2454 = vsel %vm104, %v2453, %v2452
    %v2455 = vmul.f32 %v2454, %v2391
    %2457 = vrot.lane.b32.xlu0 %v2454, 64
    %v2458 = vpop.permute.xlu0 %2457
    %v2460 = vmul.f32 %v2454, %v2458
    %2462 = vrot.lane.b32.xlu0 %v2460, 32
    %v2463 = vpop.permute.xlu0 %2462
    %v2465 = vadd.f32 %v2455, %v2463
    %v2466 = vtanh.pop %v2465
    %2468 = vrot.lane.b32.xlu0 %v2466, 64
    %v2469 = vpop.permute.xlu0 %2468
    %v2471 = vmul.f32 %v2454, %v2469
    %v2472 = vld [vmem:[%s1023] sm:$0xff]
    %v2473 = vpack.c.bf16 %v2471, %v2471
    %2475 = vrot.lane.b32.xlu0 %v2473, 32
    %v2476 = vpop.permute.xlu0 %2475
    %v2478 = vsel %vm361, %v2476, 0
    %2480 = vmatprep.subr.bf16.mxu0 0
    %2481 = vmatpush1.bf16.msra.mxu0 0
    %2482 = vmatprep.subr.bf16.mxu0 0
    %2483 = vmatpush1.bf16.msra.mxu0 0
    %2484 = vmatprep.subr.bf16.mxu0 0
    %2485 = vmatpush1.bf16.msra.mxu0 0
    %2486 = vmatprep.subr.bf16.mxu0 0
    %2487 = vmatpush1.bf16.msra.mxu0 0
    %2488 = vmatprep.subr.bf16.mxu0 0
    %2489 = vmatpush1.bf16.msra.mxu0 0
    %2490 = vmatprep.subr.bf16.mxu0 0
    %2491 = vmatpush1.bf16.msra.mxu0 0
    %2492 = vmatprep.subr.bf16.mxu0 0
    %2493 = vmatpush1.bf16.msra.mxu0 %v1882
    %2494 = vmatprep.subr.bf16.mxu0 0
    %2495 = vmatpush1.bf16.msra.mxu0 %v1881
    %2496 = vmatprep.subr.bf16.mxu0 0
    %2497 = vmatpush2.bf16.msra.mxu0 0
    %2498 = vmatprep.subr.bf16.mxu0 0
    %2499 = vmatpush2.bf16.msra.mxu0 0
    %2500 = vmatprep.subr.bf16.mxu0 0
    %2501 = vmatpush2.bf16.msra.mxu0 0
    %2502 = vmatprep.subr.bf16.mxu0 0
    %2503 = vmatpush2.bf16.msra.mxu0 0
    %2504 = vmatprep.subr.bf16.mxu0 0
    %2505 = vmatpush2.bf16.msra.mxu0 0
    %2506 = vmatprep.subr.bf16.mxu0 0
    %2507 = vmatpush2.bf16.msra.mxu0 0
    %2508 = vmatprep.subr.bf16.mxu0 0
    %2509 = vmatpush2.bf16.msra.mxu0 0
    %2510 = vmatprep.subr.bf16.mxu0 0
    %2511 = vmatpush2.bf16.msra.mxu0 0
    %2512 = vmatprep.mubr.bf16.mxu0 0
    %2513 = vmatmul.mubr.bf16.gmra.mxu0 %v2478
    %v2514 = vpop.f32.mrf.mxu0
    %v2515 = vadd.f32 0.0, %v2514
    %v2516 = vpop.f32.mrf.mxu0
    %v2517 = vpop.f32.mrf.mxu0
    %v2518 = vpop.f32.mrf.mxu0
    %2519 = vdwg.mxu0
    %v2520 = vadd.f32 %v2472, %v2515
    %v2521 = vxor.u32 %v2520, 2147483648
    %v2522 = vmul.f32 %v2521, 1.442695
    %v2523 = vpow.pop %v2522
    %v2524 = vadd.f32 %v2523, 1.0
    %v2525 = vrcp.pop %v2524
    %v2526 = vmul.f32 1.0, %v2525
    %v2527 = vtanh.pop %v2520
    %v2528 = vsel %vm104, %v2527, %v2526
    %v2529 = vmul.f32 %v2528, %v2465
    %2531 = vrot.lane.b32.xlu0 %v2528, 64
    %v2532 = vpop.permute.xlu0 %2531
    %v2534 = vmul.f32 %v2528, %v2532
    %2536 = vrot.lane.b32.xlu0 %v2534, 32
    %v2537 = vpop.permute.xlu0 %2536
    %v2539 = vadd.f32 %v2529, %v2537
    %v2540 = vtanh.pop %v2539
    %2542 = vrot.lane.b32.xlu0 %v2540, 64
    %v2543 = vpop.permute.xlu0 %2542
    %v2545 = vmul.f32 %v2528, %v2543
    %v2546 = vld [vmem:[%s1104] sm:$0xff]
    %v2547 = vpack.c.bf16 %v2545, %v2545
    %2549 = vrot.lane.b32.xlu0 %v2547, 32
    %v2550 = vpop.permute.xlu0 %2549
    %v2552 = vsel %vm361, %v2550, 0
    %2554 = vmatprep.subr.bf16.mxu0 0
    %2555 = vmatpush1.bf16.msra.mxu0 0
    %2556 = vmatprep.subr.bf16.mxu0 0
    %2557 = vmatpush1.bf16.msra.mxu0 0
    %2558 = vmatprep.subr.bf16.mxu0 0
    %2559 = vmatpush1.bf16.msra.mxu0 0
    %2560 = vmatprep.subr.bf16.mxu0 0
    %2561 = vmatpush1.bf16.msra.mxu0 0
    %2562 = vmatprep.subr.bf16.mxu0 0
    %2563 = vmatpush1.bf16.msra.mxu0 0
    %2564 = vmatprep.subr.bf16.mxu0 0
    %2565 = vmatpush1.bf16.msra.mxu0 0
    %2566 = vmatprep.subr.bf16.mxu0 0
    %2567 = vmatpush1.bf16.msra.mxu0 %v1882
    %2568 = vmatprep.subr.bf16.mxu0 0
    %2569 = vmatpush1.bf16.msra.mxu0 %v1881
    %2570 = vmatprep.subr.bf16.mxu0 0
    %2571 = vmatpush2.bf16.msra.mxu0 0
    %2572 = vmatprep.subr.bf16.mxu0 0
    %2573 = vmatpush2.bf16.msra.mxu0 0
    %2574 = vmatprep.subr.bf16.mxu0 0
    %2575 = vmatpush2.bf16.msra.mxu0 0
    %2576 = vmatprep.subr.bf16.mxu0 0
    %2577 = vmatpush2.bf16.msra.mxu0 0
    %2578 = vmatprep.subr.bf16.mxu0 0
    %2579 = vmatpush2.bf16.msra.mxu0 0
    %2580 = vmatprep.subr.bf16.mxu0 0
    %2581 = vmatpush2.bf16.msra.mxu0 0
    %2582 = vmatprep.subr.bf16.mxu0 0
    %2583 = vmatpush2.bf16.msra.mxu0 0
    %2584 = vmatprep.subr.bf16.mxu0 0
    %2585 = vmatpush2.bf16.msra.mxu0 0
    %2586 = vmatprep.mubr.bf16.mxu0 0
    %2587 = vmatmul.mubr.bf16.gmra.mxu0 %v2552
    %v2588 = vpop.f32.mrf.mxu0
    %v2589 = vadd.f32 0.0, %v2588
    %v2590 = vpop.f32.mrf.mxu0
    %v2591 = vpop.f32.mrf.mxu0
    %v2592 = vpop.f32.mrf.mxu0
    %2593 = vdwg.mxu0
    %v2594 = vadd.f32 %v2546, %v2589
    %v2595 = vxor.u32 %v2594, 2147483648
    %v2596 = vmul.f32 %v2595, 1.442695
    %v2597 = vpow.pop %v2596
    %v2598 = vadd.f32 %v2597, 1.0
    %v2599 = vrcp.pop %v2598
    %v2600 = vmul.f32 1.0, %v2599
    %v2601 = vtanh.pop %v2594
    %v2602 = vsel %vm104, %v2601, %v2600
    %v2603 = vmul.f32 %v2602, %v2539
    %2605 = vrot.lane.b32.xlu0 %v2602, 64
    %v2606 = vpop.permute.xlu0 %2605
    %v2608 = vmul.f32 %v2602, %v2606
    %2610 = vrot.lane.b32.xlu0 %v2608, 32
    %v2611 = vpop.permute.xlu0 %2610
    %v2613 = vadd.f32 %v2603, %v2611
    %v2614 = vtanh.pop %v2613
    %2616 = vrot.lane.b32.xlu0 %v2614, 64
    %v2617 = vpop.permute.xlu0 %2616
    %v2619 = vmul.f32 %v2602, %v2617
    %v2620 = vld [vmem:[%s1185] sm:$0xff]
    %v2621 = vpack.c.bf16 %v2619, %v2619
    %2623 = vrot.lane.b32.xlu0 %v2621, 32
    %v2624 = vpop.permute.xlu0 %2623
    %v2626 = vsel %vm361, %v2624, 0
    %2628 = vmatprep.subr.bf16.mxu0 0
    %2629 = vmatpush1.bf16.msra.mxu0 0
    %2630 = vmatprep.subr.bf16.mxu0 0
    %2631 = vmatpush1.bf16.msra.mxu0 0
    %2632 = vmatprep.subr.bf16.mxu0 0
    %2633 = vmatpush1.bf16.msra.mxu0 0
    %2634 = vmatprep.subr.bf16.mxu0 0
    %2635 = vmatpush1.bf16.msra.mxu0 0
    %2636 = vmatprep.subr.bf16.mxu0 0
    %2637 = vmatpush1.bf16.msra.mxu0 0
    %2638 = vmatprep.subr.bf16.mxu0 0
    %2639 = vmatpush1.bf16.msra.mxu0 0
    %2640 = vmatprep.subr.bf16.mxu0 0
    %2641 = vmatpush1.bf16.msra.mxu0 %v1882
    %2642 = vmatprep.subr.bf16.mxu0 0
    %2643 = vmatpush1.bf16.msra.mxu0 %v1881
    %2644 = vmatprep.subr.bf16.mxu0 0
    %2645 = vmatpush2.bf16.msra.mxu0 0
    %2646 = vmatprep.subr.bf16.mxu0 0
    %2647 = vmatpush2.bf16.msra.mxu0 0
    %2648 = vmatprep.subr.bf16.mxu0 0
    %2649 = vmatpush2.bf16.msra.mxu0 0
    %2650 = vmatprep.subr.bf16.mxu0 0
    %2651 = vmatpush2.bf16.msra.mxu0 0
    %2652 = vmatprep.subr.bf16.mxu0 0
    %2653 = vmatpush2.bf16.msra.mxu0 0
    %2654 = vmatprep.subr.bf16.mxu0 0
    %2655 = vmatpush2.bf16.msra.mxu0 0
    %2656 = vmatprep.subr.bf16.mxu0 0
    %2657 = vmatpush2.bf16.msra.mxu0 0
    %2658 = vmatprep.subr.bf16.mxu0 0
    %2659 = vmatpush2.bf16.msra.mxu0 0
    %2660 = vmatprep.mubr.bf16.mxu0 0
    %2661 = vmatmul.mubr.bf16.gmra.mxu0 %v2626
    %v2662 = vpop.f32.mrf.mxu0
    %v2663 = vadd.f32 0.0, %v2662
    %v2664 = vpop.f32.mrf.mxu0
    %v2665 = vpop.f32.mrf.mxu0
    %v2666 = vpop.f32.mrf.mxu0
    %2667 = vdwg.mxu0
    %v2668 = vadd.f32 %v2620, %v2663
    %v2669 = vxor.u32 %v2668, 2147483648
    %v2670 = vmul.f32 %v2669, 1.442695
    %v2671 = vpow.pop %v2670
    %v2672 = vadd.f32 %v2671, 1.0
    %v2673 = vrcp.pop %v2672
    %v2674 = vmul.f32 1.0, %v2673
    %v2675 = vtanh.pop %v2668
    %v2676 = vsel %vm104, %v2675, %v2674
    %v2677 = vmul.f32 %v2676, %v2613
    %2679 = vrot.lane.b32.xlu0 %v2676, 64
    %v2680 = vpop.permute.xlu0 %2679
    %v2682 = vmul.f32 %v2676, %v2680
    %2684 = vrot.lane.b32.xlu0 %v2682, 32
    %v2685 = vpop.permute.xlu0 %2684
    %v2687 = vadd.f32 %v2677, %v2685
    %v2688 = vtanh.pop %v2687
    %2690 = vrot.lane.b32.xlu0 %v2688, 64
    %v2691 = vpop.permute.xlu0 %2690
    %v2693 = vmul.f32 %v2676, %v2691
    %v2694 = vld [vmem:[%s1266] sm:$0xff]
    %v2695 = vpack.c.bf16 %v2693, %v2693
    %2697 = vrot.lane.b32.xlu0 %v2695, 32
    %v2698 = vpop.permute.xlu0 %2697
    %v2700 = vsel %vm361, %v2698, 0
    %2702 = vmatprep.subr.bf16.mxu0 0
    %2703 = vmatpush1.bf16.msra.mxu0 0
    %2704 = vmatprep.subr.bf16.mxu0 0
    %2705 = vmatpush1.bf16.msra.mxu0 0
    %2706 = vmatprep.subr.bf16.mxu0 0
    %2707 = vmatpush1.bf16.msra.mxu0 0
    %2708 = vmatprep.subr.bf16.mxu0 0
    %2709 = vmatpush1.bf16.msra.mxu0 0
    %2710 = vmatprep.subr.bf16.mxu0 0
    %2711 = vmatpush1.bf16.msra.mxu0 0
    %2712 = vmatprep.subr.bf16.mxu0 0
    %2713 = vmatpush1.bf16.msra.mxu0 0
    %2714 = vmatprep.subr.bf16.mxu0 0
    %2715 = vmatpush1.bf16.msra.mxu0 %v1882
    %2716 = vmatprep.subr.bf16.mxu0 0
    %2717 = vmatpush1.bf16.msra.mxu0 %v1881
    %2718 = vmatprep.subr.bf16.mxu0 0
    %2719 = vmatpush2.bf16.msra.mxu0 0
    %2720 = vmatprep.subr.bf16.mxu0 0
    %2721 = vmatpush2.bf16.msra.mxu0 0
    %2722 = vmatprep.subr.bf16.mxu0 0
    %2723 = vmatpush2.bf16.msra.mxu0 0
    %2724 = vmatprep.subr.bf16.mxu0 0
    %2725 = vmatpush2.bf16.msra.mxu0 0
    %2726 = vmatprep.subr.bf16.mxu0 0
    %2727 = vmatpush2.bf16.msra.mxu0 0
    %2728 = vmatprep.subr.bf16.mxu0 0
    %2729 = vmatpush2.bf16.msra.mxu0 0
    %2730 = vmatprep.subr.bf16.mxu0 0
    %2731 = vmatpush2.bf16.msra.mxu0 0
    %2732 = vmatprep.subr.bf16.mxu0 0
    %2733 = vmatpush2.bf16.msra.mxu0 0
    %2734 = vmatprep.mubr.bf16.mxu0 0
    %2735 = vmatmul.mubr.bf16.gmra.mxu0 %v2700
    %v2736 = vpop.f32.mrf.mxu0
    %v2737 = vadd.f32 0.0, %v2736
    %v2738 = vpop.f32.mrf.mxu0
    %v2739 = vpop.f32.mrf.mxu0
    %v2740 = vpop.f32.mrf.mxu0
    %2741 = vdwg.mxu0
    %v2742 = vadd.f32 %v2694, %v2737
    %v2743 = vxor.u32 %v2742, 2147483648
    %v2744 = vmul.f32 %v2743, 1.442695
    %v2745 = vpow.pop %v2744
    %v2746 = vadd.f32 %v2745, 1.0
    %v2747 = vrcp.pop %v2746
    %v2748 = vmul.f32 1.0, %v2747
    %v2749 = vtanh.pop %v2742
    %v2750 = vsel %vm104, %v2749, %v2748
    %v2751 = vmul.f32 %v2750, %v2687
    %2753 = vrot.lane.b32.xlu0 %v2750, 64
    %v2754 = vpop.permute.xlu0 %2753
    %v2756 = vmul.f32 %v2750, %v2754
    %2758 = vrot.lane.b32.xlu0 %v2756, 32
    %v2759 = vpop.permute.xlu0 %2758
    %v2761 = vadd.f32 %v2751, %v2759
    %v2762 = vtanh.pop %v2761
    %2764 = vrot.lane.b32.xlu0 %v2762, 64
    %v2765 = vpop.permute.xlu0 %2764
    %v2767 = vmul.f32 %v2750, %v2765
    %v2768 = vld [vmem:[%s1347] sm:$0xff]
    %v2769 = vpack.c.bf16 %v2767, %v2767
    %2771 = vrot.lane.b32.xlu0 %v2769, 32
    %v2772 = vpop.permute.xlu0 %2771
    %v2774 = vsel %vm361, %v2772, 0
    %2776 = vmatprep.subr.bf16.mxu0 0
    %2777 = vmatpush1.bf16.msra.mxu0 0
    %2778 = vmatprep.subr.bf16.mxu0 0
    %2779 = vmatpush1.bf16.msra.mxu0 0
    %2780 = vmatprep.subr.bf16.mxu0 0
    %2781 = vmatpush1.bf16.msra.mxu0 0
    %2782 = vmatprep.subr.bf16.mxu0 0
    %2783 = vmatpush1.bf16.msra.mxu0 0
    %2784 = vmatprep.subr.bf16.mxu0 0
    %2785 = vmatpush1.bf16.msra.mxu0 0
    %2786 = vmatprep.subr.bf16.mxu0 0
    %2787 = vmatpush1.bf16.msra.mxu0 0
    %2788 = vmatprep.subr.bf16.mxu0 0
    %2789 = vmatpush1.bf16.msra.mxu0 %v1882
    %2790 = vmatprep.subr.bf16.mxu0 0
    %2791 = vmatpush1.bf16.msra.mxu0 %v1881
    %2792 = vmatprep.subr.bf16.mxu0 0
    %2793 = vmatpush2.bf16.msra.mxu0 0
    %2794 = vmatprep.subr.bf16.mxu0 0
    %2795 = vmatpush2.bf16.msra.mxu0 0
    %2796 = vmatprep.subr.bf16.mxu0 0
    %2797 = vmatpush2.bf16.msra.mxu0 0
    %2798 = vmatprep.subr.bf16.mxu0 0
    %2799 = vmatpush2.bf16.msra.mxu0 0
    %2800 = vmatprep.subr.bf16.mxu0 0
    %2801 = vmatpush2.bf16.msra.mxu0 0
    %2802 = vmatprep.subr.bf16.mxu0 0
    %2803 = vmatpush2.bf16.msra.mxu0 0
    %2804 = vmatprep.subr.bf16.mxu0 0
    %2805 = vmatpush2.bf16.msra.mxu0 0
    %2806 = vmatprep.subr.bf16.mxu0 0
    %2807 = vmatpush2.bf16.msra.mxu0 0
    %2808 = vmatprep.mubr.bf16.mxu0 0
    %2809 = vmatmul.mubr.bf16.gmra.mxu0 %v2774
    %v2810 = vpop.f32.mrf.mxu0
    %v2811 = vadd.f32 0.0, %v2810
    %v2812 = vpop.f32.mrf.mxu0
    %v2813 = vpop.f32.mrf.mxu0
    %v2814 = vpop.f32.mrf.mxu0
    %2815 = vdwg.mxu0
    %v2816 = vadd.f32 %v2768, %v2811
    %v2817 = vxor.u32 %v2816, 2147483648
    %v2818 = vmul.f32 %v2817, 1.442695
    %v2819 = vpow.pop %v2818
    %v2820 = vadd.f32 %v2819, 1.0
    %v2821 = vrcp.pop %v2820
    %v2822 = vmul.f32 1.0, %v2821
    %v2823 = vtanh.pop %v2816
    %v2824 = vsel %vm104, %v2823, %v2822
    %v2825 = vmul.f32 %v2824, %v2761
    %2827 = vrot.lane.b32.xlu0 %v2824, 64
    %v2828 = vpop.permute.xlu0 %2827
    %v2830 = vmul.f32 %v2824, %v2828
    %2832 = vrot.lane.b32.xlu0 %v2830, 32
    %v2833 = vpop.permute.xlu0 %2832
    %v2835 = vadd.f32 %v2825, %v2833
    %v2836 = vtanh.pop %v2835
    %2838 = vrot.lane.b32.xlu0 %v2836, 64
    %v2839 = vpop.permute.xlu0 %2838
    %v2841 = vmul.f32 %v2824, %v2839
    %v2842 = vld [vmem:[%s1428] sm:$0xff]
    %v2843 = vpack.c.bf16 %v2841, %v2841
    %2845 = vrot.lane.b32.xlu0 %v2843, 32
    %v2846 = vpop.permute.xlu0 %2845
    %v2848 = vsel %vm361, %v2846, 0
    %2850 = vmatprep.subr.bf16.mxu0 0
    %2851 = vmatpush1.bf16.msra.mxu0 0
    %2852 = vmatprep.subr.bf16.mxu0 0
    %2853 = vmatpush1.bf16.msra.mxu0 0
    %2854 = vmatprep.subr.bf16.mxu0 0
    %2855 = vmatpush1.bf16.msra.mxu0 0
    %2856 = vmatprep.subr.bf16.mxu0 0
    %2857 = vmatpush1.bf16.msra.mxu0 0
    %2858 = vmatprep.subr.bf16.mxu0 0
    %2859 = vmatpush1.bf16.msra.mxu0 0
    %2860 = vmatprep.subr.bf16.mxu0 0
    %2861 = vmatpush1.bf16.msra.mxu0 0
    %2862 = vmatprep.subr.bf16.mxu0 0
    %2863 = vmatpush1.bf16.msra.mxu0 %v1882
    %2864 = vmatprep.subr.bf16.mxu0 0
    %2865 = vmatpush1.bf16.msra.mxu0 %v1881
    %2866 = vmatprep.subr.bf16.mxu0 0
    %2867 = vmatpush2.bf16.msra.mxu0 0
    %2868 = vmatprep.subr.bf16.mxu0 0
    %2869 = vmatpush2.bf16.msra.mxu0 0
    %2870 = vmatprep.subr.bf16.mxu0 0
    %2871 = vmatpush2.bf16.msra.mxu0 0
    %2872 = vmatprep.subr.bf16.mxu0 0
    %2873 = vmatpush2.bf16.msra.mxu0 0
    %2874 = vmatprep.subr.bf16.mxu0 0
    %2875 = vmatpush2.bf16.msra.mxu0 0
    %2876 = vmatprep.subr.bf16.mxu0 0
    %2877 = vmatpush2.bf16.msra.mxu0 0
    %2878 = vmatprep.subr.bf16.mxu0 0
    %2879 = vmatpush2.bf16.msra.mxu0 0
    %2880 = vmatprep.subr.bf16.mxu0 0
    %2881 = vmatpush2.bf16.msra.mxu0 0
    %2882 = vmatprep.mubr.bf16.mxu0 0
    %2883 = vmatmul.mubr.bf16.gmra.mxu0 %v2848
    %v2884 = vpop.f32.mrf.mxu0
    %v2885 = vadd.f32 0.0, %v2884
    %v2886 = vpop.f32.mrf.mxu0
    %v2887 = vpop.f32.mrf.mxu0
    %v2888 = vpop.f32.mrf.mxu0
    %2889 = vdwg.mxu0
    %v2890 = vadd.f32 %v2842, %v2885
    %v2891 = vxor.u32 %v2890, 2147483648
    %v2892 = vmul.f32 %v2891, 1.442695
    %v2893 = vpow.pop %v2892
    %v2894 = vadd.f32 %v2893, 1.0
    %v2895 = vrcp.pop %v2894
    %v2896 = vmul.f32 1.0, %v2895
    %v2897 = vtanh.pop %v2890
    %v2898 = vsel %vm104, %v2897, %v2896
    %v2899 = vmul.f32 %v2898, %v2835
    %2901 = vrot.lane.b32.xlu0 %v2898, 64
    %v2902 = vpop.permute.xlu0 %2901
    %v2904 = vmul.f32 %v2898, %v2902
    %2906 = vrot.lane.b32.xlu0 %v2904, 32
    %v2907 = vpop.permute.xlu0 %2906
    %v2909 = vadd.f32 %v2899, %v2907
    %v2910 = vtanh.pop %v2909
    %2912 = vrot.lane.b32.xlu0 %v2910, 64
    %v2913 = vpop.permute.xlu0 %2912
    %v2915 = vmul.f32 %v2898, %v2913
    %v2916 = vld [vmem:[%s1509] sm:$0xff]
    %v2917 = vpack.c.bf16 %v2915, %v2915
    %2919 = vrot.lane.b32.xlu0 %v2917, 32
    %v2920 = vpop.permute.xlu0 %2919
    %v2922 = vsel %vm361, %v2920, 0
    %2924 = vmatprep.subr.bf16.mxu0 0
    %2925 = vmatpush1.bf16.msra.mxu0 0
    %2926 = vmatprep.subr.bf16.mxu0 0
    %2927 = vmatpush1.bf16.msra.mxu0 0
    %2928 = vmatprep.subr.bf16.mxu0 0
    %2929 = vmatpush1.bf16.msra.mxu0 0
    %2930 = vmatprep.subr.bf16.mxu0 0
    %2931 = vmatpush1.bf16.msra.mxu0 0
    %2932 = vmatprep.subr.bf16.mxu0 0
    %2933 = vmatpush1.bf16.msra.mxu0 0
    %2934 = vmatprep.subr.bf16.mxu0 0
    %2935 = vmatpush1.bf16.msra.mxu0 0
    %2936 = vmatprep.subr.bf16.mxu0 0
    %2937 = vmatpush1.bf16.msra.mxu0 %v1882
    %2938 = vmatprep.subr.bf16.mxu0 0
    %2939 = vmatpush1.bf16.msra.mxu0 %v1881
    %2940 = vmatprep.subr.bf16.mxu0 0
    %2941 = vmatpush2.bf16.msra.mxu0 0
    %2942 = vmatprep.subr.bf16.mxu0 0
    %2943 = vmatpush2.bf16.msra.mxu0 0
    %2944 = vmatprep.subr.bf16.mxu0 0
    %2945 = vmatpush2.bf16.msra.mxu0 0
    %2946 = vmatprep.subr.bf16.mxu0 0
    %2947 = vmatpush2.bf16.msra.mxu0 0
    %2948 = vmatprep.subr.bf16.mxu0 0
    %2949 = vmatpush2.bf16.msra.mxu0 0
    %2950 = vmatprep.subr.bf16.mxu0 0
    %2951 = vmatpush2.bf16.msra.mxu0 0
    %2952 = vmatprep.subr.bf16.mxu0 0
    %2953 = vmatpush2.bf16.msra.mxu0 0
    %2954 = vmatprep.subr.bf16.mxu0 0
    %2955 = vmatpush2.bf16.msra.mxu0 0
    %2956 = vmatprep.mubr.bf16.mxu0 0
    %2957 = vmatmul.mubr.bf16.gmra.mxu0 %v2922
    %v2958 = vpop.f32.mrf.mxu0
    %v2959 = vadd.f32 0.0, %v2958
    %v2960 = vpop.f32.mrf.mxu0
    %v2961 = vpop.f32.mrf.mxu0
    %v2962 = vpop.f32.mrf.mxu0
    %2963 = vdwg.mxu0
    %v2964 = vadd.f32 %v2916, %v2959
    %v2965 = vxor.u32 %v2964, 2147483648
    %v2966 = vmul.f32 %v2965, 1.442695
    %v2967 = vpow.pop %v2966
    %v2968 = vadd.f32 %v2967, 1.0
    %v2969 = vrcp.pop %v2968
    %v2970 = vmul.f32 1.0, %v2969
    %v2971 = vtanh.pop %v2964
    %v2972 = vsel %vm104, %v2971, %v2970
    %v2973 = vmul.f32 %v2972, %v2909
    %2975 = vrot.lane.b32.xlu0 %v2972, 64
    %v2976 = vpop.permute.xlu0 %2975
    %v2978 = vmul.f32 %v2972, %v2976
    %2980 = vrot.lane.b32.xlu0 %v2978, 32
    %v2981 = vpop.permute.xlu0 %2980
    %v2983 = vadd.f32 %v2973, %v2981
    %v2984 = vtanh.pop %v2983
    %2986 = vrot.lane.b32.xlu0 %v2984, 64
    %v2987 = vpop.permute.xlu0 %2986
    %v2989 = vmul.f32 %v2972, %v2987
    %v2990 = vpack.c.bf16 %v2989, %v2989
    %v2991 = vld [vmem:[#allocation10] sm:$0xf]
    %v2992 = vld [vmem:[#allocation10 + $0x4] sm:$0xf]
    %v2993 = vld [vmem:[#allocation10 + $0x8] sm:$0xf]
    %v2994 = vld [vmem:[#allocation10 + $0xc] sm:$0xf]
    %v2995 = vld [vmem:[#allocation12] sm:$0x1]
    %v2997 = vlaneseq
    %v2998 = vshrl.u32 %v2997, 7
    %v2999 = vsub.s32 0, %v2998
    %v3000 = vrot.slane %v2995, %v2999
    %3003 = vrot.lane.b32.xlu0 %v2990, 32
    %v3004 = vpop.permute.xlu0 %3003
    %v3009 = vunpack.c.l.b16 %v2991
    %v3010 = vunpack.c.l.b16 %v2992
    %v3011 = vunpack.c.l.b16 %v2993
    %v3012 = vunpack.c.l.b16 %v2994
    %v3013 = vpack.c.b16 %v3010, %v3009
    %v3014 = vpack.c.b16 %v3012, %v3011
    %v3018 = vsel %vm361, %v3004, 0
    %3020 = vmatprep.subr.bf16.mxu0 0
    %3021 = vmatpush1.bf16.msra.mxu0 0
    %3022 = vmatprep.subr.bf16.mxu0 0
    %3023 = vmatpush1.bf16.msra.mxu0 0
    %3024 = vmatprep.subr.bf16.mxu0 0
    %3025 = vmatpush1.bf16.msra.mxu0 0
    %3026 = vmatprep.subr.bf16.mxu0 0
    %3027 = vmatpush1.bf16.msra.mxu0 0
    %3028 = vmatprep.subr.bf16.mxu0 0
    %3029 = vmatpush1.bf16.msra.mxu0 0
    %3030 = vmatprep.subr.bf16.mxu0 0
    %3031 = vmatpush1.bf16.msra.mxu0 0
    %3032 = vmatprep.subr.bf16.mxu0 0
    %3033 = vmatpush1.bf16.msra.mxu0 %v3014
    %3034 = vmatprep.subr.bf16.mxu0 0
    %3035 = vmatpush1.bf16.msra.mxu0 %v3013
    %3036 = vmatprep.subr.bf16.mxu0 0
    %3037 = vmatpush2.bf16.msra.mxu0 0
    %3038 = vmatprep.subr.bf16.mxu0 0
    %3039 = vmatpush2.bf16.msra.mxu0 0
    %3040 = vmatprep.subr.bf16.mxu0 0
    %3041 = vmatpush2.bf16.msra.mxu0 0
    %3042 = vmatprep.subr.bf16.mxu0 0
    %3043 = vmatpush2.bf16.msra.mxu0 0
    %3044 = vmatprep.subr.bf16.mxu0 0
    %3045 = vmatpush2.bf16.msra.mxu0 0
    %3046 = vmatprep.subr.bf16.mxu0 0
    %3047 = vmatpush2.bf16.msra.mxu0 0
    %3048 = vmatprep.subr.bf16.mxu0 0
    %3049 = vmatpush2.bf16.msra.mxu0 0
    %3050 = vmatprep.subr.bf16.mxu0 0
    %3051 = vmatpush2.bf16.msra.mxu0 0
    %3052 = vmatprep.mubr.bf16.mxu0 0
    %3053 = vmatmul.mubr.bf16.gmra.mxu0 %v3018
    %v3054 = vpop.f32.mrf.mxu0
    %v3055 = vadd.f32 %v3000, %v3054
    %v3056 = vpop.f32.mrf.mxu0
    %v3057 = vpop.f32.mrf.mxu0
    %v3058 = vpop.f32.mrf.mxu0
    %3059 = vdwg.mxu0
    %v3060 = vmax.f32 %v3055, 0.0
    %v3061 = vpack.c.bf16 %v3060, %v3060
    %v3062 = vld [vmem:[%s9] sm:$0xf]
    %v3063 = vld [vmem:[%s9 + $0x4] sm:$0xf]
    %v3064 = vld [vmem:[%s9 + $0x8] sm:$0xf]
    %v3065 = vld [vmem:[%s9 + $0xc] sm:$0xf]
    %v3066 = vld [vmem:[%s9 + $0x10] sm:$0xf]
    %v3067 = vld [vmem:[%s9 + $0x14] sm:$0xf]
    %v3068 = vld [vmem:[%s9 + $0x18] sm:$0xf]
    %v3069 = vld [vmem:[%s9 + $0x1c] sm:$0xf]
    %v3070 = vld [vmem:[%s9 + $0x20] sm:$0xf]
    %v3071 = vld [vmem:[%s9 + $0x24] sm:$0xf]
    %v3072 = vld [vmem:[%s9 + $0x28] sm:$0xf]
    %v3073 = vld [vmem:[%s9 + $0x2c] sm:$0xf]
    %v3074 = vld [vmem:[%s9 + $0x30] sm:$0xf]
    %v3075 = vld [vmem:[%s9 + $0x34] sm:$0xf]
    %v3076 = vld [vmem:[%s9 + $0x38] sm:$0xf]
    %v3077 = vld [vmem:[%s9 + $0x3c] sm:$0xf]
    %v3078 = vld [vmem:[%s10] sm:$0x1]
    %v3080 = vlaneseq
    %v3081 = vshrl.u32 %v3080, 7
    %v3082 = vsub.s32 0, %v3081
    %v3083 = vrot.slane %v3078, %v3082
    %v3101 = vunpack.c.l.b16 %v3062
    %v3102 = vunpack.c.l.b16 %v3063
    %v3103 = vunpack.c.l.b16 %v3064
    %v3104 = vunpack.c.l.b16 %v3065
    %v3105 = vunpack.c.l.b16 %v3066
    %v3106 = vunpack.c.l.b16 %v3067
    %v3107 = vunpack.c.l.b16 %v3068
    %v3108 = vunpack.c.l.b16 %v3069
    %v3109 = vunpack.c.l.b16 %v3070
    %v3110 = vunpack.c.l.b16 %v3071
    %v3111 = vunpack.c.l.b16 %v3072
    %v3112 = vunpack.c.l.b16 %v3073
    %v3113 = vunpack.c.l.b16 %v3074
    %v3114 = vunpack.c.l.b16 %v3075
    %v3115 = vunpack.c.l.b16 %v3076
    %v3116 = vunpack.c.l.b16 %v3077
    %v3117 = vpack.c.b16 %v3102, %v3101
    %v3118 = vpack.c.b16 %v3104, %v3103
    %v3119 = vpack.c.b16 %v3106, %v3105
    %v3120 = vpack.c.b16 %v3108, %v3107
    %v3121 = vpack.c.b16 %v3110, %v3109
    %v3122 = vpack.c.b16 %v3112, %v3111
    %v3123 = vpack.c.b16 %v3114, %v3113
    %v3124 = vpack.c.b16 %v3116, %v3115
    %3133 = vmatprep.subr.bf16.mxu0 0
    %3134 = vmatpush1.bf16.msra.mxu0 %v3124
    %3135 = vmatprep.subr.bf16.mxu0 0
    %3136 = vmatpush1.bf16.msra.mxu0 %v3123
    %3137 = vmatprep.subr.bf16.mxu0 0
    %3138 = vmatpush1.bf16.msra.mxu0 %v3122
    %3139 = vmatprep.subr.bf16.mxu0 0
    %3140 = vmatpush1.bf16.msra.mxu0 %v3121
    %3141 = vmatprep.subr.bf16.mxu0 0
    %3142 = vmatpush1.bf16.msra.mxu0 %v3120
    %3143 = vmatprep.subr.bf16.mxu0 0
    %3144 = vmatpush1.bf16.msra.mxu0 %v3119
    %3145 = vmatprep.subr.bf16.mxu0 0
    %3146 = vmatpush1.bf16.msra.mxu0 %v3118
    %3147 = vmatprep.subr.bf16.mxu0 0
    %3148 = vmatpush1.bf16.msra.mxu0 %v3117
    %3149 = vmatprep.subr.bf16.mxu0 0
    %3150 = vmatpush2.bf16.msra.mxu0 0
    %3151 = vmatprep.subr.bf16.mxu0 0
    %3152 = vmatpush2.bf16.msra.mxu0 0
    %3153 = vmatprep.subr.bf16.mxu0 0
    %3154 = vmatpush2.bf16.msra.mxu0 0
    %3155 = vmatprep.subr.bf16.mxu0 0
    %3156 = vmatpush2.bf16.msra.mxu0 0
    %3157 = vmatprep.subr.bf16.mxu0 0
    %3158 = vmatpush2.bf16.msra.mxu0 0
    %3159 = vmatprep.subr.bf16.mxu0 0
    %3160 = vmatpush2.bf16.msra.mxu0 0
    %3161 = vmatprep.subr.bf16.mxu0 0
    %3162 = vmatpush2.bf16.msra.mxu0 0
    %3163 = vmatprep.subr.bf16.mxu0 0
    %3164 = vmatpush2.bf16.msra.mxu0 0
    %3165 = vmatprep.mubr.bf16.mxu0 0
    %3166 = vmatmul.mubr.bf16.gmra.mxu0 %v3061
    %v3167 = vpop.f32.mrf.mxu0
    %v3168 = vadd.f32 %v3083, %v3167
    %v3169 = vpop.f32.mrf.mxu0
    %v3170 = vpop.f32.mrf.mxu0
    %v3171 = vpop.f32.mrf.mxu0
    %3172 = vdwg.mxu0
    %3173 = vst [vmem:[#allocation13] sm:$0xff] %v3168
    // Predicated region
    $region66: #{tpu_custom_call.1} parent=1 // pred_check
      _
    $region67: #{tpu_custom_call.1} parent=1 // pred_check_branch
      %3175 = sbr.rel (0) target = $region69
    $region68: #{tpu_custom_call.1} parent=1 // pred_region
      %s3177 = ssub.s32 128, 128
      %3178 = vsyncadd [#allocation6], %s3177
      %s3180 = sshll.u32 [#allocation13], 4
      %s3181 = int_to_ptr.vmem [resolvable:$true] %s3180
      %3183 = dma.vmem_to_hbm [thread:$0]  %s3181, 128, %s11, [#allocation6]
    $region69: #{tpu_custom_call.1} parent=1 // pred_fallthru
      _
    // Predicated region
    $region70: #{tpu_custom_call.1} parent=1 // pred_check
      _
    $region71: #{tpu_custom_call.1} parent=1 // pred_check_branch
      %3185 = sbr.rel (0) target = $region73
    $region72: #{tpu_custom_call.1} parent=1 // pred_region
      %3186 = dma.done [#allocation6], 128
    $region73: #{tpu_custom_call.1} parent=1 // pred_fallthru
      _
    %3187 = vsyncpa [#allocation5], 1
    %3188 = vsyncpa [#allocation8], 1
    %3189 = vsyncpa [#allocation11], 1
    %3190 = vsyncpa [#allocation6], 1

</llo_original>
